<compile_context>
chip_gen: v7x
topology: tpu7x:2x2x1
jax: 0.10.0
libtpu: 0.0.40
codegen_flags: <defaults>
</compile_context>

<pallas_src>
import functools
import math

import jax
import jax.numpy as jnp
from jax.experimental import pallas as pl
from jax.experimental.pallas import tpu as pltpu

NEG_SLOPE = 0.2   # LeakyReLU inside conv_w
KSIZE = 3         # kernel_size (3x3 neighbourhood, reflection pad 1)


def _leaky(x):
    return jnp.where(x > 0, x, NEG_SLOPE * x)


# --------------------------------------------------------------------------- #
# Fused SAM kernel (one grid step == one batch element, all data in VMEM)
# --------------------------------------------------------------------------- #
def _sam_kernel(xp_ref, w1_ref, b1_ref, w2_ref, b2_ref, w3_ref, b3_ref,
                wp_ref, bp_ref, wa_ref, wb_ref, bb_ref, o_ref,
                *, H, W, Cin, rel, cout, outshare):
    Hp, Wp = H + 2, W + 2
    K2 = KSIZE * KSIZE

    # ---- hoist the (tiny) weights out of SMEM into scalars ----------------- #
    w1 = [[w1_ref[r, c] for c in range(Cin)] for r in range(rel)]
    b1 = [b1_ref[r] for r in range(rel)]
    w2 = [[w2_ref[r, c] for c in range(Cin)] for r in range(rel)]
    b2 = [b2_ref[r] for r in range(rel)]
    w3 = [[w3_ref[r, c] for c in range(Cin)] for r in range(cout)]
    b3 = [b3_ref[r] for r in range(cout)]
    wp = [[wp_ref[r, c] for c in range(2)] for r in range(2)]
    bp = [bp_ref[r] for r in range(2)]
    wa = [[wa_ref[r, c] for c in range(rel + 2)] for r in range(rel)]
    wb = [[wb_ref[r, c] for c in range(rel)] for r in range(outshare)]
    bb = [bb_ref[r] for r in range(outshare)]

    # ---- reflect-padded input planes (Hp, Wp), one per input channel ------- #
    xpad = [xp_ref[0, c, :, :] for c in range(Cin)]

    def conv1x1_on_pad(w, b, nout):
        """1x1 conv evaluated on the padded grid -> VPU multiply-adds."""
        res = []
        for r in range(nout):
            acc = w[r][0] * xpad[0]
            for c in range(1, Cin):
                acc = acc + w[r][c] * xpad[c]
            res.append(acc + b[r])
        return res

    x1pad = conv1x1_on_pad(w1, b1, rel)    # query  (only centre used)
    x2pad = conv1x1_on_pad(w2, b2, rel)    # key    (3x3 neighbourhood used)
    x3pad = conv1x1_on_pad(w3, b3, cout)   # value  (3x3 neighbourhood used)

    # ---- position encoding p = conv_p(position(H, W)) on the padded grid --- #
    row = jax.lax.broadcasted_iota(jnp.int32, (Hp, Wp), 0).astype(jnp.float32) - 1.0
    col = jax.lax.broadcasted_iota(jnp.int32, (Hp, Wp), 1).astype(jnp.float32) - 1.0
    rh = jnp.abs(row)
    rh = jnp.where(rh > H - 1, 2.0 * (H - 1) - rh, rh)    # reflected row index
    rw = jnp.abs(col)
    rw = jnp.where(rw > W - 1, 2.0 * (W - 1) - rw, rw)    # reflected col index
    loc_w = -1.0 + 2.0 * rw / (W - 1)                     # channel 0 of position()
    loc_h = -1.0 + 2.0 * rh / (H - 1)                     # channel 1 of position()
    ppad = [wp[r][0] * loc_w + wp[r][1] * loc_h + bp[r] for r in range(2)]

    def center(a):
        return a[1:1 + H, 1:1 + W]

    x1c = [center(a) for a in x1pad]
    pc = [center(a) for a in ppad]

    # ---- attention logits for the 9 offsets:  conv_w(cat(sub2, subp)) ------ #
    offsets = [(dy, dx) for dy in range(KSIZE) for dx in range(KSIZE)]
    logits = []                                   # [9][outshare] of (H, W)
    for (dy, dx) in offsets:
        # LeakyReLU(cat([x1 - shift(x2), p - shift(p)], channel))
        v = [_leaky(x1c[r] - x2pad[r][dy:dy + H, dx:dx + W]) for r in range(rel)]
        v += [_leaky(pc[r] - ppad[r][dy:dy + H, dx:dx + W]) for r in range(2)]
        # 1x1 conv (rel+2 -> rel), no bias
        a = []
        for r in range(rel):
            acc = wa[r][0] * v[0]
            for c in range(1, rel + 2):
                acc = acc + wa[r][c] * v[c]
            a.append(acc)
        # 1x1 conv (rel -> out_planes // share_planes), with bias
        s = []
        for r in range(outshare):
            acc = wb[r][0] * a[0]
            for c in range(1, rel):
                acc = acc + wb[r][c] * a[c]
            s.append(acc + bb[r])
        logits.append(s)

    # ---- softmax over the 9 offsets + Aggregation with shift(x3) ----------- #
    for r in range(outshare):
        m = logits[0][r]
        for k in range(1, K2):
            m = jnp.maximum(m, logits[k][r])
        exps = [jnp.exp(logits[k][r] - m) for k in range(K2)]
        denom = exps[0]
        for k in range(1, K2):
            denom = denom + exps[k]
        inv = 1.0 / denom
        wsoft = [e * inv for e in exps]
        # value channel c uses weight channel c % outshare == r
        for c in range(r, cout, outshare):
            acc = wsoft[0] * x3pad[c][0:H, 0:W]
            for k in range(1, K2):
                dy, dx = offsets[k]
                acc = acc + wsoft[k] * x3pad[c][dy:dy + H, dx:dx + W]
            o_ref[0, c, :, :] = acc.astype(o_ref.dtype)


# --------------------------------------------------------------------------- #
# Wrapper: single pallas_call, NCHW in -> NCHW out
# --------------------------------------------------------------------------- #
def sam_forward(x_nchw, P):
    N, Cin, H, W = x_nchw.shape
    rel = P["w1"].shape[0]
    cout = P["w3"].shape[0]
    outshare = P["wb"].shape[0]

    # single reflect-pad of the raw input (only wrapper-side data movement)
    xpad = jnp.pad(x_nchw.astype(jnp.float32),
                   ((0, 0), (0, 0), (1, 1), (1, 1)), mode="reflect")

    def smem_spec():
        return pl.BlockSpec(memory_space=pltpu.MemorySpace.SMEM)

    kernel = functools.partial(_sam_kernel, H=H, W=W, Cin=Cin, rel=rel,
                               cout=cout, outshare=outshare)
    return pl.pallas_call(
        kernel,
        out_shape=jax.ShapeDtypeStruct((N, cout, H, W), jnp.float32),
        grid=(N,),
        in_specs=[pl.BlockSpec((1, Cin, H + 2, W + 2), lambda n: (n, 0, 0, 0))]
                 + [smem_spec() for _ in range(11)],
        out_specs=pl.BlockSpec((1, cout, H, W), lambda n: (n, 0, 0, 0)),
        compiler_params=pltpu.CompilerParams(
            dimension_semantics=("parallel",),
            vmem_limit_bytes=32 * 1024 * 1024),
    )(xpad, P["w1"], P["b1"], P["w2"], P["b2"], P["w3"], P["b3"],
      P["wp"], P["bp"], P["wa"], P["wb"], P["bb"])


# --------------------------------------------------------------------------- #
# Pure-JAX reference (mirrors the PyTorch SAM sa_type=0 forward)
# --------------------------------------------------------------------------- #
def sam_ref(x, P):
    N, Cin, H, W = x.shape
    rel = P["w1"].shape[0]
    cout = P["w3"].shape[0]
    outshare = P["wb"].shape[0]
    x = x.astype(jnp.float32)
    hi = jax.lax.Precision.HIGHEST

    def conv1x1(inp, w, b=None):
        y = jnp.einsum("nchw,oc->nohw", inp, w, precision=hi)
        if b is not None:
            y = y + b[None, :, None, None]
        return y

    x1 = conv1x1(x, P["w1"], P["b1"])
    x2 = conv1x1(x, P["w2"], P["b2"])
    x3 = conv1x1(x, P["w3"], P["b3"])

    loc_w = jnp.broadcast_to(jnp.linspace(-1.0, 1.0, W)[None, :], (H, W))
    loc_h = jnp.broadcast_to(jnp.linspace(-1.0, 1.0, H)[:, None], (H, W))
    p = jnp.stack([loc_w, loc_h], axis=0)[None]             # (1, 2, H, W)
    p = conv1x1(p, P["wp"], P["bp"])

    def unfold3(a):                                          # reflect pad 1, 3x3
        B, C = a.shape[0], a.shape[1]
        ap = jnp.pad(a, ((0, 0), (0, 0), (1, 1), (1, 1)), mode="reflect")
        pats = [ap[:, :, dy:dy + H, dx:dx + W].reshape(B, C, H * W)
                for dy in range(3) for dx in range(3)]
        return jnp.stack(pats, axis=2)                       # (B, C, 9, HW)

    sub2 = x1.reshape(N, rel, 1, H * W) - unfold3(x2)        # Subtraction2(x1, x2)
    subp = p.reshape(1, 2, 1, H * W) - unfold3(p)            # Subtraction(p)
    subp = jnp.broadcast_to(subp, (N, 2, 9, H * W))
    v = jnp.concatenate([sub2, subp], axis=1)
    v = jnp.where(v > 0, v, NEG_SLOPE * v)                   # LeakyReLU(0.2)
    a = jnp.einsum("nckl,oc->nokl", v, P["wa"], precision=hi)
    s = jnp.einsum("nckl,oc->nokl", a, P["wb"], precision=hi) \
        + P["bb"][None, :, None, None]
    w_soft = jax.nn.softmax(s, axis=2)                       # softmax over 9 dim
    x3n = unfold3(x3)                                        # Aggregation
    w_full = jnp.tile(w_soft, (1, cout // outshare, 1, 1))
    out = (w_full * x3n).sum(axis=2)
    return out.reshape(N, cout, H, W)


# --------------------------------------------------------------------------- #
# Deterministic parameter init (mimics PyTorch Conv2d init ranges)
# --------------------------------------------------------------------------- #
def _init_conv(key, cout, cin, bias=True):
    k1, k2 = jax.random.split(key)
    bound = 1.0 / math.sqrt(cin)
    w = jax.random.uniform(k1, (cout, cin), jnp.float32, -bound, bound)
    b = jax.random.uniform(k2, (cout,), jnp.float32, -bound, bound) if bias else None
    return w, b


def init_params(key, in_planes, rel_planes, out_planes, share_planes):
    keys = jax.random.split(key, 6)
    P = {}
    P["w1"], P["b1"] = _init_conv(keys[0], rel_planes, in_planes)          # conv1
    P["w2"], P["b2"] = _init_conv(keys[1], rel_planes, in_planes)          # conv2
    P["w3"], P["b3"] = _init_conv(keys[2], out_planes, in_planes)          # conv3
    P["wp"], P["bp"] = _init_conv(keys[3], 2, 2)                           # conv_p
    P["wa"], _ = _init_conv(keys[4], rel_planes, rel_planes + 2, bias=False)
    P["wb"], P["bb"] = _init_conv(keys[5], out_planes // share_planes, rel_planes)
    return P


if __name__ == "__main__":
    N, IN_PLANES, H, W = 2, 4, 16, 16
    REL_PLANES, OUT_PLANES, SHARE_PLANES = 2, 4, 2

    root = jax.random.PRNGKey(0)
    kx, kparam = jax.random.split(root)
    params = init_params(kparam, IN_PLANES, REL_PLANES, OUT_PLANES, SHARE_PLANES)
    x = jax.random.normal(kx, (N, IN_PLANES, H, W), jnp.float32)

    fwd = jax.jit(lambda inp: sam_forward(inp, params))
    out = jax.block_until_ready(fwd(x))

    ref = jax.block_until_ready(sam_ref(x, params))
    assert out.shape == (N, OUT_PLANES, H, W), out.shape
    max_err = float(jnp.max(jnp.abs(out - ref)))
    assert max_err < 1e-3, f"mismatch vs reference: {max_err}"
    print("KERNEL_OK")
</pallas_src>

<mosaic_0001>
module attributes {stable_mosaic.version = 11 : i64} {
  func.func @_sam_kernel(%arg0: i32, %arg1: memref<1x4x18x18xf32, #tpu.memory_space<vmem>>, %arg2: memref<2x4xf32, #tpu.memory_space<smem>>, %arg3: memref<2xf32, #tpu.memory_space<smem>>, %arg4: memref<2x4xf32, #tpu.memory_space<smem>>, %arg5: memref<2xf32, #tpu.memory_space<smem>>, %arg6: memref<4x4xf32, #tpu.memory_space<smem>>, %arg7: memref<4xf32, #tpu.memory_space<smem>>, %arg8: memref<2x2xf32, #tpu.memory_space<smem>>, %arg9: memref<2xf32, #tpu.memory_space<smem>>, %arg10: memref<2x4xf32, #tpu.memory_space<smem>>, %arg11: memref<2x2xf32, #tpu.memory_space<smem>>, %arg12: memref<2xf32, #tpu.memory_space<smem>>, %arg13: memref<1x4x16x16xf32, #tpu.memory_space<vmem>>) attributes {dimension_semantics = [#tpu.dimension_semantics<parallel>], iteration_bounds = array<i64: 2>, scalar_prefetch = 0 : i64, scratch_operands = 0 : i64, tpu.core_type = #tpu.core_type<tc>, window_params = [{transform_indices = @transform_0, window_bounds = array<i64: 1, 4, 18, 18>}, {transform_indices = @transform_1, window_bounds = array<i64: 2, 4>}, {transform_indices = @transform_2, window_bounds = array<i64: 2>}, {transform_indices = @transform_3, window_bounds = array<i64: 2, 4>}, {transform_indices = @transform_4, window_bounds = array<i64: 2>}, {transform_indices = @transform_5, window_bounds = array<i64: 4, 4>}, {transform_indices = @transform_6, window_bounds = array<i64: 4>}, {transform_indices = @transform_7, window_bounds = array<i64: 2, 2>}, {transform_indices = @transform_8, window_bounds = array<i64: 2>}, {transform_indices = @transform_9, window_bounds = array<i64: 2, 4>}, {transform_indices = @transform_10, window_bounds = array<i64: 2, 2>}, {transform_indices = @transform_11, window_bounds = array<i64: 2>}, {transform_indices = @transform_12, window_bounds = array<i64: 1, 4, 16, 16>}]} {
    %c0 = arith.constant 0 : index
    %c0_0 = arith.constant 0 : index
    %0 = memref.load %arg2[%c0, %c0_0] : memref<2x4xf32, #tpu.memory_space<smem>>
    %c0_1 = arith.constant 0 : index
    %c1 = arith.constant 1 : index
    %1 = memref.load %arg2[%c0_1, %c1] : memref<2x4xf32, #tpu.memory_space<smem>>
    %c0_2 = arith.constant 0 : index
    %c2 = arith.constant 2 : index
    %2 = memref.load %arg2[%c0_2, %c2] : memref<2x4xf32, #tpu.memory_space<smem>>
    %c0_3 = arith.constant 0 : index
    %c3 = arith.constant 3 : index
    %3 = memref.load %arg2[%c0_3, %c3] : memref<2x4xf32, #tpu.memory_space<smem>>
    %c1_4 = arith.constant 1 : index
    %c0_5 = arith.constant 0 : index
    %4 = memref.load %arg2[%c1_4, %c0_5] : memref<2x4xf32, #tpu.memory_space<smem>>
    %c1_6 = arith.constant 1 : index
    %c1_7 = arith.constant 1 : index
    %5 = memref.load %arg2[%c1_6, %c1_7] : memref<2x4xf32, #tpu.memory_space<smem>>
    %c1_8 = arith.constant 1 : index
    %c2_9 = arith.constant 2 : index
    %6 = memref.load %arg2[%c1_8, %c2_9] : memref<2x4xf32, #tpu.memory_space<smem>>
    %c1_10 = arith.constant 1 : index
    %c3_11 = arith.constant 3 : index
    %7 = memref.load %arg2[%c1_10, %c3_11] : memref<2x4xf32, #tpu.memory_space<smem>>
    %c0_12 = arith.constant 0 : index
    %8 = memref.load %arg3[%c0_12] : memref<2xf32, #tpu.memory_space<smem>>
    %c1_13 = arith.constant 1 : index
    %9 = memref.load %arg3[%c1_13] : memref<2xf32, #tpu.memory_space<smem>>
    %c0_14 = arith.constant 0 : index
    %c0_15 = arith.constant 0 : index
    %10 = memref.load %arg4[%c0_14, %c0_15] : memref<2x4xf32, #tpu.memory_space<smem>>
    %c0_16 = arith.constant 0 : index
    %c1_17 = arith.constant 1 : index
    %11 = memref.load %arg4[%c0_16, %c1_17] : memref<2x4xf32, #tpu.memory_space<smem>>
    %c0_18 = arith.constant 0 : index
    %c2_19 = arith.constant 2 : index
    %12 = memref.load %arg4[%c0_18, %c2_19] : memref<2x4xf32, #tpu.memory_space<smem>>
    %c0_20 = arith.constant 0 : index
    %c3_21 = arith.constant 3 : index
    %13 = memref.load %arg4[%c0_20, %c3_21] : memref<2x4xf32, #tpu.memory_space<smem>>
    %c1_22 = arith.constant 1 : index
    %c0_23 = arith.constant 0 : index
    %14 = memref.load %arg4[%c1_22, %c0_23] : memref<2x4xf32, #tpu.memory_space<smem>>
    %c1_24 = arith.constant 1 : index
    %c1_25 = arith.constant 1 : index
    %15 = memref.load %arg4[%c1_24, %c1_25] : memref<2x4xf32, #tpu.memory_space<smem>>
    %c1_26 = arith.constant 1 : index
    %c2_27 = arith.constant 2 : index
    %16 = memref.load %arg4[%c1_26, %c2_27] : memref<2x4xf32, #tpu.memory_space<smem>>
    %c1_28 = arith.constant 1 : index
    %c3_29 = arith.constant 3 : index
    %17 = memref.load %arg4[%c1_28, %c3_29] : memref<2x4xf32, #tpu.memory_space<smem>>
    %c0_30 = arith.constant 0 : index
    %18 = memref.load %arg5[%c0_30] : memref<2xf32, #tpu.memory_space<smem>>
    %c1_31 = arith.constant 1 : index
    %19 = memref.load %arg5[%c1_31] : memref<2xf32, #tpu.memory_space<smem>>
    %c0_32 = arith.constant 0 : index
    %c0_33 = arith.constant 0 : index
    %20 = memref.load %arg6[%c0_32, %c0_33] : memref<4x4xf32, #tpu.memory_space<smem>>
    %c0_34 = arith.constant 0 : index
    %c1_35 = arith.constant 1 : index
    %21 = memref.load %arg6[%c0_34, %c1_35] : memref<4x4xf32, #tpu.memory_space<smem>>
    %c0_36 = arith.constant 0 : index
    %c2_37 = arith.constant 2 : index
    %22 = memref.load %arg6[%c0_36, %c2_37] : memref<4x4xf32, #tpu.memory_space<smem>>
    %c0_38 = arith.constant 0 : index
    %c3_39 = arith.constant 3 : index
    %23 = memref.load %arg6[%c0_38, %c3_39] : memref<4x4xf32, #tpu.memory_space<smem>>
    %c1_40 = arith.constant 1 : index
    %c0_41 = arith.constant 0 : index
    %24 = memref.load %arg6[%c1_40, %c0_41] : memref<4x4xf32, #tpu.memory_space<smem>>
    %c1_42 = arith.constant 1 : index
    %c1_43 = arith.constant 1 : index
    %25 = memref.load %arg6[%c1_42, %c1_43] : memref<4x4xf32, #tpu.memory_space<smem>>
    %c1_44 = arith.constant 1 : index
    %c2_45 = arith.constant 2 : index
    %26 = memref.load %arg6[%c1_44, %c2_45] : memref<4x4xf32, #tpu.memory_space<smem>>
    %c1_46 = arith.constant 1 : index
    %c3_47 = arith.constant 3 : index
    %27 = memref.load %arg6[%c1_46, %c3_47] : memref<4x4xf32, #tpu.memory_space<smem>>
    %c2_48 = arith.constant 2 : index
    %c0_49 = arith.constant 0 : index
    %28 = memref.load %arg6[%c2_48, %c0_49] : memref<4x4xf32, #tpu.memory_space<smem>>
    %c2_50 = arith.constant 2 : index
    %c1_51 = arith.constant 1 : index
    %29 = memref.load %arg6[%c2_50, %c1_51] : memref<4x4xf32, #tpu.memory_space<smem>>
    %c2_52 = arith.constant 2 : index
    %c2_53 = arith.constant 2 : index
    %30 = memref.load %arg6[%c2_52, %c2_53] : memref<4x4xf32, #tpu.memory_space<smem>>
    %c2_54 = arith.constant 2 : index
    %c3_55 = arith.constant 3 : index
    %31 = memref.load %arg6[%c2_54, %c3_55] : memref<4x4xf32, #tpu.memory_space<smem>>
    %c3_56 = arith.constant 3 : index
    %c0_57 = arith.constant 0 : index
    %32 = memref.load %arg6[%c3_56, %c0_57] : memref<4x4xf32, #tpu.memory_space<smem>>
    %c3_58 = arith.constant 3 : index
    %c1_59 = arith.constant 1 : index
    %33 = memref.load %arg6[%c3_58, %c1_59] : memref<4x4xf32, #tpu.memory_space<smem>>
    %c3_60 = arith.constant 3 : index
    %c2_61 = arith.constant 2 : index
    %34 = memref.load %arg6[%c3_60, %c2_61] : memref<4x4xf32, #tpu.memory_space<smem>>
    %c3_62 = arith.constant 3 : index
    %c3_63 = arith.constant 3 : index
    %35 = memref.load %arg6[%c3_62, %c3_63] : memref<4x4xf32, #tpu.memory_space<smem>>
    %c0_64 = arith.constant 0 : index
    %36 = memref.load %arg7[%c0_64] : memref<4xf32, #tpu.memory_space<smem>>
    %c1_65 = arith.constant 1 : index
    %37 = memref.load %arg7[%c1_65] : memref<4xf32, #tpu.memory_space<smem>>
    %c2_66 = arith.constant 2 : index
    %38 = memref.load %arg7[%c2_66] : memref<4xf32, #tpu.memory_space<smem>>
    %c3_67 = arith.constant 3 : index
    %39 = memref.load %arg7[%c3_67] : memref<4xf32, #tpu.memory_space<smem>>
    %c0_68 = arith.constant 0 : index
    %c0_69 = arith.constant 0 : index
    %40 = memref.load %arg8[%c0_68, %c0_69] : memref<2x2xf32, #tpu.memory_space<smem>>
    %c0_70 = arith.constant 0 : index
    %c1_71 = arith.constant 1 : index
    %41 = memref.load %arg8[%c0_70, %c1_71] : memref<2x2xf32, #tpu.memory_space<smem>>
    %c1_72 = arith.constant 1 : index
    %c0_73 = arith.constant 0 : index
    %42 = memref.load %arg8[%c1_72, %c0_73] : memref<2x2xf32, #tpu.memory_space<smem>>
    %c1_74 = arith.constant 1 : index
    %c1_75 = arith.constant 1 : index
    %43 = memref.load %arg8[%c1_74, %c1_75] : memref<2x2xf32, #tpu.memory_space<smem>>
    %c0_76 = arith.constant 0 : index
    %44 = memref.load %arg9[%c0_76] : memref<2xf32, #tpu.memory_space<smem>>
    %c1_77 = arith.constant 1 : index
    %45 = memref.load %arg9[%c1_77] : memref<2xf32, #tpu.memory_space<smem>>
    %c0_78 = arith.constant 0 : index
    %c0_79 = arith.constant 0 : index
    %46 = memref.load %arg10[%c0_78, %c0_79] : memref<2x4xf32, #tpu.memory_space<smem>>
    %c0_80 = arith.constant 0 : index
    %c1_81 = arith.constant 1 : index
    %47 = memref.load %arg10[%c0_80, %c1_81] : memref<2x4xf32, #tpu.memory_space<smem>>
    %c0_82 = arith.constant 0 : index
    %c2_83 = arith.constant 2 : index
    %48 = memref.load %arg10[%c0_82, %c2_83] : memref<2x4xf32, #tpu.memory_space<smem>>
    %c0_84 = arith.constant 0 : index
    %c3_85 = arith.constant 3 : index
    %49 = memref.load %arg10[%c0_84, %c3_85] : memref<2x4xf32, #tpu.memory_space<smem>>
    %c1_86 = arith.constant 1 : index
    %c0_87 = arith.constant 0 : index
    %50 = memref.load %arg10[%c1_86, %c0_87] : memref<2x4xf32, #tpu.memory_space<smem>>
    %c1_88 = arith.constant 1 : index
    %c1_89 = arith.constant 1 : index
    %51 = memref.load %arg10[%c1_88, %c1_89] : memref<2x4xf32, #tpu.memory_space<smem>>
    %c1_90 = arith.constant 1 : index
    %c2_91 = arith.constant 2 : index
    %52 = memref.load %arg10[%c1_90, %c2_91] : memref<2x4xf32, #tpu.memory_space<smem>>
    %c1_92 = arith.constant 1 : index
    %c3_93 = arith.constant 3 : index
    %53 = memref.load %arg10[%c1_92, %c3_93] : memref<2x4xf32, #tpu.memory_space<smem>>
    %c0_94 = arith.constant 0 : index
    %c0_95 = arith.constant 0 : index
    %54 = memref.load %arg11[%c0_94, %c0_95] : memref<2x2xf32, #tpu.memory_space<smem>>
    %c0_96 = arith.constant 0 : index
    %c1_97 = arith.constant 1 : index
    %55 = memref.load %arg11[%c0_96, %c1_97] : memref<2x2xf32, #tpu.memory_space<smem>>
    %c1_98 = arith.constant 1 : index
    %c0_99 = arith.constant 0 : index
    %56 = memref.load %arg11[%c1_98, %c0_99] : memref<2x2xf32, #tpu.memory_space<smem>>
    %c1_100 = arith.constant 1 : index
    %c1_101 = arith.constant 1 : index
    %57 = memref.load %arg11[%c1_100, %c1_101] : memref<2x2xf32, #tpu.memory_space<smem>>
    %c0_102 = arith.constant 0 : index
    %58 = memref.load %arg12[%c0_102] : memref<2xf32, #tpu.memory_space<smem>>
    %c1_103 = arith.constant 1 : index
    %59 = memref.load %arg12[%c1_103] : memref<2xf32, #tpu.memory_space<smem>>
    %c0_104 = arith.constant 0 : index
    %c0_105 = arith.constant 0 : index
    %c0_106 = arith.constant 0 : index
    %c0_107 = arith.constant 0 : index
    %60 = vector.load %arg1[%c0_104, %c0_105, %c0_106, %c0_107] : memref<1x4x18x18xf32, #tpu.memory_space<vmem>>, vector<1x1x18x18xf32>
    %61 = vector.shape_cast %60 : vector<1x1x18x18xf32> to vector<18x18xf32>
    %c0_108 = arith.constant 0 : index
    %c1_109 = arith.constant 1 : index
    %c0_110 = arith.constant 0 : index
    %c0_111 = arith.constant 0 : index
    %62 = vector.load %arg1[%c0_108, %c1_109, %c0_110, %c0_111] : memref<1x4x18x18xf32, #tpu.memory_space<vmem>>, vector<1x1x18x18xf32>
    %63 = vector.shape_cast %62 : vector<1x1x18x18xf32> to vector<18x18xf32>
    %c0_112 = arith.constant 0 : index
    %c2_113 = arith.constant 2 : index
    %c0_114 = arith.constant 0 : index
    %c0_115 = arith.constant 0 : index
    %64 = vector.load %arg1[%c0_112, %c2_113, %c0_114, %c0_115] : memref<1x4x18x18xf32, #tpu.memory_space<vmem>>, vector<1x1x18x18xf32>
    %65 = vector.shape_cast %64 : vector<1x1x18x18xf32> to vector<18x18xf32>
    %c0_116 = arith.constant 0 : index
    %c3_117 = arith.constant 3 : index
    %c0_118 = arith.constant 0 : index
    %c0_119 = arith.constant 0 : index
    %66 = vector.load %arg1[%c0_116, %c3_117, %c0_118, %c0_119] : memref<1x4x18x18xf32, #tpu.memory_space<vmem>>, vector<1x1x18x18xf32>
    %67 = vector.shape_cast %66 : vector<1x1x18x18xf32> to vector<18x18xf32>
    %68 = vector.broadcast %0 : f32 to vector<18x18xf32>
    %69 = arith.mulf %68, %61 : vector<18x18xf32>
    %70 = vector.broadcast %1 : f32 to vector<18x18xf32>
    %71 = arith.mulf %70, %63 : vector<18x18xf32>
    %72 = arith.addf %69, %71 : vector<18x18xf32>
    %73 = vector.broadcast %2 : f32 to vector<18x18xf32>
    %74 = arith.mulf %73, %65 : vector<18x18xf32>
    %75 = arith.addf %72, %74 : vector<18x18xf32>
    %76 = vector.broadcast %3 : f32 to vector<18x18xf32>
    %77 = arith.mulf %76, %67 : vector<18x18xf32>
    %78 = arith.addf %75, %77 : vector<18x18xf32>
    %79 = vector.broadcast %8 : f32 to vector<18x18xf32>
    %80 = arith.addf %78, %79 : vector<18x18xf32>
    %81 = vector.broadcast %4 : f32 to vector<18x18xf32>
    %82 = arith.mulf %81, %61 : vector<18x18xf32>
    %83 = vector.broadcast %5 : f32 to vector<18x18xf32>
    %84 = arith.mulf %83, %63 : vector<18x18xf32>
    %85 = arith.addf %82, %84 : vector<18x18xf32>
    %86 = vector.broadcast %6 : f32 to vector<18x18xf32>
    %87 = arith.mulf %86, %65 : vector<18x18xf32>
    %88 = arith.addf %85, %87 : vector<18x18xf32>
    %89 = vector.broadcast %7 : f32 to vector<18x18xf32>
    %90 = arith.mulf %89, %67 : vector<18x18xf32>
    %91 = arith.addf %88, %90 : vector<18x18xf32>
    %92 = vector.broadcast %9 : f32 to vector<18x18xf32>
    %93 = arith.addf %91, %92 : vector<18x18xf32>
    %94 = vector.broadcast %10 : f32 to vector<18x18xf32>
    %95 = arith.mulf %94, %61 : vector<18x18xf32>
    %96 = vector.broadcast %11 : f32 to vector<18x18xf32>
    %97 = arith.mulf %96, %63 : vector<18x18xf32>
    %98 = arith.addf %95, %97 : vector<18x18xf32>
    %99 = vector.broadcast %12 : f32 to vector<18x18xf32>
    %100 = arith.mulf %99, %65 : vector<18x18xf32>
    %101 = arith.addf %98, %100 : vector<18x18xf32>
    %102 = vector.broadcast %13 : f32 to vector<18x18xf32>
    %103 = arith.mulf %102, %67 : vector<18x18xf32>
    %104 = arith.addf %101, %103 : vector<18x18xf32>
    %105 = vector.broadcast %18 : f32 to vector<18x18xf32>
    %106 = arith.addf %104, %105 : vector<18x18xf32>
    %107 = vector.broadcast %14 : f32 to vector<18x18xf32>
    %108 = arith.mulf %107, %61 : vector<18x18xf32>
    %109 = vector.broadcast %15 : f32 to vector<18x18xf32>
    %110 = arith.mulf %109, %63 : vector<18x18xf32>
    %111 = arith.addf %108, %110 : vector<18x18xf32>
    %112 = vector.broadcast %16 : f32 to vector<18x18xf32>
    %113 = arith.mulf %112, %65 : vector<18x18xf32>
    %114 = arith.addf %111, %113 : vector<18x18xf32>
    %115 = vector.broadcast %17 : f32 to vector<18x18xf32>
    %116 = arith.mulf %115, %67 : vector<18x18xf32>
    %117 = arith.addf %114, %116 : vector<18x18xf32>
    %118 = vector.broadcast %19 : f32 to vector<18x18xf32>
    %119 = arith.addf %117, %118 : vector<18x18xf32>
    %120 = vector.broadcast %20 : f32 to vector<18x18xf32>
    %121 = arith.mulf %120, %61 : vector<18x18xf32>
    %122 = vector.broadcast %21 : f32 to vector<18x18xf32>
    %123 = arith.mulf %122, %63 : vector<18x18xf32>
    %124 = arith.addf %121, %123 : vector<18x18xf32>
    %125 = vector.broadcast %22 : f32 to vector<18x18xf32>
    %126 = arith.mulf %125, %65 : vector<18x18xf32>
    %127 = arith.addf %124, %126 : vector<18x18xf32>
    %128 = vector.broadcast %23 : f32 to vector<18x18xf32>
    %129 = arith.mulf %128, %67 : vector<18x18xf32>
    %130 = arith.addf %127, %129 : vector<18x18xf32>
    %131 = vector.broadcast %36 : f32 to vector<18x18xf32>
    %132 = arith.addf %130, %131 : vector<18x18xf32>
    %133 = vector.broadcast %24 : f32 to vector<18x18xf32>
    %134 = arith.mulf %133, %61 : vector<18x18xf32>
    %135 = vector.broadcast %25 : f32 to vector<18x18xf32>
    %136 = arith.mulf %135, %63 : vector<18x18xf32>
    %137 = arith.addf %134, %136 : vector<18x18xf32>
    %138 = vector.broadcast %26 : f32 to vector<18x18xf32>
    %139 = arith.mulf %138, %65 : vector<18x18xf32>
    %140 = arith.addf %137, %139 : vector<18x18xf32>
    %141 = vector.broadcast %27 : f32 to vector<18x18xf32>
    %142 = arith.mulf %141, %67 : vector<18x18xf32>
    %143 = arith.addf %140, %142 : vector<18x18xf32>
    %144 = vector.broadcast %37 : f32 to vector<18x18xf32>
    %145 = arith.addf %143, %144 : vector<18x18xf32>
    %146 = vector.broadcast %28 : f32 to vector<18x18xf32>
    %147 = arith.mulf %146, %61 : vector<18x18xf32>
    %148 = vector.broadcast %29 : f32 to vector<18x18xf32>
    %149 = arith.mulf %148, %63 : vector<18x18xf32>
    %150 = arith.addf %147, %149 : vector<18x18xf32>
    %151 = vector.broadcast %30 : f32 to vector<18x18xf32>
    %152 = arith.mulf %151, %65 : vector<18x18xf32>
    %153 = arith.addf %150, %152 : vector<18x18xf32>
    %154 = vector.broadcast %31 : f32 to vector<18x18xf32>
    %155 = arith.mulf %154, %67 : vector<18x18xf32>
    %156 = arith.addf %153, %155 : vector<18x18xf32>
    %157 = vector.broadcast %38 : f32 to vector<18x18xf32>
    %158 = arith.addf %156, %157 : vector<18x18xf32>
    %159 = vector.broadcast %32 : f32 to vector<18x18xf32>
    %160 = arith.mulf %159, %61 : vector<18x18xf32>
    %161 = vector.broadcast %33 : f32 to vector<18x18xf32>
    %162 = arith.mulf %161, %63 : vector<18x18xf32>
    %163 = arith.addf %160, %162 : vector<18x18xf32>
    %164 = vector.broadcast %34 : f32 to vector<18x18xf32>
    %165 = arith.mulf %164, %65 : vector<18x18xf32>
    %166 = arith.addf %163, %165 : vector<18x18xf32>
    %167 = vector.broadcast %35 : f32 to vector<18x18xf32>
    %168 = arith.mulf %167, %67 : vector<18x18xf32>
    %169 = arith.addf %166, %168 : vector<18x18xf32>
    %170 = vector.broadcast %39 : f32 to vector<18x18xf32>
    %171 = arith.addf %169, %170 : vector<18x18xf32>
    %172 = tpu.iota {dimensions = array<i32: 0>} : vector<18x18xi32>
    %173 = arith.sitofp %172 : vector<18x18xi32> to vector<18x18xf32>
    %cst = arith.constant 1.000000e+00 : f32
    %174 = vector.broadcast %cst : f32 to vector<18x18xf32>
    %175 = arith.subf %173, %174 : vector<18x18xf32>
    %176 = tpu.iota {dimensions = array<i32: 1>} : vector<18x18xi32>
    %177 = arith.sitofp %176 : vector<18x18xi32> to vector<18x18xf32>
    %cst_120 = arith.constant 1.000000e+00 : f32
    %178 = vector.broadcast %cst_120 : f32 to vector<18x18xf32>
    %179 = arith.subf %177, %178 : vector<18x18xf32>
    %180 = math.absf %175 : vector<18x18xf32>
    %cst_121 = arith.constant 1.500000e+01 : f32
    %181 = vector.broadcast %cst_121 : f32 to vector<18x18xf32>
    %182 = arith.cmpf ogt, %180, %181 : vector<18x18xf32>
    %cst_122 = arith.constant 3.000000e+01 : f32
    %183 = vector.broadcast %cst_122 : f32 to vector<18x18xf32>
    %184 = arith.subf %183, %180 : vector<18x18xf32>
    %185 = arith.select %182, %184, %180 : vector<18x18xi1>, vector<18x18xf32>
    %186 = math.absf %179 : vector<18x18xf32>
    %cst_123 = arith.constant 1.500000e+01 : f32
    %187 = vector.broadcast %cst_123 : f32 to vector<18x18xf32>
    %188 = arith.cmpf ogt, %186, %187 : vector<18x18xf32>
    %cst_124 = arith.constant 3.000000e+01 : f32
    %189 = vector.broadcast %cst_124 : f32 to vector<18x18xf32>
    %190 = arith.subf %189, %186 : vector<18x18xf32>
    %191 = arith.select %188, %190, %186 : vector<18x18xi1>, vector<18x18xf32>
    %cst_125 = arith.constant 2.000000e+00 : f32
    %192 = vector.broadcast %cst_125 : f32 to vector<18x18xf32>
    %193 = arith.mulf %192, %191 : vector<18x18xf32>
    %cst_126 = arith.constant 1.500000e+01 : f32
    %194 = vector.broadcast %cst_126 : f32 to vector<18x18xf32>
    %195 = arith.divf %193, %194 : vector<18x18xf32>
    %cst_127 = arith.constant -1.000000e+00 : f32
    %196 = vector.broadcast %cst_127 : f32 to vector<18x18xf32>
    %197 = arith.addf %196, %195 : vector<18x18xf32>
    %cst_128 = arith.constant 2.000000e+00 : f32
    %198 = vector.broadcast %cst_128 : f32 to vector<18x18xf32>
    %199 = arith.mulf %198, %185 : vector<18x18xf32>
    %cst_129 = arith.constant 1.500000e+01 : f32
    %200 = vector.broadcast %cst_129 : f32 to vector<18x18xf32>
    %201 = arith.divf %199, %200 : vector<18x18xf32>
    %cst_130 = arith.constant -1.000000e+00 : f32
    %202 = vector.broadcast %cst_130 : f32 to vector<18x18xf32>
    %203 = arith.addf %202, %201 : vector<18x18xf32>
    %204 = vector.broadcast %40 : f32 to vector<18x18xf32>
    %205 = arith.mulf %204, %197 : vector<18x18xf32>
    %206 = vector.broadcast %41 : f32 to vector<18x18xf32>
    %207 = arith.mulf %206, %203 : vector<18x18xf32>
    %208 = arith.addf %205, %207 : vector<18x18xf32>
    %209 = vector.broadcast %44 : f32 to vector<18x18xf32>
    %210 = arith.addf %208, %209 : vector<18x18xf32>
    %211 = vector.broadcast %42 : f32 to vector<18x18xf32>
    %212 = arith.mulf %211, %197 : vector<18x18xf32>
    %213 = vector.broadcast %43 : f32 to vector<18x18xf32>
    %214 = arith.mulf %213, %203 : vector<18x18xf32>
    %215 = arith.addf %212, %214 : vector<18x18xf32>
    %216 = vector.broadcast %45 : f32 to vector<18x18xf32>
    %217 = arith.addf %215, %216 : vector<18x18xf32>
    %218 = vector.extract_strided_slice %80 {offsets = [1, 1], sizes = [16, 16], strides = [1, 1]} : vector<18x18xf32> to vector<16x16xf32>
    %219 = vector.extract_strided_slice %93 {offsets = [1, 1], sizes = [16, 16], strides = [1, 1]} : vector<18x18xf32> to vector<16x16xf32>
    %220 = vector.extract_strided_slice %210 {offsets = [1, 1], sizes = [16, 16], strides = [1, 1]} : vector<18x18xf32> to vector<16x16xf32>
    %221 = vector.extract_strided_slice %217 {offsets = [1, 1], sizes = [16, 16], strides = [1, 1]} : vector<18x18xf32> to vector<16x16xf32>
    %222 = vector.extract_strided_slice %106 {offsets = [0, 0], sizes = [16, 16], strides = [1, 1]} : vector<18x18xf32> to vector<16x16xf32>
    %223 = arith.subf %218, %222 : vector<16x16xf32>
    %cst_131 = arith.constant 0.000000e+00 : f32
    %224 = vector.broadcast %cst_131 : f32 to vector<16x16xf32>
    %225 = arith.cmpf ogt, %223, %224 : vector<16x16xf32>
    %cst_132 = arith.constant 2.000000e-01 : f32
    %226 = vector.broadcast %cst_132 : f32 to vector<16x16xf32>
    %227 = arith.mulf %226, %223 : vector<16x16xf32>
    %228 = arith.select %225, %223, %227 : vector<16x16xi1>, vector<16x16xf32>
    %229 = vector.extract_strided_slice %119 {offsets = [0, 0], sizes = [16, 16], strides = [1, 1]} : vector<18x18xf32> to vector<16x16xf32>
    %230 = arith.subf %219, %229 : vector<16x16xf32>
    %cst_133 = arith.constant 0.000000e+00 : f32
    %231 = vector.broadcast %cst_133 : f32 to vector<16x16xf32>
    %232 = arith.cmpf ogt, %230, %231 : vector<16x16xf32>
    %cst_134 = arith.constant 2.000000e-01 : f32
    %233 = vector.broadcast %cst_134 : f32 to vector<16x16xf32>
    %234 = arith.mulf %233, %230 : vector<16x16xf32>
    %235 = arith.select %232, %230, %234 : vector<16x16xi1>, vector<16x16xf32>
    %236 = vector.extract_strided_slice %210 {offsets = [0, 0], sizes = [16, 16], strides = [1, 1]} : vector<18x18xf32> to vector<16x16xf32>
    %237 = arith.subf %220, %236 : vector<16x16xf32>
    %cst_135 = arith.constant 0.000000e+00 : f32
    %238 = vector.broadcast %cst_135 : f32 to vector<16x16xf32>
    %239 = arith.cmpf ogt, %237, %238 : vector<16x16xf32>
    %cst_136 = arith.constant 2.000000e-01 : f32
    %240 = vector.broadcast %cst_136 : f32 to vector<16x16xf32>
    %241 = arith.mulf %240, %237 : vector<16x16xf32>
    %242 = arith.select %239, %237, %241 : vector<16x16xi1>, vector<16x16xf32>
    %243 = vector.extract_strided_slice %217 {offsets = [0, 0], sizes = [16, 16], strides = [1, 1]} : vector<18x18xf32> to vector<16x16xf32>
    %244 = arith.subf %221, %243 : vector<16x16xf32>
    %cst_137 = arith.constant 0.000000e+00 : f32
    %245 = vector.broadcast %cst_137 : f32 to vector<16x16xf32>
    %246 = arith.cmpf ogt, %244, %245 : vector<16x16xf32>
    %cst_138 = arith.constant 2.000000e-01 : f32
    %247 = vector.broadcast %cst_138 : f32 to vector<16x16xf32>
    %248 = arith.mulf %247, %244 : vector<16x16xf32>
    %249 = arith.select %246, %244, %248 : vector<16x16xi1>, vector<16x16xf32>
    %250 = vector.broadcast %46 : f32 to vector<16x16xf32>
    %251 = arith.mulf %250, %228 : vector<16x16xf32>
    %252 = vector.broadcast %47 : f32 to vector<16x16xf32>
    %253 = arith.mulf %252, %235 : vector<16x16xf32>
    %254 = arith.addf %251, %253 : vector<16x16xf32>
    %255 = vector.broadcast %48 : f32 to vector<16x16xf32>
    %256 = arith.mulf %255, %242 : vector<16x16xf32>
    %257 = arith.addf %254, %256 : vector<16x16xf32>
    %258 = vector.broadcast %49 : f32 to vector<16x16xf32>
    %259 = arith.mulf %258, %249 : vector<16x16xf32>
    %260 = arith.addf %257, %259 : vector<16x16xf32>
    %261 = vector.broadcast %50 : f32 to vector<16x16xf32>
    %262 = arith.mulf %261, %228 : vector<16x16xf32>
    %263 = vector.broadcast %51 : f32 to vector<16x16xf32>
    %264 = arith.mulf %263, %235 : vector<16x16xf32>
    %265 = arith.addf %262, %264 : vector<16x16xf32>
    %266 = vector.broadcast %52 : f32 to vector<16x16xf32>
    %267 = arith.mulf %266, %242 : vector<16x16xf32>
    %268 = arith.addf %265, %267 : vector<16x16xf32>
    %269 = vector.broadcast %53 : f32 to vector<16x16xf32>
    %270 = arith.mulf %269, %249 : vector<16x16xf32>
    %271 = arith.addf %268, %270 : vector<16x16xf32>
    %272 = vector.broadcast %54 : f32 to vector<16x16xf32>
    %273 = arith.mulf %272, %260 : vector<16x16xf32>
    %274 = vector.broadcast %55 : f32 to vector<16x16xf32>
    %275 = arith.mulf %274, %271 : vector<16x16xf32>
    %276 = arith.addf %273, %275 : vector<16x16xf32>
    %277 = vector.broadcast %58 : f32 to vector<16x16xf32>
    %278 = arith.addf %276, %277 : vector<16x16xf32>
    %279 = vector.broadcast %56 : f32 to vector<16x16xf32>
    %280 = arith.mulf %279, %260 : vector<16x16xf32>
    %281 = vector.broadcast %57 : f32 to vector<16x16xf32>
    %282 = arith.mulf %281, %271 : vector<16x16xf32>
    %283 = arith.addf %280, %282 : vector<16x16xf32>
    %284 = vector.broadcast %59 : f32 to vector<16x16xf32>
    %285 = arith.addf %283, %284 : vector<16x16xf32>
    %286 = vector.extract_strided_slice %106 {offsets = [0, 1], sizes = [16, 16], strides = [1, 1]} : vector<18x18xf32> to vector<16x16xf32>
    %287 = arith.subf %218, %286 : vector<16x16xf32>
    %cst_139 = arith.constant 0.000000e+00 : f32
    %288 = vector.broadcast %cst_139 : f32 to vector<16x16xf32>
    %289 = arith.cmpf ogt, %287, %288 : vector<16x16xf32>
    %cst_140 = arith.constant 2.000000e-01 : f32
    %290 = vector.broadcast %cst_140 : f32 to vector<16x16xf32>
    %291 = arith.mulf %290, %287 : vector<16x16xf32>
    %292 = arith.select %289, %287, %291 : vector<16x16xi1>, vector<16x16xf32>
    %293 = vector.extract_strided_slice %119 {offsets = [0, 1], sizes = [16, 16], strides = [1, 1]} : vector<18x18xf32> to vector<16x16xf32>
    %294 = arith.subf %219, %293 : vector<16x16xf32>
    %cst_141 = arith.constant 0.000000e+00 : f32
    %295 = vector.broadcast %cst_141 : f32 to vector<16x16xf32>
    %296 = arith.cmpf ogt, %294, %295 : vector<16x16xf32>
    %cst_142 = arith.constant 2.000000e-01 : f32
    %297 = vector.broadcast %cst_142 : f32 to vector<16x16xf32>
    %298 = arith.mulf %297, %294 : vector<16x16xf32>
    %299 = arith.select %296, %294, %298 : vector<16x16xi1>, vector<16x16xf32>
    %300 = vector.extract_strided_slice %210 {offsets = [0, 1], sizes = [16, 16], strides = [1, 1]} : vector<18x18xf32> to vector<16x16xf32>
    %301 = arith.subf %220, %300 : vector<16x16xf32>
    %cst_143 = arith.constant 0.000000e+00 : f32
    %302 = vector.broadcast %cst_143 : f32 to vector<16x16xf32>
    %303 = arith.cmpf ogt, %301, %302 : vector<16x16xf32>
    %cst_144 = arith.constant 2.000000e-01 : f32
    %304 = vector.broadcast %cst_144 : f32 to vector<16x16xf32>
    %305 = arith.mulf %304, %301 : vector<16x16xf32>
    %306 = arith.select %303, %301, %305 : vector<16x16xi1>, vector<16x16xf32>
    %307 = vector.extract_strided_slice %217 {offsets = [0, 1], sizes = [16, 16], strides = [1, 1]} : vector<18x18xf32> to vector<16x16xf32>
    %308 = arith.subf %221, %307 : vector<16x16xf32>
    %cst_145 = arith.constant 0.000000e+00 : f32
    %309 = vector.broadcast %cst_145 : f32 to vector<16x16xf32>
    %310 = arith.cmpf ogt, %308, %309 : vector<16x16xf32>
    %cst_146 = arith.constant 2.000000e-01 : f32
    %311 = vector.broadcast %cst_146 : f32 to vector<16x16xf32>
    %312 = arith.mulf %311, %308 : vector<16x16xf32>
    %313 = arith.select %310, %308, %312 : vector<16x16xi1>, vector<16x16xf32>
    %314 = vector.broadcast %46 : f32 to vector<16x16xf32>
    %315 = arith.mulf %314, %292 : vector<16x16xf32>
    %316 = vector.broadcast %47 : f32 to vector<16x16xf32>
    %317 = arith.mulf %316, %299 : vector<16x16xf32>
    %318 = arith.addf %315, %317 : vector<16x16xf32>
    %319 = vector.broadcast %48 : f32 to vector<16x16xf32>
    %320 = arith.mulf %319, %306 : vector<16x16xf32>
    %321 = arith.addf %318, %320 : vector<16x16xf32>
    %322 = vector.broadcast %49 : f32 to vector<16x16xf32>
    %323 = arith.mulf %322, %313 : vector<16x16xf32>
    %324 = arith.addf %321, %323 : vector<16x16xf32>
    %325 = vector.broadcast %50 : f32 to vector<16x16xf32>
    %326 = arith.mulf %325, %292 : vector<16x16xf32>
    %327 = vector.broadcast %51 : f32 to vector<16x16xf32>
    %328 = arith.mulf %327, %299 : vector<16x16xf32>
    %329 = arith.addf %326, %328 : vector<16x16xf32>
    %330 = vector.broadcast %52 : f32 to vector<16x16xf32>
    %331 = arith.mulf %330, %306 : vector<16x16xf32>
    %332 = arith.addf %329, %331 : vector<16x16xf32>
    %333 = vector.broadcast %53 : f32 to vector<16x16xf32>
    %334 = arith.mulf %333, %313 : vector<16x16xf32>
    %335 = arith.addf %332, %334 : vector<16x16xf32>
    %336 = vector.broadcast %54 : f32 to vector<16x16xf32>
    %337 = arith.mulf %336, %324 : vector<16x16xf32>
    %338 = vector.broadcast %55 : f32 to vector<16x16xf32>
    %339 = arith.mulf %338, %335 : vector<16x16xf32>
    %340 = arith.addf %337, %339 : vector<16x16xf32>
    %341 = vector.broadcast %58 : f32 to vector<16x16xf32>
    %342 = arith.addf %340, %341 : vector<16x16xf32>
    %343 = vector.broadcast %56 : f32 to vector<16x16xf32>
    %344 = arith.mulf %343, %324 : vector<16x16xf32>
    %345 = vector.broadcast %57 : f32 to vector<16x16xf32>
    %346 = arith.mulf %345, %335 : vector<16x16xf32>
    %347 = arith.addf %344, %346 : vector<16x16xf32>
    %348 = vector.broadcast %59 : f32 to vector<16x16xf32>
    %349 = arith.addf %347, %348 : vector<16x16xf32>
    %350 = vector.extract_strided_slice %106 {offsets = [0, 2], sizes = [16, 16], strides = [1, 1]} : vector<18x18xf32> to vector<16x16xf32>
    %351 = arith.subf %218, %350 : vector<16x16xf32>
    %cst_147 = arith.constant 0.000000e+00 : f32
    %352 = vector.broadcast %cst_147 : f32 to vector<16x16xf32>
    %353 = arith.cmpf ogt, %351, %352 : vector<16x16xf32>
    %cst_148 = arith.constant 2.000000e-01 : f32
    %354 = vector.broadcast %cst_148 : f32 to vector<16x16xf32>
    %355 = arith.mulf %354, %351 : vector<16x16xf32>
    %356 = arith.select %353, %351, %355 : vector<16x16xi1>, vector<16x16xf32>
    %357 = vector.extract_strided_slice %119 {offsets = [0, 2], sizes = [16, 16], strides = [1, 1]} : vector<18x18xf32> to vector<16x16xf32>
    %358 = arith.subf %219, %357 : vector<16x16xf32>
    %cst_149 = arith.constant 0.000000e+00 : f32
    %359 = vector.broadcast %cst_149 : f32 to vector<16x16xf32>
    %360 = arith.cmpf ogt, %358, %359 : vector<16x16xf32>
    %cst_150 = arith.constant 2.000000e-01 : f32
    %361 = vector.broadcast %cst_150 : f32 to vector<16x16xf32>
    %362 = arith.mulf %361, %358 : vector<16x16xf32>
    %363 = arith.select %360, %358, %362 : vector<16x16xi1>, vector<16x16xf32>
    %364 = vector.extract_strided_slice %210 {offsets = [0, 2], sizes = [16, 16], strides = [1, 1]} : vector<18x18xf32> to vector<16x16xf32>
    %365 = arith.subf %220, %364 : vector<16x16xf32>
    %cst_151 = arith.constant 0.000000e+00 : f32
    %366 = vector.broadcast %cst_151 : f32 to vector<16x16xf32>
    %367 = arith.cmpf ogt, %365, %366 : vector<16x16xf32>
    %cst_152 = arith.constant 2.000000e-01 : f32
    %368 = vector.broadcast %cst_152 : f32 to vector<16x16xf32>
    %369 = arith.mulf %368, %365 : vector<16x16xf32>
    %370 = arith.select %367, %365, %369 : vector<16x16xi1>, vector<16x16xf32>
    %371 = vector.extract_strided_slice %217 {offsets = [0, 2], sizes = [16, 16], strides = [1, 1]} : vector<18x18xf32> to vector<16x16xf32>
    %372 = arith.subf %221, %371 : vector<16x16xf32>
    %cst_153 = arith.constant 0.000000e+00 : f32
    %373 = vector.broadcast %cst_153 : f32 to vector<16x16xf32>
    %374 = arith.cmpf ogt, %372, %373 : vector<16x16xf32>
    %cst_154 = arith.constant 2.000000e-01 : f32
    %375 = vector.broadcast %cst_154 : f32 to vector<16x16xf32>
    %376 = arith.mulf %375, %372 : vector<16x16xf32>
    %377 = arith.select %374, %372, %376 : vector<16x16xi1>, vector<16x16xf32>
    %378 = vector.broadcast %46 : f32 to vector<16x16xf32>
    %379 = arith.mulf %378, %356 : vector<16x16xf32>
    %380 = vector.broadcast %47 : f32 to vector<16x16xf32>
    %381 = arith.mulf %380, %363 : vector<16x16xf32>
    %382 = arith.addf %379, %381 : vector<16x16xf32>
    %383 = vector.broadcast %48 : f32 to vector<16x16xf32>
    %384 = arith.mulf %383, %370 : vector<16x16xf32>
    %385 = arith.addf %382, %384 : vector<16x16xf32>
    %386 = vector.broadcast %49 : f32 to vector<16x16xf32>
    %387 = arith.mulf %386, %377 : vector<16x16xf32>
    %388 = arith.addf %385, %387 : vector<16x16xf32>
    %389 = vector.broadcast %50 : f32 to vector<16x16xf32>
    %390 = arith.mulf %389, %356 : vector<16x16xf32>
    %391 = vector.broadcast %51 : f32 to vector<16x16xf32>
    %392 = arith.mulf %391, %363 : vector<16x16xf32>
    %393 = arith.addf %390, %392 : vector<16x16xf32>
    %394 = vector.broadcast %52 : f32 to vector<16x16xf32>
    %395 = arith.mulf %394, %370 : vector<16x16xf32>
    %396 = arith.addf %393, %395 : vector<16x16xf32>
    %397 = vector.broadcast %53 : f32 to vector<16x16xf32>
    %398 = arith.mulf %397, %377 : vector<16x16xf32>
    %399 = arith.addf %396, %398 : vector<16x16xf32>
    %400 = vector.broadcast %54 : f32 to vector<16x16xf32>
    %401 = arith.mulf %400, %388 : vector<16x16xf32>
    %402 = vector.broadcast %55 : f32 to vector<16x16xf32>
    %403 = arith.mulf %402, %399 : vector<16x16xf32>
    %404 = arith.addf %401, %403 : vector<16x16xf32>
    %405 = vector.broadcast %58 : f32 to vector<16x16xf32>
    %406 = arith.addf %404, %405 : vector<16x16xf32>
    %407 = vector.broadcast %56 : f32 to vector<16x16xf32>
    %408 = arith.mulf %407, %388 : vector<16x16xf32>
    %409 = vector.broadcast %57 : f32 to vector<16x16xf32>
    %410 = arith.mulf %409, %399 : vector<16x16xf32>
    %411 = arith.addf %408, %410 : vector<16x16xf32>
    %412 = vector.broadcast %59 : f32 to vector<16x16xf32>
    %413 = arith.addf %411, %412 : vector<16x16xf32>
    %414 = vector.extract_strided_slice %106 {offsets = [1, 0], sizes = [16, 16], strides = [1, 1]} : vector<18x18xf32> to vector<16x16xf32>
    %415 = arith.subf %218, %414 : vector<16x16xf32>
    %cst_155 = arith.constant 0.000000e+00 : f32
    %416 = vector.broadcast %cst_155 : f32 to vector<16x16xf32>
    %417 = arith.cmpf ogt, %415, %416 : vector<16x16xf32>
    %cst_156 = arith.constant 2.000000e-01 : f32
    %418 = vector.broadcast %cst_156 : f32 to vector<16x16xf32>
    %419 = arith.mulf %418, %415 : vector<16x16xf32>
    %420 = arith.select %417, %415, %419 : vector<16x16xi1>, vector<16x16xf32>
    %421 = vector.extract_strided_slice %119 {offsets = [1, 0], sizes = [16, 16], strides = [1, 1]} : vector<18x18xf32> to vector<16x16xf32>
    %422 = arith.subf %219, %421 : vector<16x16xf32>
    %cst_157 = arith.constant 0.000000e+00 : f32
    %423 = vector.broadcast %cst_157 : f32 to vector<16x16xf32>
    %424 = arith.cmpf ogt, %422, %423 : vector<16x16xf32>
    %cst_158 = arith.constant 2.000000e-01 : f32
    %425 = vector.broadcast %cst_158 : f32 to vector<16x16xf32>
    %426 = arith.mulf %425, %422 : vector<16x16xf32>
    %427 = arith.select %424, %422, %426 : vector<16x16xi1>, vector<16x16xf32>
    %428 = vector.extract_strided_slice %210 {offsets = [1, 0], sizes = [16, 16], strides = [1, 1]} : vector<18x18xf32> to vector<16x16xf32>
    %429 = arith.subf %220, %428 : vector<16x16xf32>
    %cst_159 = arith.constant 0.000000e+00 : f32
    %430 = vector.broadcast %cst_159 : f32 to vector<16x16xf32>
    %431 = arith.cmpf ogt, %429, %430 : vector<16x16xf32>
    %cst_160 = arith.constant 2.000000e-01 : f32
    %432 = vector.broadcast %cst_160 : f32 to vector<16x16xf32>
    %433 = arith.mulf %432, %429 : vector<16x16xf32>
    %434 = arith.select %431, %429, %433 : vector<16x16xi1>, vector<16x16xf32>
    %435 = vector.extract_strided_slice %217 {offsets = [1, 0], sizes = [16, 16], strides = [1, 1]} : vector<18x18xf32> to vector<16x16xf32>
    %436 = arith.subf %221, %435 : vector<16x16xf32>
    %cst_161 = arith.constant 0.000000e+00 : f32
    %437 = vector.broadcast %cst_161 : f32 to vector<16x16xf32>
    %438 = arith.cmpf ogt, %436, %437 : vector<16x16xf32>
    %cst_162 = arith.constant 2.000000e-01 : f32
    %439 = vector.broadcast %cst_162 : f32 to vector<16x16xf32>
    %440 = arith.mulf %439, %436 : vector<16x16xf32>
    %441 = arith.select %438, %436, %440 : vector<16x16xi1>, vector<16x16xf32>
    %442 = vector.broadcast %46 : f32 to vector<16x16xf32>
    %443 = arith.mulf %442, %420 : vector<16x16xf32>
    %444 = vector.broadcast %47 : f32 to vector<16x16xf32>
    %445 = arith.mulf %444, %427 : vector<16x16xf32>
    %446 = arith.addf %443, %445 : vector<16x16xf32>
    %447 = vector.broadcast %48 : f32 to vector<16x16xf32>
    %448 = arith.mulf %447, %434 : vector<16x16xf32>
    %449 = arith.addf %446, %448 : vector<16x16xf32>
    %450 = vector.broadcast %49 : f32 to vector<16x16xf32>
    %451 = arith.mulf %450, %441 : vector<16x16xf32>
    %452 = arith.addf %449, %451 : vector<16x16xf32>
    %453 = vector.broadcast %50 : f32 to vector<16x16xf32>
    %454 = arith.mulf %453, %420 : vector<16x16xf32>
    %455 = vector.broadcast %51 : f32 to vector<16x16xf32>
    %456 = arith.mulf %455, %427 : vector<16x16xf32>
    %457 = arith.addf %454, %456 : vector<16x16xf32>
    %458 = vector.broadcast %52 : f32 to vector<16x16xf32>
    %459 = arith.mulf %458, %434 : vector<16x16xf32>
    %460 = arith.addf %457, %459 : vector<16x16xf32>
    %461 = vector.broadcast %53 : f32 to vector<16x16xf32>
    %462 = arith.mulf %461, %441 : vector<16x16xf32>
    %463 = arith.addf %460, %462 : vector<16x16xf32>
    %464 = vector.broadcast %54 : f32 to vector<16x16xf32>
    %465 = arith.mulf %464, %452 : vector<16x16xf32>
    %466 = vector.broadcast %55 : f32 to vector<16x16xf32>
    %467 = arith.mulf %466, %463 : vector<16x16xf32>
    %468 = arith.addf %465, %467 : vector<16x16xf32>
    %469 = vector.broadcast %58 : f32 to vector<16x16xf32>
    %470 = arith.addf %468, %469 : vector<16x16xf32>
    %471 = vector.broadcast %56 : f32 to vector<16x16xf32>
    %472 = arith.mulf %471, %452 : vector<16x16xf32>
    %473 = vector.broadcast %57 : f32 to vector<16x16xf32>
    %474 = arith.mulf %473, %463 : vector<16x16xf32>
    %475 = arith.addf %472, %474 : vector<16x16xf32>
    %476 = vector.broadcast %59 : f32 to vector<16x16xf32>
    %477 = arith.addf %475, %476 : vector<16x16xf32>
    %478 = vector.extract_strided_slice %106 {offsets = [1, 1], sizes = [16, 16], strides = [1, 1]} : vector<18x18xf32> to vector<16x16xf32>
    %479 = arith.subf %218, %478 : vector<16x16xf32>
    %cst_163 = arith.constant 0.000000e+00 : f32
    %480 = vector.broadcast %cst_163 : f32 to vector<16x16xf32>
    %481 = arith.cmpf ogt, %479, %480 : vector<16x16xf32>
    %cst_164 = arith.constant 2.000000e-01 : f32
    %482 = vector.broadcast %cst_164 : f32 to vector<16x16xf32>
    %483 = arith.mulf %482, %479 : vector<16x16xf32>
    %484 = arith.select %481, %479, %483 : vector<16x16xi1>, vector<16x16xf32>
    %485 = vector.extract_strided_slice %119 {offsets = [1, 1], sizes = [16, 16], strides = [1, 1]} : vector<18x18xf32> to vector<16x16xf32>
    %486 = arith.subf %219, %485 : vector<16x16xf32>
    %cst_165 = arith.constant 0.000000e+00 : f32
    %487 = vector.broadcast %cst_165 : f32 to vector<16x16xf32>
    %488 = arith.cmpf ogt, %486, %487 : vector<16x16xf32>
    %cst_166 = arith.constant 2.000000e-01 : f32
    %489 = vector.broadcast %cst_166 : f32 to vector<16x16xf32>
    %490 = arith.mulf %489, %486 : vector<16x16xf32>
    %491 = arith.select %488, %486, %490 : vector<16x16xi1>, vector<16x16xf32>
    %492 = vector.extract_strided_slice %210 {offsets = [1, 1], sizes = [16, 16], strides = [1, 1]} : vector<18x18xf32> to vector<16x16xf32>
    %493 = arith.subf %220, %492 : vector<16x16xf32>
    %cst_167 = arith.constant 0.000000e+00 : f32
    %494 = vector.broadcast %cst_167 : f32 to vector<16x16xf32>
    %495 = arith.cmpf ogt, %493, %494 : vector<16x16xf32>
    %cst_168 = arith.constant 2.000000e-01 : f32
    %496 = vector.broadcast %cst_168 : f32 to vector<16x16xf32>
    %497 = arith.mulf %496, %493 : vector<16x16xf32>
    %498 = arith.select %495, %493, %497 : vector<16x16xi1>, vector<16x16xf32>
    %499 = vector.extract_strided_slice %217 {offsets = [1, 1], sizes = [16, 16], strides = [1, 1]} : vector<18x18xf32> to vector<16x16xf32>
    %500 = arith.subf %221, %499 : vector<16x16xf32>
    %cst_169 = arith.constant 0.000000e+00 : f32
    %501 = vector.broadcast %cst_169 : f32 to vector<16x16xf32>
    %502 = arith.cmpf ogt, %500, %501 : vector<16x16xf32>
    %cst_170 = arith.constant 2.000000e-01 : f32
    %503 = vector.broadcast %cst_170 : f32 to vector<16x16xf32>
    %504 = arith.mulf %503, %500 : vector<16x16xf32>
    %505 = arith.select %502, %500, %504 : vector<16x16xi1>, vector<16x16xf32>
    %506 = vector.broadcast %46 : f32 to vector<16x16xf32>
    %507 = arith.mulf %506, %484 : vector<16x16xf32>
    %508 = vector.broadcast %47 : f32 to vector<16x16xf32>
    %509 = arith.mulf %508, %491 : vector<16x16xf32>
    %510 = arith.addf %507, %509 : vector<16x16xf32>
    %511 = vector.broadcast %48 : f32 to vector<16x16xf32>
    %512 = arith.mulf %511, %498 : vector<16x16xf32>
    %513 = arith.addf %510, %512 : vector<16x16xf32>
    %514 = vector.broadcast %49 : f32 to vector<16x16xf32>
    %515 = arith.mulf %514, %505 : vector<16x16xf32>
    %516 = arith.addf %513, %515 : vector<16x16xf32>
    %517 = vector.broadcast %50 : f32 to vector<16x16xf32>
    %518 = arith.mulf %517, %484 : vector<16x16xf32>
    %519 = vector.broadcast %51 : f32 to vector<16x16xf32>
    %520 = arith.mulf %519, %491 : vector<16x16xf32>
    %521 = arith.addf %518, %520 : vector<16x16xf32>
    %522 = vector.broadcast %52 : f32 to vector<16x16xf32>
    %523 = arith.mulf %522, %498 : vector<16x16xf32>
    %524 = arith.addf %521, %523 : vector<16x16xf32>
    %525 = vector.broadcast %53 : f32 to vector<16x16xf32>
    %526 = arith.mulf %525, %505 : vector<16x16xf32>
    %527 = arith.addf %524, %526 : vector<16x16xf32>
    %528 = vector.broadcast %54 : f32 to vector<16x16xf32>
    %529 = arith.mulf %528, %516 : vector<16x16xf32>
    %530 = vector.broadcast %55 : f32 to vector<16x16xf32>
    %531 = arith.mulf %530, %527 : vector<16x16xf32>
    %532 = arith.addf %529, %531 : vector<16x16xf32>
    %533 = vector.broadcast %58 : f32 to vector<16x16xf32>
    %534 = arith.addf %532, %533 : vector<16x16xf32>
    %535 = vector.broadcast %56 : f32 to vector<16x16xf32>
    %536 = arith.mulf %535, %516 : vector<16x16xf32>
    %537 = vector.broadcast %57 : f32 to vector<16x16xf32>
    %538 = arith.mulf %537, %527 : vector<16x16xf32>
    %539 = arith.addf %536, %538 : vector<16x16xf32>
    %540 = vector.broadcast %59 : f32 to vector<16x16xf32>
    %541 = arith.addf %539, %540 : vector<16x16xf32>
    %542 = vector.extract_strided_slice %106 {offsets = [1, 2], sizes = [16, 16], strides = [1, 1]} : vector<18x18xf32> to vector<16x16xf32>
    %543 = arith.subf %218, %542 : vector<16x16xf32>
    %cst_171 = arith.constant 0.000000e+00 : f32
    %544 = vector.broadcast %cst_171 : f32 to vector<16x16xf32>
    %545 = arith.cmpf ogt, %543, %544 : vector<16x16xf32>
    %cst_172 = arith.constant 2.000000e-01 : f32
    %546 = vector.broadcast %cst_172 : f32 to vector<16x16xf32>
    %547 = arith.mulf %546, %543 : vector<16x16xf32>
    %548 = arith.select %545, %543, %547 : vector<16x16xi1>, vector<16x16xf32>
    %549 = vector.extract_strided_slice %119 {offsets = [1, 2], sizes = [16, 16], strides = [1, 1]} : vector<18x18xf32> to vector<16x16xf32>
    %550 = arith.subf %219, %549 : vector<16x16xf32>
    %cst_173 = arith.constant 0.000000e+00 : f32
    %551 = vector.broadcast %cst_173 : f32 to vector<16x16xf32>
    %552 = arith.cmpf ogt, %550, %551 : vector<16x16xf32>
    %cst_174 = arith.constant 2.000000e-01 : f32
    %553 = vector.broadcast %cst_174 : f32 to vector<16x16xf32>
    %554 = arith.mulf %553, %550 : vector<16x16xf32>
    %555 = arith.select %552, %550, %554 : vector<16x16xi1>, vector<16x16xf32>
    %556 = vector.extract_strided_slice %210 {offsets = [1, 2], sizes = [16, 16], strides = [1, 1]} : vector<18x18xf32> to vector<16x16xf32>
    %557 = arith.subf %220, %556 : vector<16x16xf32>
    %cst_175 = arith.constant 0.000000e+00 : f32
    %558 = vector.broadcast %cst_175 : f32 to vector<16x16xf32>
    %559 = arith.cmpf ogt, %557, %558 : vector<16x16xf32>
    %cst_176 = arith.constant 2.000000e-01 : f32
    %560 = vector.broadcast %cst_176 : f32 to vector<16x16xf32>
    %561 = arith.mulf %560, %557 : vector<16x16xf32>
    %562 = arith.select %559, %557, %561 : vector<16x16xi1>, vector<16x16xf32>
    %563 = vector.extract_strided_slice %217 {offsets = [1, 2], sizes = [16, 16], strides = [1, 1]} : vector<18x18xf32> to vector<16x16xf32>
    %564 = arith.subf %221, %563 : vector<16x16xf32>
    %cst_177 = arith.constant 0.000000e+00 : f32
    %565 = vector.broadcast %cst_177 : f32 to vector<16x16xf32>
    %566 = arith.cmpf ogt, %564, %565 : vector<16x16xf32>
    %cst_178 = arith.constant 2.000000e-01 : f32
    %567 = vector.broadcast %cst_178 : f32 to vector<16x16xf32>
    %568 = arith.mulf %567, %564 : vector<16x16xf32>
    %569 = arith.select %566, %564, %568 : vector<16x16xi1>, vector<16x16xf32>
    %570 = vector.broadcast %46 : f32 to vector<16x16xf32>
    %571 = arith.mulf %570, %548 : vector<16x16xf32>
    %572 = vector.broadcast %47 : f32 to vector<16x16xf32>
    %573 = arith.mulf %572, %555 : vector<16x16xf32>
    %574 = arith.addf %571, %573 : vector<16x16xf32>
    %575 = vector.broadcast %48 : f32 to vector<16x16xf32>
    %576 = arith.mulf %575, %562 : vector<16x16xf32>
    %577 = arith.addf %574, %576 : vector<16x16xf32>
    %578 = vector.broadcast %49 : f32 to vector<16x16xf32>
    %579 = arith.mulf %578, %569 : vector<16x16xf32>
    %580 = arith.addf %577, %579 : vector<16x16xf32>
    %581 = vector.broadcast %50 : f32 to vector<16x16xf32>
    %582 = arith.mulf %581, %548 : vector<16x16xf32>
    %583 = vector.broadcast %51 : f32 to vector<16x16xf32>
    %584 = arith.mulf %583, %555 : vector<16x16xf32>
    %585 = arith.addf %582, %584 : vector<16x16xf32>
    %586 = vector.broadcast %52 : f32 to vector<16x16xf32>
    %587 = arith.mulf %586, %562 : vector<16x16xf32>
    %588 = arith.addf %585, %587 : vector<16x16xf32>
    %589 = vector.broadcast %53 : f32 to vector<16x16xf32>
    %590 = arith.mulf %589, %569 : vector<16x16xf32>
    %591 = arith.addf %588, %590 : vector<16x16xf32>
    %592 = vector.broadcast %54 : f32 to vector<16x16xf32>
    %593 = arith.mulf %592, %580 : vector<16x16xf32>
    %594 = vector.broadcast %55 : f32 to vector<16x16xf32>
    %595 = arith.mulf %594, %591 : vector<16x16xf32>
    %596 = arith.addf %593, %595 : vector<16x16xf32>
    %597 = vector.broadcast %58 : f32 to vector<16x16xf32>
    %598 = arith.addf %596, %597 : vector<16x16xf32>
    %599 = vector.broadcast %56 : f32 to vector<16x16xf32>
    %600 = arith.mulf %599, %580 : vector<16x16xf32>
    %601 = vector.broadcast %57 : f32 to vector<16x16xf32>
    %602 = arith.mulf %601, %591 : vector<16x16xf32>
    %603 = arith.addf %600, %602 : vector<16x16xf32>
    %604 = vector.broadcast %59 : f32 to vector<16x16xf32>
    %605 = arith.addf %603, %604 : vector<16x16xf32>
    %606 = vector.extract_strided_slice %106 {offsets = [2, 0], sizes = [16, 16], strides = [1, 1]} : vector<18x18xf32> to vector<16x16xf32>
    %607 = arith.subf %218, %606 : vector<16x16xf32>
    %cst_179 = arith.constant 0.000000e+00 : f32
    %608 = vector.broadcast %cst_179 : f32 to vector<16x16xf32>
    %609 = arith.cmpf ogt, %607, %608 : vector<16x16xf32>
    %cst_180 = arith.constant 2.000000e-01 : f32
    %610 = vector.broadcast %cst_180 : f32 to vector<16x16xf32>
    %611 = arith.mulf %610, %607 : vector<16x16xf32>
    %612 = arith.select %609, %607, %611 : vector<16x16xi1>, vector<16x16xf32>
    %613 = vector.extract_strided_slice %119 {offsets = [2, 0], sizes = [16, 16], strides = [1, 1]} : vector<18x18xf32> to vector<16x16xf32>
    %614 = arith.subf %219, %613 : vector<16x16xf32>
    %cst_181 = arith.constant 0.000000e+00 : f32
    %615 = vector.broadcast %cst_181 : f32 to vector<16x16xf32>
    %616 = arith.cmpf ogt, %614, %615 : vector<16x16xf32>
    %cst_182 = arith.constant 2.000000e-01 : f32
    %617 = vector.broadcast %cst_182 : f32 to vector<16x16xf32>
    %618 = arith.mulf %617, %614 : vector<16x16xf32>
    %619 = arith.select %616, %614, %618 : vector<16x16xi1>, vector<16x16xf32>
    %620 = vector.extract_strided_slice %210 {offsets = [2, 0], sizes = [16, 16], strides = [1, 1]} : vector<18x18xf32> to vector<16x16xf32>
    %621 = arith.subf %220, %620 : vector<16x16xf32>
    %cst_183 = arith.constant 0.000000e+00 : f32
    %622 = vector.broadcast %cst_183 : f32 to vector<16x16xf32>
    %623 = arith.cmpf ogt, %621, %622 : vector<16x16xf32>
    %cst_184 = arith.constant 2.000000e-01 : f32
    %624 = vector.broadcast %cst_184 : f32 to vector<16x16xf32>
    %625 = arith.mulf %624, %621 : vector<16x16xf32>
    %626 = arith.select %623, %621, %625 : vector<16x16xi1>, vector<16x16xf32>
    %627 = vector.extract_strided_slice %217 {offsets = [2, 0], sizes = [16, 16], strides = [1, 1]} : vector<18x18xf32> to vector<16x16xf32>
    %628 = arith.subf %221, %627 : vector<16x16xf32>
    %cst_185 = arith.constant 0.000000e+00 : f32
    %629 = vector.broadcast %cst_185 : f32 to vector<16x16xf32>
    %630 = arith.cmpf ogt, %628, %629 : vector<16x16xf32>
    %cst_186 = arith.constant 2.000000e-01 : f32
    %631 = vector.broadcast %cst_186 : f32 to vector<16x16xf32>
    %632 = arith.mulf %631, %628 : vector<16x16xf32>
    %633 = arith.select %630, %628, %632 : vector<16x16xi1>, vector<16x16xf32>
    %634 = vector.broadcast %46 : f32 to vector<16x16xf32>
    %635 = arith.mulf %634, %612 : vector<16x16xf32>
    %636 = vector.broadcast %47 : f32 to vector<16x16xf32>
    %637 = arith.mulf %636, %619 : vector<16x16xf32>
    %638 = arith.addf %635, %637 : vector<16x16xf32>
    %639 = vector.broadcast %48 : f32 to vector<16x16xf32>
    %640 = arith.mulf %639, %626 : vector<16x16xf32>
    %641 = arith.addf %638, %640 : vector<16x16xf32>
    %642 = vector.broadcast %49 : f32 to vector<16x16xf32>
    %643 = arith.mulf %642, %633 : vector<16x16xf32>
    %644 = arith.addf %641, %643 : vector<16x16xf32>
    %645 = vector.broadcast %50 : f32 to vector<16x16xf32>
    %646 = arith.mulf %645, %612 : vector<16x16xf32>
    %647 = vector.broadcast %51 : f32 to vector<16x16xf32>
    %648 = arith.mulf %647, %619 : vector<16x16xf32>
    %649 = arith.addf %646, %648 : vector<16x16xf32>
    %650 = vector.broadcast %52 : f32 to vector<16x16xf32>
    %651 = arith.mulf %650, %626 : vector<16x16xf32>
    %652 = arith.addf %649, %651 : vector<16x16xf32>
    %653 = vector.broadcast %53 : f32 to vector<16x16xf32>
    %654 = arith.mulf %653, %633 : vector<16x16xf32>
    %655 = arith.addf %652, %654 : vector<16x16xf32>
    %656 = vector.broadcast %54 : f32 to vector<16x16xf32>
    %657 = arith.mulf %656, %644 : vector<16x16xf32>
    %658 = vector.broadcast %55 : f32 to vector<16x16xf32>
    %659 = arith.mulf %658, %655 : vector<16x16xf32>
    %660 = arith.addf %657, %659 : vector<16x16xf32>
    %661 = vector.broadcast %58 : f32 to vector<16x16xf32>
    %662 = arith.addf %660, %661 : vector<16x16xf32>
    %663 = vector.broadcast %56 : f32 to vector<16x16xf32>
    %664 = arith.mulf %663, %644 : vector<16x16xf32>
    %665 = vector.broadcast %57 : f32 to vector<16x16xf32>
    %666 = arith.mulf %665, %655 : vector<16x16xf32>
    %667 = arith.addf %664, %666 : vector<16x16xf32>
    %668 = vector.broadcast %59 : f32 to vector<16x16xf32>
    %669 = arith.addf %667, %668 : vector<16x16xf32>
    %670 = vector.extract_strided_slice %106 {offsets = [2, 1], sizes = [16, 16], strides = [1, 1]} : vector<18x18xf32> to vector<16x16xf32>
    %671 = arith.subf %218, %670 : vector<16x16xf32>
    %cst_187 = arith.constant 0.000000e+00 : f32
    %672 = vector.broadcast %cst_187 : f32 to vector<16x16xf32>
    %673 = arith.cmpf ogt, %671, %672 : vector<16x16xf32>
    %cst_188 = arith.constant 2.000000e-01 : f32
    %674 = vector.broadcast %cst_188 : f32 to vector<16x16xf32>
    %675 = arith.mulf %674, %671 : vector<16x16xf32>
    %676 = arith.select %673, %671, %675 : vector<16x16xi1>, vector<16x16xf32>
    %677 = vector.extract_strided_slice %119 {offsets = [2, 1], sizes = [16, 16], strides = [1, 1]} : vector<18x18xf32> to vector<16x16xf32>
    %678 = arith.subf %219, %677 : vector<16x16xf32>
    %cst_189 = arith.constant 0.000000e+00 : f32
    %679 = vector.broadcast %cst_189 : f32 to vector<16x16xf32>
    %680 = arith.cmpf ogt, %678, %679 : vector<16x16xf32>
    %cst_190 = arith.constant 2.000000e-01 : f32
    %681 = vector.broadcast %cst_190 : f32 to vector<16x16xf32>
    %682 = arith.mulf %681, %678 : vector<16x16xf32>
    %683 = arith.select %680, %678, %682 : vector<16x16xi1>, vector<16x16xf32>
    %684 = vector.extract_strided_slice %210 {offsets = [2, 1], sizes = [16, 16], strides = [1, 1]} : vector<18x18xf32> to vector<16x16xf32>
    %685 = arith.subf %220, %684 : vector<16x16xf32>
    %cst_191 = arith.constant 0.000000e+00 : f32
    %686 = vector.broadcast %cst_191 : f32 to vector<16x16xf32>
    %687 = arith.cmpf ogt, %685, %686 : vector<16x16xf32>
    %cst_192 = arith.constant 2.000000e-01 : f32
    %688 = vector.broadcast %cst_192 : f32 to vector<16x16xf32>
    %689 = arith.mulf %688, %685 : vector<16x16xf32>
    %690 = arith.select %687, %685, %689 : vector<16x16xi1>, vector<16x16xf32>
    %691 = vector.extract_strided_slice %217 {offsets = [2, 1], sizes = [16, 16], strides = [1, 1]} : vector<18x18xf32> to vector<16x16xf32>
    %692 = arith.subf %221, %691 : vector<16x16xf32>
    %cst_193 = arith.constant 0.000000e+00 : f32
    %693 = vector.broadcast %cst_193 : f32 to vector<16x16xf32>
    %694 = arith.cmpf ogt, %692, %693 : vector<16x16xf32>
    %cst_194 = arith.constant 2.000000e-01 : f32
    %695 = vector.broadcast %cst_194 : f32 to vector<16x16xf32>
    %696 = arith.mulf %695, %692 : vector<16x16xf32>
    %697 = arith.select %694, %692, %696 : vector<16x16xi1>, vector<16x16xf32>
    %698 = vector.broadcast %46 : f32 to vector<16x16xf32>
    %699 = arith.mulf %698, %676 : vector<16x16xf32>
    %700 = vector.broadcast %47 : f32 to vector<16x16xf32>
    %701 = arith.mulf %700, %683 : vector<16x16xf32>
    %702 = arith.addf %699, %701 : vector<16x16xf32>
    %703 = vector.broadcast %48 : f32 to vector<16x16xf32>
    %704 = arith.mulf %703, %690 : vector<16x16xf32>
    %705 = arith.addf %702, %704 : vector<16x16xf32>
    %706 = vector.broadcast %49 : f32 to vector<16x16xf32>
    %707 = arith.mulf %706, %697 : vector<16x16xf32>
    %708 = arith.addf %705, %707 : vector<16x16xf32>
    %709 = vector.broadcast %50 : f32 to vector<16x16xf32>
    %710 = arith.mulf %709, %676 : vector<16x16xf32>
    %711 = vector.broadcast %51 : f32 to vector<16x16xf32>
    %712 = arith.mulf %711, %683 : vector<16x16xf32>
    %713 = arith.addf %710, %712 : vector<16x16xf32>
    %714 = vector.broadcast %52 : f32 to vector<16x16xf32>
    %715 = arith.mulf %714, %690 : vector<16x16xf32>
    %716 = arith.addf %713, %715 : vector<16x16xf32>
    %717 = vector.broadcast %53 : f32 to vector<16x16xf32>
    %718 = arith.mulf %717, %697 : vector<16x16xf32>
    %719 = arith.addf %716, %718 : vector<16x16xf32>
    %720 = vector.broadcast %54 : f32 to vector<16x16xf32>
    %721 = arith.mulf %720, %708 : vector<16x16xf32>
    %722 = vector.broadcast %55 : f32 to vector<16x16xf32>
    %723 = arith.mulf %722, %719 : vector<16x16xf32>
    %724 = arith.addf %721, %723 : vector<16x16xf32>
    %725 = vector.broadcast %58 : f32 to vector<16x16xf32>
    %726 = arith.addf %724, %725 : vector<16x16xf32>
    %727 = vector.broadcast %56 : f32 to vector<16x16xf32>
    %728 = arith.mulf %727, %708 : vector<16x16xf32>
    %729 = vector.broadcast %57 : f32 to vector<16x16xf32>
    %730 = arith.mulf %729, %719 : vector<16x16xf32>
    %731 = arith.addf %728, %730 : vector<16x16xf32>
    %732 = vector.broadcast %59 : f32 to vector<16x16xf32>
    %733 = arith.addf %731, %732 : vector<16x16xf32>
    %734 = vector.extract_strided_slice %106 {offsets = [2, 2], sizes = [16, 16], strides = [1, 1]} : vector<18x18xf32> to vector<16x16xf32>
    %735 = arith.subf %218, %734 : vector<16x16xf32>
    %cst_195 = arith.constant 0.000000e+00 : f32
    %736 = vector.broadcast %cst_195 : f32 to vector<16x16xf32>
    %737 = arith.cmpf ogt, %735, %736 : vector<16x16xf32>
    %cst_196 = arith.constant 2.000000e-01 : f32
    %738 = vector.broadcast %cst_196 : f32 to vector<16x16xf32>
    %739 = arith.mulf %738, %735 : vector<16x16xf32>
    %740 = arith.select %737, %735, %739 : vector<16x16xi1>, vector<16x16xf32>
    %741 = vector.extract_strided_slice %119 {offsets = [2, 2], sizes = [16, 16], strides = [1, 1]} : vector<18x18xf32> to vector<16x16xf32>
    %742 = arith.subf %219, %741 : vector<16x16xf32>
    %cst_197 = arith.constant 0.000000e+00 : f32
    %743 = vector.broadcast %cst_197 : f32 to vector<16x16xf32>
    %744 = arith.cmpf ogt, %742, %743 : vector<16x16xf32>
    %cst_198 = arith.constant 2.000000e-01 : f32
    %745 = vector.broadcast %cst_198 : f32 to vector<16x16xf32>
    %746 = arith.mulf %745, %742 : vector<16x16xf32>
    %747 = arith.select %744, %742, %746 : vector<16x16xi1>, vector<16x16xf32>
    %748 = vector.extract_strided_slice %210 {offsets = [2, 2], sizes = [16, 16], strides = [1, 1]} : vector<18x18xf32> to vector<16x16xf32>
    %749 = arith.subf %220, %748 : vector<16x16xf32>
    %cst_199 = arith.constant 0.000000e+00 : f32
    %750 = vector.broadcast %cst_199 : f32 to vector<16x16xf32>
    %751 = arith.cmpf ogt, %749, %750 : vector<16x16xf32>
    %cst_200 = arith.constant 2.000000e-01 : f32
    %752 = vector.broadcast %cst_200 : f32 to vector<16x16xf32>
    %753 = arith.mulf %752, %749 : vector<16x16xf32>
    %754 = arith.select %751, %749, %753 : vector<16x16xi1>, vector<16x16xf32>
    %755 = vector.extract_strided_slice %217 {offsets = [2, 2], sizes = [16, 16], strides = [1, 1]} : vector<18x18xf32> to vector<16x16xf32>
    %756 = arith.subf %221, %755 : vector<16x16xf32>
    %cst_201 = arith.constant 0.000000e+00 : f32
    %757 = vector.broadcast %cst_201 : f32 to vector<16x16xf32>
    %758 = arith.cmpf ogt, %756, %757 : vector<16x16xf32>
    %cst_202 = arith.constant 2.000000e-01 : f32
    %759 = vector.broadcast %cst_202 : f32 to vector<16x16xf32>
    %760 = arith.mulf %759, %756 : vector<16x16xf32>
    %761 = arith.select %758, %756, %760 : vector<16x16xi1>, vector<16x16xf32>
    %762 = vector.broadcast %46 : f32 to vector<16x16xf32>
    %763 = arith.mulf %762, %740 : vector<16x16xf32>
    %764 = vector.broadcast %47 : f32 to vector<16x16xf32>
    %765 = arith.mulf %764, %747 : vector<16x16xf32>
    %766 = arith.addf %763, %765 : vector<16x16xf32>
    %767 = vector.broadcast %48 : f32 to vector<16x16xf32>
    %768 = arith.mulf %767, %754 : vector<16x16xf32>
    %769 = arith.addf %766, %768 : vector<16x16xf32>
    %770 = vector.broadcast %49 : f32 to vector<16x16xf32>
    %771 = arith.mulf %770, %761 : vector<16x16xf32>
    %772 = arith.addf %769, %771 : vector<16x16xf32>
    %773 = vector.broadcast %50 : f32 to vector<16x16xf32>
    %774 = arith.mulf %773, %740 : vector<16x16xf32>
    %775 = vector.broadcast %51 : f32 to vector<16x16xf32>
    %776 = arith.mulf %775, %747 : vector<16x16xf32>
    %777 = arith.addf %774, %776 : vector<16x16xf32>
    %778 = vector.broadcast %52 : f32 to vector<16x16xf32>
    %779 = arith.mulf %778, %754 : vector<16x16xf32>
    %780 = arith.addf %777, %779 : vector<16x16xf32>
    %781 = vector.broadcast %53 : f32 to vector<16x16xf32>
    %782 = arith.mulf %781, %761 : vector<16x16xf32>
    %783 = arith.addf %780, %782 : vector<16x16xf32>
    %784 = vector.broadcast %54 : f32 to vector<16x16xf32>
    %785 = arith.mulf %784, %772 : vector<16x16xf32>
    %786 = vector.broadcast %55 : f32 to vector<16x16xf32>
    %787 = arith.mulf %786, %783 : vector<16x16xf32>
    %788 = arith.addf %785, %787 : vector<16x16xf32>
    %789 = vector.broadcast %58 : f32 to vector<16x16xf32>
    %790 = arith.addf %788, %789 : vector<16x16xf32>
    %791 = vector.broadcast %56 : f32 to vector<16x16xf32>
    %792 = arith.mulf %791, %772 : vector<16x16xf32>
    %793 = vector.broadcast %57 : f32 to vector<16x16xf32>
    %794 = arith.mulf %793, %783 : vector<16x16xf32>
    %795 = arith.addf %792, %794 : vector<16x16xf32>
    %796 = vector.broadcast %59 : f32 to vector<16x16xf32>
    %797 = arith.addf %795, %796 : vector<16x16xf32>
    %798 = arith.maximumf %278, %342 : vector<16x16xf32>
    %799 = arith.maximumf %798, %406 : vector<16x16xf32>
    %800 = arith.maximumf %799, %470 : vector<16x16xf32>
    %801 = arith.maximumf %800, %534 : vector<16x16xf32>
    %802 = arith.maximumf %801, %598 : vector<16x16xf32>
    %803 = arith.maximumf %802, %662 : vector<16x16xf32>
    %804 = arith.maximumf %803, %726 : vector<16x16xf32>
    %805 = arith.maximumf %804, %790 : vector<16x16xf32>
    %806 = arith.subf %278, %805 : vector<16x16xf32>
    %807 = math.exp %806 : vector<16x16xf32>
    %808 = arith.subf %342, %805 : vector<16x16xf32>
    %809 = math.exp %808 : vector<16x16xf32>
    %810 = arith.subf %406, %805 : vector<16x16xf32>
    %811 = math.exp %810 : vector<16x16xf32>
    %812 = arith.subf %470, %805 : vector<16x16xf32>
    %813 = math.exp %812 : vector<16x16xf32>
    %814 = arith.subf %534, %805 : vector<16x16xf32>
    %815 = math.exp %814 : vector<16x16xf32>
    %816 = arith.subf %598, %805 : vector<16x16xf32>
    %817 = math.exp %816 : vector<16x16xf32>
    %818 = arith.subf %662, %805 : vector<16x16xf32>
    %819 = math.exp %818 : vector<16x16xf32>
    %820 = arith.subf %726, %805 : vector<16x16xf32>
    %821 = math.exp %820 : vector<16x16xf32>
    %822 = arith.subf %790, %805 : vector<16x16xf32>
    %823 = math.exp %822 : vector<16x16xf32>
    %824 = arith.addf %807, %809 : vector<16x16xf32>
    %825 = arith.addf %824, %811 : vector<16x16xf32>
    %826 = arith.addf %825, %813 : vector<16x16xf32>
    %827 = arith.addf %826, %815 : vector<16x16xf32>
    %828 = arith.addf %827, %817 : vector<16x16xf32>
    %829 = arith.addf %828, %819 : vector<16x16xf32>
    %830 = arith.addf %829, %821 : vector<16x16xf32>
    %831 = arith.addf %830, %823 : vector<16x16xf32>
    %cst_203 = arith.constant 1.000000e+00 : f32
    %832 = vector.broadcast %cst_203 : f32 to vector<16x16xf32>
    %833 = arith.divf %832, %831 : vector<16x16xf32>
    %834 = arith.mulf %807, %833 : vector<16x16xf32>
    %835 = arith.mulf %809, %833 : vector<16x16xf32>
    %836 = arith.mulf %811, %833 : vector<16x16xf32>
    %837 = arith.mulf %813, %833 : vector<16x16xf32>
    %838 = arith.mulf %815, %833 : vector<16x16xf32>
    %839 = arith.mulf %817, %833 : vector<16x16xf32>
    %840 = arith.mulf %819, %833 : vector<16x16xf32>
    %841 = arith.mulf %821, %833 : vector<16x16xf32>
    %842 = arith.mulf %823, %833 : vector<16x16xf32>
    %843 = vector.extract_strided_slice %132 {offsets = [0, 0], sizes = [16, 16], strides = [1, 1]} : vector<18x18xf32> to vector<16x16xf32>
    %844 = arith.mulf %834, %843 : vector<16x16xf32>
    %845 = vector.extract_strided_slice %132 {offsets = [0, 1], sizes = [16, 16], strides = [1, 1]} : vector<18x18xf32> to vector<16x16xf32>
    %846 = arith.mulf %835, %845 : vector<16x16xf32>
    %847 = arith.addf %844, %846 : vector<16x16xf32>
    %848 = vector.extract_strided_slice %132 {offsets = [0, 2], sizes = [16, 16], strides = [1, 1]} : vector<18x18xf32> to vector<16x16xf32>
    %849 = arith.mulf %836, %848 : vector<16x16xf32>
    %850 = arith.addf %847, %849 : vector<16x16xf32>
    %851 = vector.extract_strided_slice %132 {offsets = [1, 0], sizes = [16, 16], strides = [1, 1]} : vector<18x18xf32> to vector<16x16xf32>
    %852 = arith.mulf %837, %851 : vector<16x16xf32>
    %853 = arith.addf %850, %852 : vector<16x16xf32>
    %854 = vector.extract_strided_slice %132 {offsets = [1, 1], sizes = [16, 16], strides = [1, 1]} : vector<18x18xf32> to vector<16x16xf32>
    %855 = arith.mulf %838, %854 : vector<16x16xf32>
    %856 = arith.addf %853, %855 : vector<16x16xf32>
    %857 = vector.extract_strided_slice %132 {offsets = [1, 2], sizes = [16, 16], strides = [1, 1]} : vector<18x18xf32> to vector<16x16xf32>
    %858 = arith.mulf %839, %857 : vector<16x16xf32>
    %859 = arith.addf %856, %858 : vector<16x16xf32>
    %860 = vector.extract_strided_slice %132 {offsets = [2, 0], sizes = [16, 16], strides = [1, 1]} : vector<18x18xf32> to vector<16x16xf32>
    %861 = arith.mulf %840, %860 : vector<16x16xf32>
    %862 = arith.addf %859, %861 : vector<16x16xf32>
    %863 = vector.extract_strided_slice %132 {offsets = [2, 1], sizes = [16, 16], strides = [1, 1]} : vector<18x18xf32> to vector<16x16xf32>
    %864 = arith.mulf %841, %863 : vector<16x16xf32>
    %865 = arith.addf %862, %864 : vector<16x16xf32>
    %866 = vector.extract_strided_slice %132 {offsets = [2, 2], sizes = [16, 16], strides = [1, 1]} : vector<18x18xf32> to vector<16x16xf32>
    %867 = arith.mulf %842, %866 : vector<16x16xf32>
    %868 = arith.addf %865, %867 : vector<16x16xf32>
    %c0_204 = arith.constant 0 : index
    %c0_205 = arith.constant 0 : index
    %c0_206 = arith.constant 0 : index
    %c0_207 = arith.constant 0 : index
    %869 = vector.load %arg13[%c0_204, %c0_205, %c0_206, %c0_207] : memref<1x4x16x16xf32, #tpu.memory_space<vmem>>, vector<1x1x16x16xf32>
    %870 = vector.shape_cast %869 : vector<1x1x16x16xf32> to vector<16x16xf32>
    %871 = vector.shape_cast %868 : vector<16x16xf32> to vector<1x1x16x16xf32>
    tpu.vector_store %arg13[%c0_204, %c0_205, %c0_206, %c0_207], %871 {strides = array<i32>} : memref<1x4x16x16xf32, #tpu.memory_space<vmem>>, vector<1x1x16x16xf32>,
    %872 = vector.extract_strided_slice %158 {offsets = [0, 0], sizes = [16, 16], strides = [1, 1]} : vector<18x18xf32> to vector<16x16xf32>
    %873 = arith.mulf %834, %872 : vector<16x16xf32>
    %874 = vector.extract_strided_slice %158 {offsets = [0, 1], sizes = [16, 16], strides = [1, 1]} : vector<18x18xf32> to vector<16x16xf32>
    %875 = arith.mulf %835, %874 : vector<16x16xf32>
    %876 = arith.addf %873, %875 : vector<16x16xf32>
    %877 = vector.extract_strided_slice %158 {offsets = [0, 2], sizes = [16, 16], strides = [1, 1]} : vector<18x18xf32> to vector<16x16xf32>
    %878 = arith.mulf %836, %877 : vector<16x16xf32>
    %879 = arith.addf %876, %878 : vector<16x16xf32>
    %880 = vector.extract_strided_slice %158 {offsets = [1, 0], sizes = [16, 16], strides = [1, 1]} : vector<18x18xf32> to vector<16x16xf32>
    %881 = arith.mulf %837, %880 : vector<16x16xf32>
    %882 = arith.addf %879, %881 : vector<16x16xf32>
    %883 = vector.extract_strided_slice %158 {offsets = [1, 1], sizes = [16, 16], strides = [1, 1]} : vector<18x18xf32> to vector<16x16xf32>
    %884 = arith.mulf %838, %883 : vector<16x16xf32>
    %885 = arith.addf %882, %884 : vector<16x16xf32>
    %886 = vector.extract_strided_slice %158 {offsets = [1, 2], sizes = [16, 16], strides = [1, 1]} : vector<18x18xf32> to vector<16x16xf32>
    %887 = arith.mulf %839, %886 : vector<16x16xf32>
    %888 = arith.addf %885, %887 : vector<16x16xf32>
    %889 = vector.extract_strided_slice %158 {offsets = [2, 0], sizes = [16, 16], strides = [1, 1]} : vector<18x18xf32> to vector<16x16xf32>
    %890 = arith.mulf %840, %889 : vector<16x16xf32>
    %891 = arith.addf %888, %890 : vector<16x16xf32>
    %892 = vector.extract_strided_slice %158 {offsets = [2, 1], sizes = [16, 16], strides = [1, 1]} : vector<18x18xf32> to vector<16x16xf32>
    %893 = arith.mulf %841, %892 : vector<16x16xf32>
    %894 = arith.addf %891, %893 : vector<16x16xf32>
    %895 = vector.extract_strided_slice %158 {offsets = [2, 2], sizes = [16, 16], strides = [1, 1]} : vector<18x18xf32> to vector<16x16xf32>
    %896 = arith.mulf %842, %895 : vector<16x16xf32>
    %897 = arith.addf %894, %896 : vector<16x16xf32>
    %c0_208 = arith.constant 0 : index
    %c2_209 = arith.constant 2 : index
    %c0_210 = arith.constant 0 : index
    %c0_211 = arith.constant 0 : index
    %898 = vector.load %arg13[%c0_208, %c2_209, %c0_210, %c0_211] : memref<1x4x16x16xf32, #tpu.memory_space<vmem>>, vector<1x1x16x16xf32>
    %899 = vector.shape_cast %898 : vector<1x1x16x16xf32> to vector<16x16xf32>
    %900 = vector.shape_cast %897 : vector<16x16xf32> to vector<1x1x16x16xf32>
    tpu.vector_store %arg13[%c0_208, %c2_209, %c0_210, %c0_211], %900 {strides = array<i32>} : memref<1x4x16x16xf32, #tpu.memory_space<vmem>>, vector<1x1x16x16xf32>,
    %901 = arith.maximumf %285, %349 : vector<16x16xf32>
    %902 = arith.maximumf %901, %413 : vector<16x16xf32>
    %903 = arith.maximumf %902, %477 : vector<16x16xf32>
    %904 = arith.maximumf %903, %541 : vector<16x16xf32>
    %905 = arith.maximumf %904, %605 : vector<16x16xf32>
    %906 = arith.maximumf %905, %669 : vector<16x16xf32>
    %907 = arith.maximumf %906, %733 : vector<16x16xf32>
    %908 = arith.maximumf %907, %797 : vector<16x16xf32>
    %909 = arith.subf %285, %908 : vector<16x16xf32>
    %910 = math.exp %909 : vector<16x16xf32>
    %911 = arith.subf %349, %908 : vector<16x16xf32>
    %912 = math.exp %911 : vector<16x16xf32>
    %913 = arith.subf %413, %908 : vector<16x16xf32>
    %914 = math.exp %913 : vector<16x16xf32>
    %915 = arith.subf %477, %908 : vector<16x16xf32>
    %916 = math.exp %915 : vector<16x16xf32>
    %917 = arith.subf %541, %908 : vector<16x16xf32>
    %918 = math.exp %917 : vector<16x16xf32>
    %919 = arith.subf %605, %908 : vector<16x16xf32>
    %920 = math.exp %919 : vector<16x16xf32>
    %921 = arith.subf %669, %908 : vector<16x16xf32>
    %922 = math.exp %921 : vector<16x16xf32>
    %923 = arith.subf %733, %908 : vector<16x16xf32>
    %924 = math.exp %923 : vector<16x16xf32>
    %925 = arith.subf %797, %908 : vector<16x16xf32>
    %926 = math.exp %925 : vector<16x16xf32>
    %927 = arith.addf %910, %912 : vector<16x16xf32>
    %928 = arith.addf %927, %914 : vector<16x16xf32>
    %929 = arith.addf %928, %916 : vector<16x16xf32>
    %930 = arith.addf %929, %918 : vector<16x16xf32>
    %931 = arith.addf %930, %920 : vector<16x16xf32>
    %932 = arith.addf %931, %922 : vector<16x16xf32>
    %933 = arith.addf %932, %924 : vector<16x16xf32>
    %934 = arith.addf %933, %926 : vector<16x16xf32>
    %cst_212 = arith.constant 1.000000e+00 : f32
    %935 = vector.broadcast %cst_212 : f32 to vector<16x16xf32>
    %936 = arith.divf %935, %934 : vector<16x16xf32>
    %937 = arith.mulf %910, %936 : vector<16x16xf32>
    %938 = arith.mulf %912, %936 : vector<16x16xf32>
    %939 = arith.mulf %914, %936 : vector<16x16xf32>
    %940 = arith.mulf %916, %936 : vector<16x16xf32>
    %941 = arith.mulf %918, %936 : vector<16x16xf32>
    %942 = arith.mulf %920, %936 : vector<16x16xf32>
    %943 = arith.mulf %922, %936 : vector<16x16xf32>
    %944 = arith.mulf %924, %936 : vector<16x16xf32>
    %945 = arith.mulf %926, %936 : vector<16x16xf32>
    %946 = vector.extract_strided_slice %145 {offsets = [0, 0], sizes = [16, 16], strides = [1, 1]} : vector<18x18xf32> to vector<16x16xf32>
    %947 = arith.mulf %937, %946 : vector<16x16xf32>
    %948 = vector.extract_strided_slice %145 {offsets = [0, 1], sizes = [16, 16], strides = [1, 1]} : vector<18x18xf32> to vector<16x16xf32>
    %949 = arith.mulf %938, %948 : vector<16x16xf32>
    %950 = arith.addf %947, %949 : vector<16x16xf32>
    %951 = vector.extract_strided_slice %145 {offsets = [0, 2], sizes = [16, 16], strides = [1, 1]} : vector<18x18xf32> to vector<16x16xf32>
    %952 = arith.mulf %939, %951 : vector<16x16xf32>
    %953 = arith.addf %950, %952 : vector<16x16xf32>
    %954 = vector.extract_strided_slice %145 {offsets = [1, 0], sizes = [16, 16], strides = [1, 1]} : vector<18x18xf32> to vector<16x16xf32>
    %955 = arith.mulf %940, %954 : vector<16x16xf32>
    %956 = arith.addf %953, %955 : vector<16x16xf32>
    %957 = vector.extract_strided_slice %145 {offsets = [1, 1], sizes = [16, 16], strides = [1, 1]} : vector<18x18xf32> to vector<16x16xf32>
    %958 = arith.mulf %941, %957 : vector<16x16xf32>
    %959 = arith.addf %956, %958 : vector<16x16xf32>
    %960 = vector.extract_strided_slice %145 {offsets = [1, 2], sizes = [16, 16], strides = [1, 1]} : vector<18x18xf32> to vector<16x16xf32>
    %961 = arith.mulf %942, %960 : vector<16x16xf32>
    %962 = arith.addf %959, %961 : vector<16x16xf32>
    %963 = vector.extract_strided_slice %145 {offsets = [2, 0], sizes = [16, 16], strides = [1, 1]} : vector<18x18xf32> to vector<16x16xf32>
    %964 = arith.mulf %943, %963 : vector<16x16xf32>
    %965 = arith.addf %962, %964 : vector<16x16xf32>
    %966 = vector.extract_strided_slice %145 {offsets = [2, 1], sizes = [16, 16], strides = [1, 1]} : vector<18x18xf32> to vector<16x16xf32>
    %967 = arith.mulf %944, %966 : vector<16x16xf32>
    %968 = arith.addf %965, %967 : vector<16x16xf32>
    %969 = vector.extract_strided_slice %145 {offsets = [2, 2], sizes = [16, 16], strides = [1, 1]} : vector<18x18xf32> to vector<16x16xf32>
    %970 = arith.mulf %945, %969 : vector<16x16xf32>
    %971 = arith.addf %968, %970 : vector<16x16xf32>
    %c0_213 = arith.constant 0 : index
    %c1_214 = arith.constant 1 : index
    %c0_215 = arith.constant 0 : index
    %c0_216 = arith.constant 0 : index
    %972 = vector.load %arg13[%c0_213, %c1_214, %c0_215, %c0_216] : memref<1x4x16x16xf32, #tpu.memory_space<vmem>>, vector<1x1x16x16xf32>
    %973 = vector.shape_cast %972 : vector<1x1x16x16xf32> to vector<16x16xf32>
    %974 = vector.shape_cast %971 : vector<16x16xf32> to vector<1x1x16x16xf32>
    tpu.vector_store %arg13[%c0_213, %c1_214, %c0_215, %c0_216], %974 {strides = array<i32>} : memref<1x4x16x16xf32, #tpu.memory_space<vmem>>, vector<1x1x16x16xf32>,
    %975 = vector.extract_strided_slice %171 {offsets = [0, 0], sizes = [16, 16], strides = [1, 1]} : vector<18x18xf32> to vector<16x16xf32>
    %976 = arith.mulf %937, %975 : vector<16x16xf32>
    %977 = vector.extract_strided_slice %171 {offsets = [0, 1], sizes = [16, 16], strides = [1, 1]} : vector<18x18xf32> to vector<16x16xf32>
    %978 = arith.mulf %938, %977 : vector<16x16xf32>
    %979 = arith.addf %976, %978 : vector<16x16xf32>
    %980 = vector.extract_strided_slice %171 {offsets = [0, 2], sizes = [16, 16], strides = [1, 1]} : vector<18x18xf32> to vector<16x16xf32>
    %981 = arith.mulf %939, %980 : vector<16x16xf32>
    %982 = arith.addf %979, %981 : vector<16x16xf32>
    %983 = vector.extract_strided_slice %171 {offsets = [1, 0], sizes = [16, 16], strides = [1, 1]} : vector<18x18xf32> to vector<16x16xf32>
    %984 = arith.mulf %940, %983 : vector<16x16xf32>
    %985 = arith.addf %982, %984 : vector<16x16xf32>
    %986 = vector.extract_strided_slice %171 {offsets = [1, 1], sizes = [16, 16], strides = [1, 1]} : vector<18x18xf32> to vector<16x16xf32>
    %987 = arith.mulf %941, %986 : vector<16x16xf32>
    %988 = arith.addf %985, %987 : vector<16x16xf32>
    %989 = vector.extract_strided_slice %171 {offsets = [1, 2], sizes = [16, 16], strides = [1, 1]} : vector<18x18xf32> to vector<16x16xf32>
    %990 = arith.mulf %942, %989 : vector<16x16xf32>
    %991 = arith.addf %988, %990 : vector<16x16xf32>
    %992 = vector.extract_strided_slice %171 {offsets = [2, 0], sizes = [16, 16], strides = [1, 1]} : vector<18x18xf32> to vector<16x16xf32>
    %993 = arith.mulf %943, %992 : vector<16x16xf32>
    %994 = arith.addf %991, %993 : vector<16x16xf32>
    %995 = vector.extract_strided_slice %171 {offsets = [2, 1], sizes = [16, 16], strides = [1, 1]} : vector<18x18xf32> to vector<16x16xf32>
    %996 = arith.mulf %944, %995 : vector<16x16xf32>
    %997 = arith.addf %994, %996 : vector<16x16xf32>
    %998 = vector.extract_strided_slice %171 {offsets = [2, 2], sizes = [16, 16], strides = [1, 1]} : vector<18x18xf32> to vector<16x16xf32>
    %999 = arith.mulf %945, %998 : vector<16x16xf32>
    %1000 = arith.addf %997, %999 : vector<16x16xf32>
    %c0_217 = arith.constant 0 : index
    %c3_218 = arith.constant 3 : index
    %c0_219 = arith.constant 0 : index
    %c0_220 = arith.constant 0 : index
    %1001 = vector.load %arg13[%c0_217, %c3_218, %c0_219, %c0_220] : memref<1x4x16x16xf32, #tpu.memory_space<vmem>>, vector<1x1x16x16xf32>
    %1002 = vector.shape_cast %1001 : vector<1x1x16x16xf32> to vector<16x16xf32>
    %1003 = vector.shape_cast %1000 : vector<16x16xf32> to vector<1x1x16x16xf32>
    tpu.vector_store %arg13[%c0_217, %c3_218, %c0_219, %c0_220], %1003 {strides = array<i32>} : memref<1x4x16x16xf32, #tpu.memory_space<vmem>>, vector<1x1x16x16xf32>,
    return
  }
  func.func @transform_0(%arg0: i32) -> (i32, i32, i32, i32) {
    %c0_i32 = arith.constant 0 : i32
    %c0_i32_0 = arith.constant 0 : i32
    %c0_i32_1 = arith.constant 0 : i32
    %c0_i32_2 = arith.constant 0 : i32
    return %arg0, %c0_i32, %c0_i32_0, %c0_i32_1 : i32, i32, i32, i32
  }
  func.func @transform_1(%arg0: i32) -> (i32, i32) {
    %c0_i32 = arith.constant 0 : i32
    %c0_i32_0 = arith.constant 0 : i32
    %c0_i32_1 = arith.constant 0 : i32
    return %c0_i32, %c0_i32_0 : i32, i32
  }
  func.func @transform_2(%arg0: i32) -> i32 {
    %c0_i32 = arith.constant 0 : i32
    %c0_i32_0 = arith.constant 0 : i32
    return %c0_i32 : i32
  }
  func.func @transform_3(%arg0: i32) -> (i32, i32) {
    %c0_i32 = arith.constant 0 : i32
    %c0_i32_0 = arith.constant 0 : i32
    %c0_i32_1 = arith.constant 0 : i32
    return %c0_i32, %c0_i32_0 : i32, i32
  }
  func.func @transform_4(%arg0: i32) -> i32 {
    %c0_i32 = arith.constant 0 : i32
    %c0_i32_0 = arith.constant 0 : i32
    return %c0_i32 : i32
  }
  func.func @transform_5(%arg0: i32) -> (i32, i32) {
    %c0_i32 = arith.constant 0 : i32
    %c0_i32_0 = arith.constant 0 : i32
    %c0_i32_1 = arith.constant 0 : i32
    return %c0_i32, %c0_i32_0 : i32, i32
  }
  func.func @transform_6(%arg0: i32) -> i32 {
    %c0_i32 = arith.constant 0 : i32
    %c0_i32_0 = arith.constant 0 : i32
    return %c0_i32 : i32
  }
  func.func @transform_7(%arg0: i32) -> (i32, i32) {
    %c0_i32 = arith.constant 0 : i32
    %c0_i32_0 = arith.constant 0 : i32
    %c0_i32_1 = arith.constant 0 : i32
    return %c0_i32, %c0_i32_0 : i32, i32
  }
  func.func @transform_8(%arg0: i32) -> i32 {
    %c0_i32 = arith.constant 0 : i32
    %c0_i32_0 = arith.constant 0 : i32
    return %c0_i32 : i32
  }
  func.func @transform_9(%arg0: i32) -> (i32, i32) {
    %c0_i32 = arith.constant 0 : i32
    %c0_i32_0 = arith.constant 0 : i32
    %c0_i32_1 = arith.constant 0 : i32
    return %c0_i32, %c0_i32_0 : i32, i32
  }
  func.func @transform_10(%arg0: i32) -> (i32, i32) {
    %c0_i32 = arith.constant 0 : i32
    %c0_i32_0 = arith.constant 0 : i32
    %c0_i32_1 = arith.constant 0 : i32
    return %c0_i32, %c0_i32_0 : i32, i32
  }
  func.func @transform_11(%arg0: i32) -> i32 {
    %c0_i32 = arith.constant 0 : i32
    %c0_i32_0 = arith.constant 0 : i32
    return %c0_i32 : i32
  }
  func.func @transform_12(%arg0: i32) -> (i32, i32, i32, i32) {
    %c0_i32 = arith.constant 0 : i32
    %c0_i32_0 = arith.constant 0 : i32
    %c0_i32_1 = arith.constant 0 : i32
    %c0_i32_2 = arith.constant 0 : i32
    return %arg0, %c0_i32, %c0_i32_0, %c0_i32_1 : i32, i32, i32, i32
  }
}

</mosaic_0001>

<llo_original>
// kernel: _lambda_.1
$region0: #{_lambda_.1}
  #allocation0 [shape = 'u32[]', space=smem, size = 0x4, offset = 0x4, fixed_abs, tag = 'smem constant byte address 0x4 - core index']
  #allocation1 [shape = 'u32[144,128]{1,0:T(1,128)}', space=vmem, size = 0x12000, scoped, tag = 'internal scratch']
  %s0 = inlined_call_operand.vmem [shape: f32[2,4,18,18], index: 0, kind: input, shape index: {}]
  %s1 = inlined_call_operand.vmem [shape: f32[2,4], index: 1, kind: input, shape index: {}]
  %s2 = inlined_call_operand.vmem [shape: f32[2], index: 2, kind: input, shape index: {}]
  %s3 = inlined_call_operand.vmem [shape: f32[2,4], index: 3, kind: input, shape index: {}]
  %s4 = inlined_call_operand.vmem [shape: f32[2], index: 4, kind: input, shape index: {}]
  %s5 = inlined_call_operand.vmem [shape: f32[4,4], index: 5, kind: input, shape index: {}]
  %s6 = inlined_call_operand.vmem [shape: f32[4], index: 6, kind: input, shape index: {}]
  %s7 = inlined_call_operand.vmem [shape: f32[2,2], index: 7, kind: input, shape index: {}]
  %s8 = inlined_call_operand.vmem [shape: f32[2], index: 8, kind: input, shape index: {}]
  %s9 = inlined_call_operand.vmem [shape: f32[2,4], index: 9, kind: input, shape index: {}]
  %s10 = inlined_call_operand.vmem [shape: f32[2,2], index: 10, kind: input, shape index: {}]
  %s11 = inlined_call_operand.vmem [shape: f32[2], index: 11, kind: input, shape index: {}]
  %s12 = inlined_call_operand.hbm [shape: f32[2,4,16,16], index: 12, kind: output, shape index: {}]
  %s13 = sld [smem:[#allocation0]]
  $region125: #{_lambda_.1} parent=0
    _
  %s15 = ssub.s32 1, %s13
  %s16 = scalar_select 0, %s15, %s13
  $region1: #{_lambda_.1} parent=0
    #allocation2 [shape = 'u8[1024]{0}', space=smem, size = 0x400, scoped, tag = 'input window, operand 1, single buffered']
    #allocation3 [shape = 's32[2]{0}', space=sflag, size = 0x8, scoped, tag = 'scoped memory for _lambda_.1']
    #allocation4 [shape = 's32[2]{0}', space=sflag, size = 0x8, scoped, tag = 'scoped memory for _lambda_.1']
    #allocation5 [shape = 'u8[512]{0}', space=smem, size = 0x200, scoped, tag = 'input window, operand 2, single buffered']
    #allocation6 [shape = 's32[1]{0}', space=sflag, size = 0x4, scoped, tag = 'scoped memory for _lambda_.1']
    #allocation7 [shape = 'u8[1024]{0}', space=smem, size = 0x400, scoped, tag = 'input window, operand 3, single buffered']
    #allocation8 [shape = 'u8[512]{0}', space=smem, size = 0x200, scoped, tag = 'input window, operand 4, single buffered']
    #allocation9 [shape = 's32[1]{0}', space=sflag, size = 0x4, scoped, tag = 'scoped memory for _lambda_.1']
    #allocation10 [shape = 'u8[2048]{0}', space=smem, size = 0x800, scoped, tag = 'input window, operand 5, single buffered']
    #allocation11 [shape = 'u8[512]{0}', space=smem, size = 0x200, scoped, tag = 'input window, operand 6, single buffered']
    #allocation12 [shape = 's32[1]{0}', space=sflag, size = 0x4, scoped, tag = 'scoped memory for _lambda_.1']
    #allocation13 [shape = 'u8[1024]{0}', space=smem, size = 0x400, scoped, tag = 'input window, operand 7, single buffered']
    #allocation14 [shape = 'u8[512]{0}', space=smem, size = 0x200, scoped, tag = 'input window, operand 8, single buffered']
    #allocation15 [shape = 's32[1]{0}', space=sflag, size = 0x4, scoped, tag = 'scoped memory for _lambda_.1']
    #allocation16 [shape = 'u8[1024]{0}', space=smem, size = 0x400, scoped, tag = 'input window, operand 9, single buffered']
    #allocation17 [shape = 'u8[1024]{0}', space=smem, size = 0x400, scoped, tag = 'input window, operand 10, single buffered']
    #allocation18 [shape = 's32[1]{0}', space=sflag, size = 0x4, scoped, tag = 'scoped memory for _lambda_.1']
    #allocation19 [shape = 'u8[512]{0}', space=smem, size = 0x200, scoped, tag = 'input window, operand 11, single buffered']
    #allocation20 [shape = 'u8[65536]{0}', space=vmem, size = 0x10000, scoped, tag = 'output window, operand 0']
    %17 = vsyncpa [#allocation4], 0
    %18 = vsyncpa [#allocation6], 0
    %19 = vsyncpa [#allocation9], 0
    %20 = vsyncpa [#allocation12], 0
    %21 = vsyncpa [#allocation15], 0
    %22 = vsyncpa [#allocation18], 0
    %23 = vsyncpa [#allocation3], 0
    %s24 = scalar_lea.sflag [#allocation3], 1
    %25 = vsyncpa %s24, 0
    loop: start=0, step=1, limit=4
    $region2: #{_lambda_.1} parent=1 // loop_pre_header
      _
    $region3: #{_lambda_.1} parent=1 // loop_header
      %s27 = sphi 0, %s31
      %p28 = scmp.ge.s32.totalorder %s27, 4
      %s37 = sphi 0, %s39
      %s40 = sphi 0, %s37
      %s41 = sphi 0, %s40
      %s57 = sphi 0, %s41
      %s61 = sphi 0, %s61
      %s63 = sphi 0, %s61
      %s64 = sphi 0, %s63
      %s78 = sphi 0, %s64
      %s82 = sphi 0, %s82
      %s84 = sphi 0, %s82
      %s85 = sphi 0, %s84
      %s99 = sphi 0, %s85
      %s103 = sphi 0, %s103
      %s105 = sphi 0, %s103
      %s106 = sphi 0, %s105
      %s120 = sphi 0, %s106
      %s124 = sphi 0, %s124
      %s126 = sphi 0, %s124
      %s127 = sphi 0, %s126
      %s141 = sphi 0, %s127
      %s145 = sphi 0, %s145
      %s147 = sphi 0, %s145
      %s148 = sphi 0, %s147
      %s162 = sphi 0, %s148
      %s166 = sphi 0, %s166
      %s168 = sphi 0, %s166
      %s169 = sphi 0, %s168
      %s183 = sphi 0, %s169
      %s187 = sphi 0, %s187
      %s189 = sphi 0, %s187
      %s190 = sphi 0, %s189
      %s204 = sphi 0, %s190
      %s208 = sphi 0, %s208
      %s210 = sphi 0, %s208
      %s211 = sphi 0, %s210
      %s225 = sphi 0, %s211
      %s229 = sphi 0, %s229
      %s231 = sphi 0, %s229
      %s232 = sphi 0, %s231
      %s246 = sphi 0, %s232
      %s250 = sphi 0, %s250
      %s252 = sphi 0, %s250
      %s253 = sphi 0, %s252
      %s267 = sphi 0, %s253
      %s271 = sphi 0, %s271
      %s273 = sphi 0, %s271
      %s274 = sphi 0, %s273
      %s288 = sphi 0, %s274
      %s294 = sphi 0, %s296
      %s297 = sphi 0, %s294
      %s298 = sphi 0, %s297
      %s314 = sphi 0, %s298
    $region4: #{_lambda_.1} parent=1 // loop_header_branch
      %30 = sbr.rel (%p28) target = $region8
    $region5: #{_lambda_.1} parent=1 // loop_body
      %s32 = ssub.s32 %s27, 1
      %s33 = ssub.s32 %s27, 2
      %s34 = sadd.s32 %s27, 1
      %s35 = ssub.s32 %s27, %s34
      %p36 = scmp.eq.s32.totalorder %s35, 0
      %s38 = sadd.s32 %s37, 1
      %s39 = scalar_select %p36, %s37, %s38
      %p42 = pneg %p36
      %p43 = scmp.eq.s32.totalorder %s27, 1
      %p44 = por %p42, %p43
      %p45 = scmp.ne.s32.totalorder %s37, %s40
      %p46 = scmp.eq.s32.totalorder %s27, 0
      %p47 = por %p45, %p46
      %p48 = scmp.ne.s32.totalorder %s37, %s40
      %p49 = scmp.eq.s32.totalorder %s32, 1
      %p50 = por %p48, %p49
      %p51 = scmp.ne.s32.totalorder %s40, %s41
      %p52 = scmp.eq.s32.totalorder %s32, 0
      %p53 = por %p51, %p52
      %p54 = scmp.ne.s32.totalorder %s40, %s41
      %p55 = scmp.eq.s32.totalorder %s33, 1
      %p56 = por %p54, %p55
      %p58 = scmp.ne.s32.totalorder %s41, %s57
      %p59 = scmp.eq.s32.totalorder %s33, 0
      %p60 = por %p58, %p59
      %s62 = sadd.s32 %s61, 1
      %p65 = scmp.eq.s32.totalorder %s27, 1
      %p66 = scmp.ne.s32.totalorder %s61, %s63
      %p67 = scmp.eq.s32.totalorder %s27, 0
      %p68 = por %p66, %p67
      %p69 = scmp.ne.s32.totalorder %s61, %s63
      %p70 = scmp.eq.s32.totalorder %s32, 1
      %p71 = por %p69, %p70
      %p72 = scmp.ne.s32.totalorder %s63, %s64
      %p73 = scmp.eq.s32.totalorder %s32, 0
      %p74 = por %p72, %p73
      %p75 = scmp.ne.s32.totalorder %s63, %s64
      %p76 = scmp.eq.s32.totalorder %s33, 1
      %p77 = por %p75, %p76
      %p79 = scmp.ne.s32.totalorder %s64, %s78
      %p80 = scmp.eq.s32.totalorder %s33, 0
      %p81 = por %p79, %p80
      %s83 = sadd.s32 %s82, 1
      %p86 = scmp.eq.s32.totalorder %s27, 1
      %p87 = scmp.ne.s32.totalorder %s82, %s84
      %p88 = scmp.eq.s32.totalorder %s27, 0
      %p89 = por %p87, %p88
      %p90 = scmp.ne.s32.totalorder %s82, %s84
      %p91 = scmp.eq.s32.totalorder %s32, 1
      %p92 = por %p90, %p91
      %p93 = scmp.ne.s32.totalorder %s84, %s85
      %p94 = scmp.eq.s32.totalorder %s32, 0
      %p95 = por %p93, %p94
      %p96 = scmp.ne.s32.totalorder %s84, %s85
      %p97 = scmp.eq.s32.totalorder %s33, 1
      %p98 = por %p96, %p97
      %p100 = scmp.ne.s32.totalorder %s85, %s99
      %p101 = scmp.eq.s32.totalorder %s33, 0
      %p102 = por %p100, %p101
      %s104 = sadd.s32 %s103, 1
      %p107 = scmp.eq.s32.totalorder %s27, 1
      %p108 = scmp.ne.s32.totalorder %s103, %s105
      %p109 = scmp.eq.s32.totalorder %s27, 0
      %p110 = por %p108, %p109
      %p111 = scmp.ne.s32.totalorder %s103, %s105
      %p112 = scmp.eq.s32.totalorder %s32, 1
      %p113 = por %p111, %p112
      %p114 = scmp.ne.s32.totalorder %s105, %s106
      %p115 = scmp.eq.s32.totalorder %s32, 0
      %p116 = por %p114, %p115
      %p117 = scmp.ne.s32.totalorder %s105, %s106
      %p118 = scmp.eq.s32.totalorder %s33, 1
      %p119 = por %p117, %p118
      %p121 = scmp.ne.s32.totalorder %s106, %s120
      %p122 = scmp.eq.s32.totalorder %s33, 0
      %p123 = por %p121, %p122
      %s125 = sadd.s32 %s124, 1
      %p128 = scmp.eq.s32.totalorder %s27, 1
      %p129 = scmp.ne.s32.totalorder %s124, %s126
      %p130 = scmp.eq.s32.totalorder %s27, 0
      %p131 = por %p129, %p130
      %p132 = scmp.ne.s32.totalorder %s124, %s126
      %p133 = scmp.eq.s32.totalorder %s32, 1
      %p134 = por %p132, %p133
      %p135 = scmp.ne.s32.totalorder %s126, %s127
      %p136 = scmp.eq.s32.totalorder %s32, 0
      %p137 = por %p135, %p136
      %p138 = scmp.ne.s32.totalorder %s126, %s127
      %p139 = scmp.eq.s32.totalorder %s33, 1
      %p140 = por %p138, %p139
      %p142 = scmp.ne.s32.totalorder %s127, %s141
      %p143 = scmp.eq.s32.totalorder %s33, 0
      %p144 = por %p142, %p143
      %s146 = sadd.s32 %s145, 1
      %p149 = scmp.eq.s32.totalorder %s27, 1
      %p150 = scmp.ne.s32.totalorder %s145, %s147
      %p151 = scmp.eq.s32.totalorder %s27, 0
      %p152 = por %p150, %p151
      %p153 = scmp.ne.s32.totalorder %s145, %s147
      %p154 = scmp.eq.s32.totalorder %s32, 1
      %p155 = por %p153, %p154
      %p156 = scmp.ne.s32.totalorder %s147, %s148
      %p157 = scmp.eq.s32.totalorder %s32, 0
      %p158 = por %p156, %p157
      %p159 = scmp.ne.s32.totalorder %s147, %s148
      %p160 = scmp.eq.s32.totalorder %s33, 1
      %p161 = por %p159, %p160
      %p163 = scmp.ne.s32.totalorder %s148, %s162
      %p164 = scmp.eq.s32.totalorder %s33, 0
      %p165 = por %p163, %p164
      %s167 = sadd.s32 %s166, 1
      %p170 = scmp.eq.s32.totalorder %s27, 1
      %p171 = scmp.ne.s32.totalorder %s166, %s168
      %p172 = scmp.eq.s32.totalorder %s27, 0
      %p173 = por %p171, %p172
      %p174 = scmp.ne.s32.totalorder %s166, %s168
      %p175 = scmp.eq.s32.totalorder %s32, 1
      %p176 = por %p174, %p175
      %p177 = scmp.ne.s32.totalorder %s168, %s169
      %p178 = scmp.eq.s32.totalorder %s32, 0
      %p179 = por %p177, %p178
      %p180 = scmp.ne.s32.totalorder %s168, %s169
      %p181 = scmp.eq.s32.totalorder %s33, 1
      %p182 = por %p180, %p181
      %p184 = scmp.ne.s32.totalorder %s169, %s183
      %p185 = scmp.eq.s32.totalorder %s33, 0
      %p186 = por %p184, %p185
      %s188 = sadd.s32 %s187, 1
      %p191 = scmp.eq.s32.totalorder %s27, 1
      %p192 = scmp.ne.s32.totalorder %s187, %s189
      %p193 = scmp.eq.s32.totalorder %s27, 0
      %p194 = por %p192, %p193
      %p195 = scmp.ne.s32.totalorder %s187, %s189
      %p196 = scmp.eq.s32.totalorder %s32, 1
      %p197 = por %p195, %p196
      %p198 = scmp.ne.s32.totalorder %s189, %s190
      %p199 = scmp.eq.s32.totalorder %s32, 0
      %p200 = por %p198, %p199
      %p201 = scmp.ne.s32.totalorder %s189, %s190
      %p202 = scmp.eq.s32.totalorder %s33, 1
      %p203 = por %p201, %p202
      %p205 = scmp.ne.s32.totalorder %s190, %s204
      %p206 = scmp.eq.s32.totalorder %s33, 0
      %p207 = por %p205, %p206
      %s209 = sadd.s32 %s208, 1
      %p212 = scmp.eq.s32.totalorder %s27, 1
      %p213 = scmp.ne.s32.totalorder %s208, %s210
      %p214 = scmp.eq.s32.totalorder %s27, 0
      %p215 = por %p213, %p214
      %p216 = scmp.ne.s32.totalorder %s208, %s210
      %p217 = scmp.eq.s32.totalorder %s32, 1
      %p218 = por %p216, %p217
      %p219 = scmp.ne.s32.totalorder %s210, %s211
      %p220 = scmp.eq.s32.totalorder %s32, 0
      %p221 = por %p219, %p220
      %p222 = scmp.ne.s32.totalorder %s210, %s211
      %p223 = scmp.eq.s32.totalorder %s33, 1
      %p224 = por %p222, %p223
      %p226 = scmp.ne.s32.totalorder %s211, %s225
      %p227 = scmp.eq.s32.totalorder %s33, 0
      %p228 = por %p226, %p227
      %s230 = sadd.s32 %s229, 1
      %p233 = scmp.eq.s32.totalorder %s27, 1
      %p234 = scmp.ne.s32.totalorder %s229, %s231
      %p235 = scmp.eq.s32.totalorder %s27, 0
      %p236 = por %p234, %p235
      %p237 = scmp.ne.s32.totalorder %s229, %s231
      %p238 = scmp.eq.s32.totalorder %s32, 1
      %p239 = por %p237, %p238
      %p240 = scmp.ne.s32.totalorder %s231, %s232
      %p241 = scmp.eq.s32.totalorder %s32, 0
      %p242 = por %p240, %p241
      %p243 = scmp.ne.s32.totalorder %s231, %s232
      %p244 = scmp.eq.s32.totalorder %s33, 1
      %p245 = por %p243, %p244
      %p247 = scmp.ne.s32.totalorder %s232, %s246
      %p248 = scmp.eq.s32.totalorder %s33, 0
      %p249 = por %p247, %p248
      %s251 = sadd.s32 %s250, 1
      %p254 = scmp.eq.s32.totalorder %s27, 1
      %p255 = scmp.ne.s32.totalorder %s250, %s252
      %p256 = scmp.eq.s32.totalorder %s27, 0
      %p257 = por %p255, %p256
      %p258 = scmp.ne.s32.totalorder %s250, %s252
      %p259 = scmp.eq.s32.totalorder %s32, 1
      %p260 = por %p258, %p259
      %p261 = scmp.ne.s32.totalorder %s252, %s253
      %p262 = scmp.eq.s32.totalorder %s32, 0
      %p263 = por %p261, %p262
      %p264 = scmp.ne.s32.totalorder %s252, %s253
      %p265 = scmp.eq.s32.totalorder %s33, 1
      %p266 = por %p264, %p265
      %p268 = scmp.ne.s32.totalorder %s253, %s267
      %p269 = scmp.eq.s32.totalorder %s33, 0
      %p270 = por %p268, %p269
      %s272 = sadd.s32 %s271, 1
      %p275 = scmp.eq.s32.totalorder %s27, 1
      %p276 = scmp.ne.s32.totalorder %s271, %s273
      %p277 = scmp.eq.s32.totalorder %s27, 0
      %p278 = por %p276, %p277
      %p279 = scmp.ne.s32.totalorder %s271, %s273
      %p280 = scmp.eq.s32.totalorder %s32, 1
      %p281 = por %p279, %p280
      %p282 = scmp.ne.s32.totalorder %s273, %s274
      %p283 = scmp.eq.s32.totalorder %s32, 0
      %p284 = por %p282, %p283
      %p285 = scmp.ne.s32.totalorder %s273, %s274
      %p286 = scmp.eq.s32.totalorder %s33, 1
      %p287 = por %p285, %p286
      %p289 = scmp.ne.s32.totalorder %s274, %s288
      %p290 = scmp.eq.s32.totalorder %s33, 0
      %p291 = por %p289, %p290
      %s292 = ssub.s32 %s27, %s34
      %p293 = scmp.eq.s32.totalorder %s292, 0
      %s295 = sadd.s32 %s294, 1
      %s296 = scalar_select %p293, %s294, %s295
      %p299 = pneg %p293
      %p300 = scmp.eq.s32.totalorder %s27, 1
      %p301 = por %p299, %p300
      %p302 = scmp.ne.s32.totalorder %s294, %s297
      %p303 = scmp.eq.s32.totalorder %s27, 0
      %p304 = por %p302, %p303
      %p305 = scmp.ne.s32.totalorder %s294, %s297
      %p306 = scmp.eq.s32.totalorder %s32, 1
      %p307 = por %p305, %p306
      %p308 = scmp.ne.s32.totalorder %s297, %s298
      %p309 = scmp.eq.s32.totalorder %s32, 0
      %p310 = por %p308, %p309
      %p311 = scmp.ne.s32.totalorder %s297, %s298
      %p312 = scmp.eq.s32.totalorder %s33, 1
      %p313 = por %p311, %p312
      %p315 = scmp.ne.s32.totalorder %s298, %s314
      %p316 = scmp.eq.s32.totalorder %s33, 0
      %p317 = por %p315, %p316
      %p318 = scmp.le.s32.totalorder 1, %s27
      %p319 = scmp.lt.s32.totalorder %s27, 3
      %p320 = pnand %p318, %p319
      %p321 = pneg %p320
      // Predicated region
      $region9: #{_lambda_.1} parent=5 // pred_check
        _
      $region10: #{_lambda_.1} parent=5 // pred_check_branch
        %323 = sbr.rel (%p320) target = $region12
      $region11: #{_lambda_.1} parent=5 // pred_region
        %s324 = ssub.s32 %s27, 1
        // Predicated region
        $region13: #{_lambda_.1} parent=11 // pred_check
          %p325 = pneg %p74
        $region14: #{_lambda_.1} parent=11 // pred_check_branch
          %327 = sbr.rel (%p325) target = $region16
        $region15: #{_lambda_.1} parent=11 // pred_region
          %s329 = ssub.s32 32, 32
          %330 = vsyncadd [#allocation4], %s329
          %s332 = sshll.u32 %s1, 4
          %s333 = int_to_ptr.vmem [resolvable:$true] %s332
          %335 = dma.vmem_to_smem %s333, 32, [#allocation2], [#allocation4]
        $region16: #{_lambda_.1} parent=11 // pred_fallthru
          _
        // Predicated region
        $region17: #{_lambda_.1} parent=11 // pred_check
          %p336 = pneg %p95
        $region18: #{_lambda_.1} parent=11 // pred_check_branch
          %338 = sbr.rel (%p336) target = $region20
        $region19: #{_lambda_.1} parent=11 // pred_region
          %s340 = ssub.s32 16, 16
          %341 = vsyncadd [#allocation6], %s340
          %s343 = sshll.u32 %s2, 4
          %s344 = int_to_ptr.vmem [resolvable:$true] %s343
          %346 = dma.vmem_to_smem %s344, 16, [#allocation5], [#allocation6]
        $region20: #{_lambda_.1} parent=11 // pred_fallthru
          _
        // Predicated region
        $region21: #{_lambda_.1} parent=11 // pred_check
          %p347 = pneg %p116
        $region22: #{_lambda_.1} parent=11 // pred_check_branch
          %349 = sbr.rel (%p347) target = $region24
        $region23: #{_lambda_.1} parent=11 // pred_region
          %s351 = ssub.s32 32, 32
          %352 = vsyncadd [#allocation6], %s351
          %s354 = sshll.u32 %s3, 4
          %s355 = int_to_ptr.vmem [resolvable:$true] %s354
          %357 = dma.vmem_to_smem %s355, 32, [#allocation7], [#allocation6]
        $region24: #{_lambda_.1} parent=11 // pred_fallthru
          _
        // Predicated region
        $region25: #{_lambda_.1} parent=11 // pred_check
          %p358 = pneg %p137
        $region26: #{_lambda_.1} parent=11 // pred_check_branch
          %360 = sbr.rel (%p358) target = $region28
        $region27: #{_lambda_.1} parent=11 // pred_region
          %s362 = ssub.s32 16, 16
          %363 = vsyncadd [#allocation9], %s362
          %s365 = sshll.u32 %s4, 4
          %s366 = int_to_ptr.vmem [resolvable:$true] %s365
          %368 = dma.vmem_to_smem %s366, 16, [#allocation8], [#allocation9]
        $region28: #{_lambda_.1} parent=11 // pred_fallthru
          _
        // Predicated region
        $region29: #{_lambda_.1} parent=11 // pred_check
          %p369 = pneg %p158
        $region30: #{_lambda_.1} parent=11 // pred_check_branch
          %371 = sbr.rel (%p369) target = $region32
        $region31: #{_lambda_.1} parent=11 // pred_region
          %s373 = ssub.s32 64, 64
          %374 = vsyncadd [#allocation9], %s373
          %s376 = sshll.u32 %s5, 4
          %s377 = int_to_ptr.vmem [resolvable:$true] %s376
          %379 = dma.vmem_to_smem %s377, 64, [#allocation10], [#allocation9]
        $region32: #{_lambda_.1} parent=11 // pred_fallthru
          _
        // Predicated region
        $region33: #{_lambda_.1} parent=11 // pred_check
          %p380 = pneg %p179
        $region34: #{_lambda_.1} parent=11 // pred_check_branch
          %382 = sbr.rel (%p380) target = $region36
        $region35: #{_lambda_.1} parent=11 // pred_region
          %s384 = ssub.s32 16, 16
          %385 = vsyncadd [#allocation12], %s384
          %s387 = sshll.u32 %s6, 4
          %s388 = int_to_ptr.vmem [resolvable:$true] %s387
          %390 = dma.vmem_to_smem %s388, 16, [#allocation11], [#allocation12]
        $region36: #{_lambda_.1} parent=11 // pred_fallthru
          _
        // Predicated region
        $region37: #{_lambda_.1} parent=11 // pred_check
          %p391 = pneg %p200
        $region38: #{_lambda_.1} parent=11 // pred_check_branch
          %393 = sbr.rel (%p391) target = $region40
        $region39: #{_lambda_.1} parent=11 // pred_region
          %s395 = ssub.s32 32, 32
          %396 = vsyncadd [#allocation12], %s395
          %s398 = sshll.u32 %s7, 4
          %s399 = int_to_ptr.vmem [resolvable:$true] %s398
          %401 = dma.vmem_to_smem %s399, 32, [#allocation13], [#allocation12]
        $region40: #{_lambda_.1} parent=11 // pred_fallthru
          _
        // Predicated region
        $region41: #{_lambda_.1} parent=11 // pred_check
          %p402 = pneg %p221
        $region42: #{_lambda_.1} parent=11 // pred_check_branch
          %404 = sbr.rel (%p402) target = $region44
        $region43: #{_lambda_.1} parent=11 // pred_region
          %s406 = ssub.s32 16, 16
          %407 = vsyncadd [#allocation15], %s406
          %s409 = sshll.u32 %s8, 4
          %s410 = int_to_ptr.vmem [resolvable:$true] %s409
          %412 = dma.vmem_to_smem %s410, 16, [#allocation14], [#allocation15]
        $region44: #{_lambda_.1} parent=11 // pred_fallthru
          _
        // Predicated region
        $region45: #{_lambda_.1} parent=11 // pred_check
          %p413 = pneg %p242
        $region46: #{_lambda_.1} parent=11 // pred_check_branch
          %415 = sbr.rel (%p413) target = $region48
        $region47: #{_lambda_.1} parent=11 // pred_region
          %s417 = ssub.s32 32, 32
          %418 = vsyncadd [#allocation15], %s417
          %s420 = sshll.u32 %s9, 4
          %s421 = int_to_ptr.vmem [resolvable:$true] %s420
          %423 = dma.vmem_to_smem %s421, 32, [#allocation16], [#allocation15]
        $region48: #{_lambda_.1} parent=11 // pred_fallthru
          _
        // Predicated region
        $region49: #{_lambda_.1} parent=11 // pred_check
          %p424 = pneg %p263
        $region50: #{_lambda_.1} parent=11 // pred_check_branch
          %426 = sbr.rel (%p424) target = $region52
        $region51: #{_lambda_.1} parent=11 // pred_region
          %s428 = ssub.s32 32, 32
          %429 = vsyncadd [#allocation18], %s428
          %s431 = sshll.u32 %s10, 4
          %s432 = int_to_ptr.vmem [resolvable:$true] %s431
          %434 = dma.vmem_to_smem %s432, 32, [#allocation17], [#allocation18]
        $region52: #{_lambda_.1} parent=11 // pred_fallthru
          _
        // Predicated region
        $region53: #{_lambda_.1} parent=11 // pred_check
          %p435 = pneg %p284
        $region54: #{_lambda_.1} parent=11 // pred_check_branch
          %437 = sbr.rel (%p435) target = $region56
        $region55: #{_lambda_.1} parent=11 // pred_region
          %s439 = ssub.s32 16, 16
          %440 = vsyncadd [#allocation18], %s439
          %s442 = sshll.u32 %s11, 4
          %s443 = int_to_ptr.vmem [resolvable:$true] %s442
          %445 = dma.vmem_to_smem %s443, 16, [#allocation19], [#allocation18]
        $region56: #{_lambda_.1} parent=11 // pred_fallthru
          _
      $region12: #{_lambda_.1} parent=5 // pred_fallthru
        _
      %p446 = scmp.lt.s32.totalorder %s27, 2
      // Predicated region
      $region57: #{_lambda_.1} parent=5 // pred_check
        %p447 = pneg %p446
      $region58: #{_lambda_.1} parent=5 // pred_check_branch
        %449 = sbr.rel (%p447) target = $region60
      $region59: #{_lambda_.1} parent=5 // pred_region
        // Predicated region
        $region61: #{_lambda_.1} parent=59 // pred_check
          %p450 = pneg %p47
        $region62: #{_lambda_.1} parent=59 // pred_check_branch
          %452 = sbr.rel (%p450) target = $region64
        $region63: #{_lambda_.1} parent=59 // pred_region
          %p453 = scmp.lt.s32.totalorder %s27, 1
          %s454 = scalar_select %p453, %s27, 1
          %s455 = smul.addr %s454, 12
          %s456 = smul.addr %s455, 8
          %s457 = scalar_lea.vmem %s0, %s456
        $region64: #{_lambda_.1} parent=59 // pred_fallthru
          _
      $region60: #{_lambda_.1} parent=5 // pred_fallthru
        _
      %p458 = scmp.le.s32.totalorder 1, %s27
      %p459 = scmp.lt.s32.totalorder %s27, 3
      %p460 = pnand %p458, %p459
      %p461 = pneg %p460
      // Predicated region
      $region65: #{_lambda_.1} parent=5 // pred_check
        _
      $region66: #{_lambda_.1} parent=5 // pred_check_branch
        %463 = sbr.rel (%p460) target = $region68
      $region67: #{_lambda_.1} parent=5 // pred_region
        %s464 = ssub.s32 %s27, 1
        // Predicated region
        $region69: #{_lambda_.1} parent=67 // pred_check
          %p465 = pneg %p74
        $region70: #{_lambda_.1} parent=67 // pred_check_branch
          %467 = sbr.rel (%p465) target = $region72
        $region71: #{_lambda_.1} parent=67 // pred_region
          %468 = dma.done [#allocation4], 32
        $region72: #{_lambda_.1} parent=67 // pred_fallthru
          _
        // Predicated region
        $region73: #{_lambda_.1} parent=67 // pred_check
          %p469 = pneg %p95
        $region74: #{_lambda_.1} parent=67 // pred_check_branch
          %471 = sbr.rel (%p469) target = $region76
        $region75: #{_lambda_.1} parent=67 // pred_region
          %472 = dma.done [#allocation6], 16
        $region76: #{_lambda_.1} parent=67 // pred_fallthru
          _
        // Predicated region
        $region77: #{_lambda_.1} parent=67 // pred_check
          %p473 = pneg %p116
        $region78: #{_lambda_.1} parent=67 // pred_check_branch
          %475 = sbr.rel (%p473) target = $region80
        $region79: #{_lambda_.1} parent=67 // pred_region
          %476 = dma.done [#allocation6], 32
        $region80: #{_lambda_.1} parent=67 // pred_fallthru
          _
        // Predicated region
        $region81: #{_lambda_.1} parent=67 // pred_check
          %p477 = pneg %p137
        $region82: #{_lambda_.1} parent=67 // pred_check_branch
          %479 = sbr.rel (%p477) target = $region84
        $region83: #{_lambda_.1} parent=67 // pred_region
          %480 = dma.done [#allocation9], 16
        $region84: #{_lambda_.1} parent=67 // pred_fallthru
          _
        // Predicated region
        $region85: #{_lambda_.1} parent=67 // pred_check
          %p481 = pneg %p158
        $region86: #{_lambda_.1} parent=67 // pred_check_branch
          %483 = sbr.rel (%p481) target = $region88
        $region87: #{_lambda_.1} parent=67 // pred_region
          %484 = dma.done [#allocation9], 64
        $region88: #{_lambda_.1} parent=67 // pred_fallthru
          _
        // Predicated region
        $region89: #{_lambda_.1} parent=67 // pred_check
          %p485 = pneg %p179
        $region90: #{_lambda_.1} parent=67 // pred_check_branch
          %487 = sbr.rel (%p485) target = $region92
        $region91: #{_lambda_.1} parent=67 // pred_region
          %488 = dma.done [#allocation12], 16
        $region92: #{_lambda_.1} parent=67 // pred_fallthru
          _
        // Predicated region
        $region93: #{_lambda_.1} parent=67 // pred_check
          %p489 = pneg %p200
        $region94: #{_lambda_.1} parent=67 // pred_check_branch
          %491 = sbr.rel (%p489) target = $region96
        $region95: #{_lambda_.1} parent=67 // pred_region
          %492 = dma.done [#allocation12], 32
        $region96: #{_lambda_.1} parent=67 // pred_fallthru
          _
        // Predicated region
        $region97: #{_lambda_.1} parent=67 // pred_check
          %p493 = pneg %p221
        $region98: #{_lambda_.1} parent=67 // pred_check_branch
          %495 = sbr.rel (%p493) target = $region100
        $region99: #{_lambda_.1} parent=67 // pred_region
          %496 = dma.done [#allocation15], 16
        $region100: #{_lambda_.1} parent=67 // pred_fallthru
          _
        // Predicated region
        $region101: #{_lambda_.1} parent=67 // pred_check
          %p497 = pneg %p242
        $region102: #{_lambda_.1} parent=67 // pred_check_branch
          %499 = sbr.rel (%p497) target = $region104
        $region103: #{_lambda_.1} parent=67 // pred_region
          %500 = dma.done [#allocation15], 32
        $region104: #{_lambda_.1} parent=67 // pred_fallthru
          _
        // Predicated region
        $region105: #{_lambda_.1} parent=67 // pred_check
          %p501 = pneg %p263
        $region106: #{_lambda_.1} parent=67 // pred_check_branch
          %503 = sbr.rel (%p501) target = $region108
        $region107: #{_lambda_.1} parent=67 // pred_region
          %504 = dma.done [#allocation18], 32
        $region108: #{_lambda_.1} parent=67 // pred_fallthru
          _
        // Predicated region
        $region109: #{_lambda_.1} parent=67 // pred_check
          %p505 = pneg %p284
        $region110: #{_lambda_.1} parent=67 // pred_check_branch
          %507 = sbr.rel (%p505) target = $region112
        $region111: #{_lambda_.1} parent=67 // pred_region
          %508 = dma.done [#allocation18], 16
        $region112: #{_lambda_.1} parent=67 // pred_fallthru
          _
        %509 = sfence
        %p510 = scmp.lt.s32.totalorder %s32, 1
        %s511 = scalar_select %p510, %s32, 1
        %s512 = smul.addr %s511, 12
        %s513 = smul.addr %s512, 8
        %s514 = scalar_lea.vmem %s0, %s513
        %p515 = pneg %p53
        %p516 = pneg %p50
        %p517 = pneg %p74
        %p518 = pneg %p71
        %p519 = pneg %p95
        %p520 = pneg %p92
        %p521 = pneg %p116
        %p522 = pneg %p113
        %p523 = pneg %p137
        %p524 = pneg %p134
        %p525 = pneg %p158
        %p526 = pneg %p155
        %p527 = pneg %p179
        %p528 = pneg %p176
        %p529 = pneg %p200
        %p530 = pneg %p197
        %p531 = pneg %p221
        %p532 = pneg %p218
        %p533 = pneg %p242
        %p534 = pneg %p239
        %p535 = pneg %p263
        %p536 = pneg %p260
        %p537 = pneg %p284
        %p538 = pneg %p281
        %p539 = pneg %p310
        %p540 = pneg %p307
        %s541 = sand.u32 %s297, 1
        %s542 = scalar_lea.sflag [#allocation3], %s541
        %s543 = sand.u32 %s297, 1
        %s544 = smul.addr %s543, 64
        %s545 = scalar_lea.vmem [#allocation20], %s544
        %p546 = scmp.lt.s32.totalorder %s32, 1
        %s547 = scalar_select %p546, %s32, 1
        %s548 = smul.addr %s547, 12
        %s549 = smul.addr %s548, 8
        %s550 = scalar_lea.vmem %s0, %s549
        %s551 = sld [smem:[#allocation2]]
        %s552 = sld [smem:[#allocation2 + $0x1]]
        %s553 = sld [smem:[#allocation2 + $0x2]]
        %s554 = sld [smem:[#allocation2 + $0x3]]
        %s555 = sld [smem:[#allocation2 + $0x80]]
        %s556 = sld [smem:[#allocation2 + $0x81]]
        %s557 = sld [smem:[#allocation2 + $0x82]]
        %s558 = sld [smem:[#allocation2 + $0x83]]
        %s559 = sld [smem:[#allocation5]]
        %s560 = sld [smem:[#allocation5 + $0x1]]
        %s561 = sld [smem:[#allocation7]]
        %s562 = sld [smem:[#allocation7 + $0x1]]
        %s563 = sld [smem:[#allocation7 + $0x2]]
        %s564 = sld [smem:[#allocation7 + $0x3]]
        %s565 = sld [smem:[#allocation7 + $0x80]]
        %s566 = sld [smem:[#allocation7 + $0x81]]
        %s567 = sld [smem:[#allocation7 + $0x82]]
        %s568 = sld [smem:[#allocation7 + $0x83]]
        %s569 = sld [smem:[#allocation8]]
        %s570 = sld [smem:[#allocation8 + $0x1]]
        %s571 = sld [smem:[#allocation10]]
        %s572 = sld [smem:[#allocation10 + $0x1]]
        %s573 = sld [smem:[#allocation10 + $0x2]]
        %s574 = sld [smem:[#allocation10 + $0x3]]
        %s575 = sld [smem:[#allocation10 + $0x80]]
        %s576 = sld [smem:[#allocation10 + $0x81]]
        %s577 = sld [smem:[#allocation10 + $0x82]]
        %s578 = sld [smem:[#allocation10 + $0x83]]
        %s579 = sld [smem:[#allocation10 + $0x100]]
        %s580 = sld [smem:[#allocation10 + $0x101]]
        %s581 = sld [smem:[#allocation10 + $0x102]]
        %s582 = sld [smem:[#allocation10 + $0x103]]
        %s583 = sld [smem:[#allocation10 + $0x180]]
        %s584 = sld [smem:[#allocation10 + $0x181]]
        %s585 = sld [smem:[#allocation10 + $0x182]]
        %s586 = sld [smem:[#allocation10 + $0x183]]
        %s587 = sld [smem:[#allocation11]]
        %s588 = sld [smem:[#allocation11 + $0x1]]
        %s589 = sld [smem:[#allocation11 + $0x2]]
        %s590 = sld [smem:[#allocation11 + $0x3]]
        %s591 = sld [smem:[#allocation13]]
        %s592 = sld [smem:[#allocation13 + $0x1]]
        %s593 = sld [smem:[#allocation13 + $0x80]]
        %s594 = sld [smem:[#allocation13 + $0x81]]
        %s595 = sld [smem:[#allocation14]]
        %s596 = sld [smem:[#allocation14 + $0x1]]
        %s597 = sld [smem:[#allocation16]]
        %s598 = sld [smem:[#allocation16 + $0x1]]
        %s599 = sld [smem:[#allocation16 + $0x2]]
        %s600 = sld [smem:[#allocation16 + $0x3]]
        %s601 = sld [smem:[#allocation16 + $0x80]]
        %s602 = sld [smem:[#allocation16 + $0x81]]
        %s603 = sld [smem:[#allocation16 + $0x82]]
        %s604 = sld [smem:[#allocation16 + $0x83]]
        %s605 = sld [smem:[#allocation17]]
        %s606 = sld [smem:[#allocation17 + $0x1]]
        %s607 = sld [smem:[#allocation17 + $0x80]]
        %s608 = sld [smem:[#allocation17 + $0x81]]
        %s609 = sld [smem:[#allocation19]]
        %s610 = sld [smem:[#allocation19 + $0x1]]
        %v611 = vld [vmem:[%s550] sm:$0xff]
        %v612 = vld [vmem:[%s550 + $0x8] sm:$0xff]
        %v613 = vld [vmem:[%s550 + $0x10] sm:$0x3]
        %s614 = scalar_lea.vmem %s550, 24
        %v615 = vld [vmem:[%s614] sm:$0xff]
        %v616 = vld [vmem:[%s614 + $0x8] sm:$0xff]
        %v617 = vld [vmem:[%s614 + $0x10] sm:$0x3]
        %s618 = scalar_lea.vmem %s550, 48
        %v619 = vld [vmem:[%s618] sm:$0xff]
        %v620 = vld [vmem:[%s618 + $0x8] sm:$0xff]
        %v621 = vld [vmem:[%s618 + $0x10] sm:$0x3]
        %s622 = scalar_lea.vmem %s550, 72
        %v623 = vld [vmem:[%s622] sm:$0xff]
        %v624 = vld [vmem:[%s622 + $0x8] sm:$0xff]
        %v625 = vld [vmem:[%s622 + $0x10] sm:$0x3]
        %v626 = vstv %s551
        %v627 = vmul.f32 %v626, %v611
        %v628 = vmul.f32 %v626, %v612
        %v629 = vmul.f32 %v626, %v613
        %v630 = vstv %s552
        %v631 = vmul.f32 %v630, %v615
        %v632 = vmul.f32 %v630, %v616
        %v633 = vmul.f32 %v630, %v617
        %v634 = vadd.f32 %v627, %v631
        %v635 = vadd.f32 %v628, %v632
        %v636 = vadd.f32 %v629, %v633
        %v637 = vstv %s553
        %v638 = vmul.f32 %v637, %v619
        %v639 = vmul.f32 %v637, %v620
        %v640 = vmul.f32 %v637, %v621
        %v641 = vadd.f32 %v634, %v638
        %v642 = vadd.f32 %v635, %v639
        %v643 = vadd.f32 %v636, %v640
        %v644 = vstv %s554
        %v645 = vmul.f32 %v644, %v623
        %v646 = vmul.f32 %v644, %v624
        %v647 = vmul.f32 %v644, %v625
        %v648 = vadd.f32 %v641, %v645
        %v649 = vadd.f32 %v642, %v646
        %v650 = vadd.f32 %v643, %v647
        %v651 = vstv %s559
        %v652 = vadd.f32 %v648, %v651
        %v653 = vadd.f32 %v649, %v651
        %v654 = vadd.f32 %v650, %v651
        %v655 = vstv %s555
        %v656 = vmul.f32 %v655, %v611
        %v657 = vmul.f32 %v655, %v612
        %v658 = vmul.f32 %v655, %v613
        %v659 = vstv %s556
        %v660 = vmul.f32 %v659, %v615
        %v661 = vmul.f32 %v659, %v616
        %v662 = vmul.f32 %v659, %v617
        %v663 = vadd.f32 %v656, %v660
        %v664 = vadd.f32 %v657, %v661
        %v665 = vadd.f32 %v658, %v662
        %v666 = vstv %s557
        %v667 = vmul.f32 %v666, %v619
        %v668 = vmul.f32 %v666, %v620
        %v669 = vmul.f32 %v666, %v621
        %v670 = vadd.f32 %v663, %v667
        %v671 = vadd.f32 %v664, %v668
        %v672 = vadd.f32 %v665, %v669
        %v673 = vstv %s558
        %v674 = vmul.f32 %v673, %v623
        %v675 = vmul.f32 %v673, %v624
        %v676 = vmul.f32 %v673, %v625
        %v677 = vadd.f32 %v670, %v674
        %v678 = vadd.f32 %v671, %v675
        %v679 = vadd.f32 %v672, %v676
        %v680 = vstv %s560
        %v681 = vadd.f32 %v677, %v680
        %v682 = vadd.f32 %v678, %v680
        %v683 = vadd.f32 %v679, %v680
        %v684 = vstv %s561
        %v685 = vmul.f32 %v684, %v611
        %v686 = vmul.f32 %v684, %v612
        %v687 = vmul.f32 %v684, %v613
        %v688 = vstv %s562
        %v689 = vmul.f32 %v688, %v615
        %v690 = vmul.f32 %v688, %v616
        %v691 = vmul.f32 %v688, %v617
        %v692 = vadd.f32 %v685, %v689
        %v693 = vadd.f32 %v686, %v690
        %v694 = vadd.f32 %v687, %v691
        %v695 = vstv %s563
        %v696 = vmul.f32 %v695, %v619
        %v697 = vmul.f32 %v695, %v620
        %v698 = vmul.f32 %v695, %v621
        %v699 = vadd.f32 %v692, %v696
        %v700 = vadd.f32 %v693, %v697
        %v701 = vadd.f32 %v694, %v698
        %v702 = vstv %s564
        %v703 = vmul.f32 %v702, %v623
        %v704 = vmul.f32 %v702, %v624
        %v705 = vmul.f32 %v702, %v625
        %v706 = vadd.f32 %v699, %v703
        %v707 = vadd.f32 %v700, %v704
        %v708 = vadd.f32 %v701, %v705
        %v709 = vstv %s569
        %v710 = vadd.f32 %v706, %v709
        %v711 = vadd.f32 %v707, %v709
        %v712 = vadd.f32 %v708, %v709
        %v713 = vstv %s565
        %v714 = vmul.f32 %v713, %v611
        %v715 = vmul.f32 %v713, %v612
        %v716 = vmul.f32 %v713, %v613
        %v717 = vstv %s566
        %v718 = vmul.f32 %v717, %v615
        %v719 = vmul.f32 %v717, %v616
        %v720 = vmul.f32 %v717, %v617
        %v721 = vadd.f32 %v714, %v718
        %v722 = vadd.f32 %v715, %v719
        %v723 = vadd.f32 %v716, %v720
        %v724 = vstv %s567
        %v725 = vmul.f32 %v724, %v619
        %v726 = vmul.f32 %v724, %v620
        %v727 = vmul.f32 %v724, %v621
        %v728 = vadd.f32 %v721, %v725
        %v729 = vadd.f32 %v722, %v726
        %v730 = vadd.f32 %v723, %v727
        %v731 = vstv %s568
        %v732 = vmul.f32 %v731, %v623
        %v733 = vmul.f32 %v731, %v624
        %v734 = vmul.f32 %v731, %v625
        %v735 = vadd.f32 %v728, %v732
        %v736 = vadd.f32 %v729, %v733
        %v737 = vadd.f32 %v730, %v734
        %v738 = vstv %s570
        %v739 = vadd.f32 %v735, %v738
        %v740 = vadd.f32 %v736, %v738
        %v741 = vadd.f32 %v737, %v738
        %v742 = vstv %s571
        %v743 = vmul.f32 %v742, %v611
        %v744 = vmul.f32 %v742, %v612
        %v745 = vmul.f32 %v742, %v613
        %v746 = vstv %s572
        %v747 = vmul.f32 %v746, %v615
        %v748 = vmul.f32 %v746, %v616
        %v749 = vmul.f32 %v746, %v617
        %v750 = vadd.f32 %v743, %v747
        %v751 = vadd.f32 %v744, %v748
        %v752 = vadd.f32 %v745, %v749
        %v753 = vstv %s573
        %v754 = vmul.f32 %v753, %v619
        %v755 = vmul.f32 %v753, %v620
        %v756 = vmul.f32 %v753, %v621
        %v757 = vadd.f32 %v750, %v754
        %v758 = vadd.f32 %v751, %v755
        %v759 = vadd.f32 %v752, %v756
        %v760 = vstv %s574
        %v761 = vmul.f32 %v760, %v623
        %v762 = vmul.f32 %v760, %v624
        %v763 = vmul.f32 %v760, %v625
        %v764 = vadd.f32 %v757, %v761
        %v765 = vadd.f32 %v758, %v762
        %v766 = vadd.f32 %v759, %v763
        %v767 = vstv %s587
        %v768 = vadd.f32 %v764, %v767
        %v769 = vadd.f32 %v765, %v767
        %v770 = vadd.f32 %v766, %v767
        %v771 = vstv %s575
        %v772 = vmul.f32 %v771, %v611
        %v773 = vmul.f32 %v771, %v612
        %v774 = vmul.f32 %v771, %v613
        %v775 = vstv %s576
        %v776 = vmul.f32 %v775, %v615
        %v777 = vmul.f32 %v775, %v616
        %v778 = vmul.f32 %v775, %v617
        %v779 = vadd.f32 %v772, %v776
        %v780 = vadd.f32 %v773, %v777
        %v781 = vadd.f32 %v774, %v778
        %v782 = vstv %s577
        %v783 = vmul.f32 %v782, %v619
        %v784 = vmul.f32 %v782, %v620
        %v785 = vmul.f32 %v782, %v621
        %v786 = vadd.f32 %v779, %v783
        %v787 = vadd.f32 %v780, %v784
        %v788 = vadd.f32 %v781, %v785
        %v789 = vstv %s578
        %v790 = vmul.f32 %v789, %v623
        %v791 = vmul.f32 %v789, %v624
        %v792 = vmul.f32 %v789, %v625
        %v793 = vadd.f32 %v786, %v790
        %v794 = vadd.f32 %v787, %v791
        %v795 = vadd.f32 %v788, %v792
        %v796 = vstv %s588
        %v797 = vadd.f32 %v793, %v796
        %v798 = vadd.f32 %v794, %v796
        %v799 = vadd.f32 %v795, %v796
        %v800 = vstv %s579
        %v801 = vmul.f32 %v800, %v611
        %v802 = vmul.f32 %v800, %v612
        %v803 = vmul.f32 %v800, %v613
        %v804 = vstv %s580
        %v805 = vmul.f32 %v804, %v615
        %v806 = vmul.f32 %v804, %v616
        %v807 = vmul.f32 %v804, %v617
        %v808 = vadd.f32 %v801, %v805
        %v809 = vadd.f32 %v802, %v806
        %v810 = vadd.f32 %v803, %v807
        %v811 = vstv %s581
        %v812 = vmul.f32 %v811, %v619
        %v813 = vmul.f32 %v811, %v620
        %v814 = vmul.f32 %v811, %v621
        %v815 = vadd.f32 %v808, %v812
        %v816 = vadd.f32 %v809, %v813
        %v817 = vadd.f32 %v810, %v814
        %v818 = vstv %s582
        %v819 = vmul.f32 %v818, %v623
        %v820 = vmul.f32 %v818, %v624
        %v821 = vmul.f32 %v818, %v625
        %v822 = vadd.f32 %v815, %v819
        %v823 = vadd.f32 %v816, %v820
        %v824 = vadd.f32 %v817, %v821
        %v825 = vstv %s589
        %v826 = vadd.f32 %v822, %v825
        %v827 = vadd.f32 %v823, %v825
        %v828 = vadd.f32 %v824, %v825
        %v829 = vstv %s583
        %v830 = vmul.f32 %v829, %v611
        %v831 = vmul.f32 %v829, %v612
        %v832 = vmul.f32 %v829, %v613
        %v833 = vstv %s584
        %v834 = vmul.f32 %v833, %v615
        %v835 = vmul.f32 %v833, %v616
        %v836 = vmul.f32 %v833, %v617
        %v837 = vadd.f32 %v830, %v834
        %v838 = vadd.f32 %v831, %v835
        %v839 = vadd.f32 %v832, %v836
        %v840 = vstv %s585
        %v841 = vmul.f32 %v840, %v619
        %v842 = vmul.f32 %v840, %v620
        %v843 = vmul.f32 %v840, %v621
        %v844 = vadd.f32 %v837, %v841
        %v845 = vadd.f32 %v838, %v842
        %v846 = vadd.f32 %v839, %v843
        %v847 = vstv %s586
        %v848 = vmul.f32 %v847, %v623
        %v849 = vmul.f32 %v847, %v624
        %v850 = vmul.f32 %v847, %v625
        %v851 = vadd.f32 %v844, %v848
        %v852 = vadd.f32 %v845, %v849
        %v853 = vadd.f32 %v846, %v850
        %v854 = vstv %s590
        %v855 = vadd.f32 %v851, %v854
        %v856 = vadd.f32 %v852, %v854
        %v857 = vadd.f32 %v853, %v854
        %v858 = vlaneseq
        %v859 = vshrl.u32 %v858, 7
        %v860 = vadd.s32 %v859, 8
        %v861 = vadd.s32 %v859, 16
        %v862 = vcvt.s32.f32 %v859
        %v863 = vcvt.s32.f32 %v860
        %v864 = vcvt.s32.f32 %v861
        %v865 = vsub.f32 %v862, 1.0
        %v866 = vsub.f32 %v863, 1.0
        %v867 = vsub.f32 %v864, 1.0
        %v868 = vlaneseq
        %v869 = vand.u32 %v868, 127
        %v870 = vcvt.s32.f32 %v869
        %v871 = vsub.f32 %v870, 1.0
        %v872 = vand.u32 2147483647, %v865
        %v873 = vand.u32 2147483647, %v866
        %v874 = vand.u32 2147483647, %v867
        %vm875 = vcmp.gt.f32.partialorder %v872, 15.0
        %vm876 = vcmp.gt.f32.partialorder %v873, 15.0
        %vm877 = vcmp.gt.f32.partialorder %v874, 15.0
        %v878 = vsub.f32 30.0, %v872
        %v879 = vsub.f32 30.0, %v873
        %v880 = vsub.f32 30.0, %v874
        %v881 = vsel %vm875, %v878, %v872
        %v882 = vsel %vm876, %v879, %v873
        %v883 = vsel %vm877, %v880, %v874
        %v884 = vand.u32 2147483647, %v871
        %vm885 = vcmp.gt.f32.partialorder %v884, 15.0
        %v886 = vsub.f32 30.0, %v884
        %v887 = vsel %vm885, %v886, %v884
        %v888 = vmul.f32 %v887, 2.0
        %v889 = vrcp.pop 15.0
        %v890 = vmul.f32 %v888, %v889
        %v891 = vadd.f32 %v890, -1.0
        %v892 = vmul.f32 %v881, 2.0
        %v893 = vmul.f32 %v882, 2.0
        %v894 = vmul.f32 %v883, 2.0
        %v895 = vmul.f32 %v892, %v889
        %v896 = vmul.f32 %v893, %v889
        %v897 = vmul.f32 %v894, %v889
        %v898 = vadd.f32 %v895, -1.0
        %v899 = vadd.f32 %v896, -1.0
        %v900 = vadd.f32 %v897, -1.0
        %v901 = vstv %s591
        %v902 = vmul.f32 %v901, %v891
        %v903 = vstv %s592
        %v904 = vmul.f32 %v903, %v898
        %v905 = vmul.f32 %v903, %v899
        %v906 = vmul.f32 %v903, %v900
        %v907 = vadd.f32 %v902, %v904
        %v908 = vadd.f32 %v902, %v905
        %v909 = vadd.f32 %v902, %v906
        %v910 = vstv %s595
        %v911 = vadd.f32 %v907, %v910
        %v912 = vadd.f32 %v908, %v910
        %v913 = vadd.f32 %v909, %v910
        %v914 = vstv %s593
        %v915 = vmul.f32 %v914, %v891
        %v916 = vstv %s594
        %v917 = vmul.f32 %v916, %v898
        %v918 = vmul.f32 %v916, %v899
        %v919 = vmul.f32 %v916, %v900
        %v920 = vadd.f32 %v915, %v917
        %v921 = vadd.f32 %v915, %v918
        %v922 = vadd.f32 %v915, %v919
        %v923 = vstv %s596
        %v924 = vadd.f32 %v920, %v923
        %v925 = vadd.f32 %v921, %v923
        %v926 = vadd.f32 %v922, %v923
        %vm929 = vcmask 1040384
        %v930 = vrot.slane %v710, 7
        %v931 = vrot.slane %v711, 7
        %v932 = vsel %vm929, %v930, %v931
        %933 = vrot.lane.b32.xlu0 %v930, 1
        %v934 = vpop.permute.xlu0 %933
        %935 = vrot.lane.b32.xlu0 %v932, 1
        %v936 = vpop.permute.xlu0 %935
        %937 = vrot.lane.b32.xlu0 %v931, 1
        %v938 = vpop.permute.xlu0 %937
        %v942 = vsub.f32 %v652, %v934
        %v943 = vsub.f32 %v653, %v936
        %v944 = vsub.f32 %v654, %v938
        %vm945 = vcmp.gt.f32.partialorder %v942, 0.0
        %vm946 = vcmp.gt.f32.partialorder %v943, 0.0
        %vm947 = vcmp.gt.f32.partialorder %v944, 0.0
        %v948 = vmul.f32 %v942, 0.2
        %v949 = vmul.f32 %v943, 0.2
        %v950 = vmul.f32 %v944, 0.2
        %v951 = vsel %vm945, %v942, %v948
        %v952 = vsel %vm946, %v943, %v949
        %v953 = vsel %vm947, %v944, %v950
        %v956 = vrot.slane %v739, 7
        %v957 = vrot.slane %v740, 7
        %v958 = vsel %vm929, %v956, %v957
        %959 = vrot.lane.b32.xlu0 %v956, 1
        %v960 = vpop.permute.xlu0 %959
        %961 = vrot.lane.b32.xlu0 %v958, 1
        %v962 = vpop.permute.xlu0 %961
        %963 = vrot.lane.b32.xlu0 %v957, 1
        %v964 = vpop.permute.xlu0 %963
        %v968 = vsub.f32 %v681, %v960
        %v969 = vsub.f32 %v682, %v962
        %v970 = vsub.f32 %v683, %v964
        %vm971 = vcmp.gt.f32.partialorder %v968, 0.0
        %vm972 = vcmp.gt.f32.partialorder %v969, 0.0
        %vm973 = vcmp.gt.f32.partialorder %v970, 0.0
        %v974 = vmul.f32 %v968, 0.2
        %v975 = vmul.f32 %v969, 0.2
        %v976 = vmul.f32 %v970, 0.2
        %v977 = vsel %vm971, %v968, %v974
        %v978 = vsel %vm972, %v969, %v975
        %v979 = vsel %vm973, %v970, %v976
        %v982 = vrot.slane %v911, 7
        %v983 = vrot.slane %v912, 7
        %v984 = vsel %vm929, %v982, %v983
        %985 = vrot.lane.b32.xlu0 %v982, 1
        %v986 = vpop.permute.xlu0 %985
        %987 = vrot.lane.b32.xlu0 %v984, 1
        %v988 = vpop.permute.xlu0 %987
        %989 = vrot.lane.b32.xlu0 %v983, 1
        %v990 = vpop.permute.xlu0 %989
        %v994 = vsub.f32 %v911, %v986
        %v995 = vsub.f32 %v912, %v988
        %v996 = vsub.f32 %v913, %v990
        %vm997 = vcmp.gt.f32.partialorder %v994, 0.0
        %vm998 = vcmp.gt.f32.partialorder %v995, 0.0
        %vm999 = vcmp.gt.f32.partialorder %v996, 0.0
        %v1000 = vmul.f32 %v994, 0.2
        %v1001 = vmul.f32 %v995, 0.2
        %v1002 = vmul.f32 %v996, 0.2
        %v1003 = vsel %vm997, %v994, %v1000
        %v1004 = vsel %vm998, %v995, %v1001
        %v1005 = vsel %vm999, %v996, %v1002
        %v1008 = vrot.slane %v924, 7
        %v1009 = vrot.slane %v925, 7
        %v1010 = vsel %vm929, %v1008, %v1009
        %1011 = vrot.lane.b32.xlu0 %v1008, 1
        %v1012 = vpop.permute.xlu0 %1011
        %1013 = vrot.lane.b32.xlu0 %v1010, 1
        %v1014 = vpop.permute.xlu0 %1013
        %1015 = vrot.lane.b32.xlu0 %v1009, 1
        %v1016 = vpop.permute.xlu0 %1015
        %v1020 = vsub.f32 %v924, %v1012
        %v1021 = vsub.f32 %v925, %v1014
        %v1022 = vsub.f32 %v926, %v1016
        %vm1023 = vcmp.gt.f32.partialorder %v1020, 0.0
        %vm1024 = vcmp.gt.f32.partialorder %v1021, 0.0
        %vm1025 = vcmp.gt.f32.partialorder %v1022, 0.0
        %v1026 = vmul.f32 %v1020, 0.2
        %v1027 = vmul.f32 %v1021, 0.2
        %v1028 = vmul.f32 %v1022, 0.2
        %v1029 = vsel %vm1023, %v1020, %v1026
        %v1030 = vsel %vm1024, %v1021, %v1027
        %v1031 = vsel %vm1025, %v1022, %v1028
        %v1032 = vstv %s597
        %v1033 = vmul.f32 %v1032, %v951
        %v1034 = vmul.f32 %v1032, %v952
        %v1035 = vmul.f32 %v1032, %v953
        %v1036 = vstv %s598
        %v1037 = vmul.f32 %v1036, %v977
        %v1038 = vmul.f32 %v1036, %v978
        %v1039 = vmul.f32 %v1036, %v979
        %v1040 = vadd.f32 %v1033, %v1037
        %v1041 = vadd.f32 %v1034, %v1038
        %v1042 = vadd.f32 %v1035, %v1039
        %v1043 = vstv %s599
        %v1044 = vmul.f32 %v1043, %v1003
        %v1045 = vmul.f32 %v1043, %v1004
        %v1046 = vmul.f32 %v1043, %v1005
        %v1047 = vadd.f32 %v1040, %v1044
        %v1048 = vadd.f32 %v1041, %v1045
        %v1049 = vadd.f32 %v1042, %v1046
        %v1050 = vstv %s600
        %v1051 = vmul.f32 %v1050, %v1029
        %v1052 = vmul.f32 %v1050, %v1030
        %v1053 = vmul.f32 %v1050, %v1031
        %v1054 = vadd.f32 %v1047, %v1051
        %v1055 = vadd.f32 %v1048, %v1052
        %v1056 = vadd.f32 %v1049, %v1053
        %v1057 = vstv %s601
        %v1058 = vmul.f32 %v1057, %v951
        %v1059 = vmul.f32 %v1057, %v952
        %v1060 = vmul.f32 %v1057, %v953
        %v1061 = vstv %s602
        %v1062 = vmul.f32 %v1061, %v977
        %v1063 = vmul.f32 %v1061, %v978
        %v1064 = vmul.f32 %v1061, %v979
        %v1065 = vadd.f32 %v1058, %v1062
        %v1066 = vadd.f32 %v1059, %v1063
        %v1067 = vadd.f32 %v1060, %v1064
        %v1068 = vstv %s603
        %v1069 = vmul.f32 %v1068, %v1003
        %v1070 = vmul.f32 %v1068, %v1004
        %v1071 = vmul.f32 %v1068, %v1005
        %v1072 = vadd.f32 %v1065, %v1069
        %v1073 = vadd.f32 %v1066, %v1070
        %v1074 = vadd.f32 %v1067, %v1071
        %v1075 = vstv %s604
        %v1076 = vmul.f32 %v1075, %v1029
        %v1077 = vmul.f32 %v1075, %v1030
        %v1078 = vmul.f32 %v1075, %v1031
        %v1079 = vadd.f32 %v1072, %v1076
        %v1080 = vadd.f32 %v1073, %v1077
        %v1081 = vadd.f32 %v1074, %v1078
        %v1082 = vstv %s605
        %v1083 = vmul.f32 %v1082, %v1054
        %v1084 = vmul.f32 %v1082, %v1055
        %v1085 = vmul.f32 %v1082, %v1056
        %v1086 = vstv %s606
        %v1087 = vmul.f32 %v1086, %v1079
        %v1088 = vmul.f32 %v1086, %v1080
        %v1089 = vmul.f32 %v1086, %v1081
        %v1090 = vadd.f32 %v1083, %v1087
        %v1091 = vadd.f32 %v1084, %v1088
        %v1092 = vadd.f32 %v1085, %v1089
        %v1093 = vstv %s609
        %v1094 = vadd.f32 %v1090, %v1093
        %v1095 = vadd.f32 %v1091, %v1093
        %v1096 = vadd.f32 %v1092, %v1093
        %v1097 = vstv %s607
        %v1098 = vmul.f32 %v1097, %v1054
        %v1099 = vmul.f32 %v1097, %v1055
        %v1100 = vmul.f32 %v1097, %v1056
        %v1101 = vstv %s608
        %v1102 = vmul.f32 %v1101, %v1079
        %v1103 = vmul.f32 %v1101, %v1080
        %v1104 = vmul.f32 %v1101, %v1081
        %v1105 = vadd.f32 %v1098, %v1102
        %v1106 = vadd.f32 %v1099, %v1103
        %v1107 = vadd.f32 %v1100, %v1104
        %v1108 = vstv %s610
        %v1109 = vadd.f32 %v1105, %v1108
        %v1110 = vadd.f32 %v1106, %v1108
        %v1111 = vadd.f32 %v1107, %v1108
        %v1115 = vsub.f32 %v652, %v930
        %v1116 = vsub.f32 %v653, %v932
        %v1117 = vsub.f32 %v654, %v931
        %vm1118 = vcmp.gt.f32.partialorder %v1115, 0.0
        %vm1119 = vcmp.gt.f32.partialorder %v1116, 0.0
        %vm1120 = vcmp.gt.f32.partialorder %v1117, 0.0
        %v1121 = vmul.f32 %v1115, 0.2
        %v1122 = vmul.f32 %v1116, 0.2
        %v1123 = vmul.f32 %v1117, 0.2
        %v1124 = vsel %vm1118, %v1115, %v1121
        %v1125 = vsel %vm1119, %v1116, %v1122
        %v1126 = vsel %vm1120, %v1117, %v1123
        %v1130 = vsub.f32 %v681, %v956
        %v1131 = vsub.f32 %v682, %v958
        %v1132 = vsub.f32 %v683, %v957
        %vm1133 = vcmp.gt.f32.partialorder %v1130, 0.0
        %vm1134 = vcmp.gt.f32.partialorder %v1131, 0.0
        %vm1135 = vcmp.gt.f32.partialorder %v1132, 0.0
        %v1136 = vmul.f32 %v1130, 0.2
        %v1137 = vmul.f32 %v1131, 0.2
        %v1138 = vmul.f32 %v1132, 0.2
        %v1139 = vsel %vm1133, %v1130, %v1136
        %v1140 = vsel %vm1134, %v1131, %v1137
        %v1141 = vsel %vm1135, %v1132, %v1138
        %v1145 = vsub.f32 %v911, %v982
        %v1146 = vsub.f32 %v912, %v984
        %v1147 = vsub.f32 %v913, %v983
        %vm1148 = vcmp.gt.f32.partialorder %v1145, 0.0
        %vm1149 = vcmp.gt.f32.partialorder %v1146, 0.0
        %vm1150 = vcmp.gt.f32.partialorder %v1147, 0.0
        %v1151 = vmul.f32 %v1145, 0.2
        %v1152 = vmul.f32 %v1146, 0.2
        %v1153 = vmul.f32 %v1147, 0.2
        %v1154 = vsel %vm1148, %v1145, %v1151
        %v1155 = vsel %vm1149, %v1146, %v1152
        %v1156 = vsel %vm1150, %v1147, %v1153
        %v1160 = vsub.f32 %v924, %v1008
        %v1161 = vsub.f32 %v925, %v1010
        %v1162 = vsub.f32 %v926, %v1009
        %vm1163 = vcmp.gt.f32.partialorder %v1160, 0.0
        %vm1164 = vcmp.gt.f32.partialorder %v1161, 0.0
        %vm1165 = vcmp.gt.f32.partialorder %v1162, 0.0
        %v1166 = vmul.f32 %v1160, 0.2
        %v1167 = vmul.f32 %v1161, 0.2
        %v1168 = vmul.f32 %v1162, 0.2
        %v1169 = vsel %vm1163, %v1160, %v1166
        %v1170 = vsel %vm1164, %v1161, %v1167
        %v1171 = vsel %vm1165, %v1162, %v1168
        %v1172 = vmul.f32 %v1032, %v1124
        %v1173 = vmul.f32 %v1032, %v1125
        %v1174 = vmul.f32 %v1032, %v1126
        %v1175 = vmul.f32 %v1036, %v1139
        %v1176 = vmul.f32 %v1036, %v1140
        %v1177 = vmul.f32 %v1036, %v1141
        %v1178 = vadd.f32 %v1172, %v1175
        %v1179 = vadd.f32 %v1173, %v1176
        %v1180 = vadd.f32 %v1174, %v1177
        %v1181 = vmul.f32 %v1043, %v1154
        %v1182 = vmul.f32 %v1043, %v1155
        %v1183 = vmul.f32 %v1043, %v1156
        %v1184 = vadd.f32 %v1178, %v1181
        %v1185 = vadd.f32 %v1179, %v1182
        %v1186 = vadd.f32 %v1180, %v1183
        %v1187 = vmul.f32 %v1050, %v1169
        %v1188 = vmul.f32 %v1050, %v1170
        %v1189 = vmul.f32 %v1050, %v1171
        %v1190 = vadd.f32 %v1184, %v1187
        %v1191 = vadd.f32 %v1185, %v1188
        %v1192 = vadd.f32 %v1186, %v1189
        %v1193 = vmul.f32 %v1057, %v1124
        %v1194 = vmul.f32 %v1057, %v1125
        %v1195 = vmul.f32 %v1057, %v1126
        %v1196 = vmul.f32 %v1061, %v1139
        %v1197 = vmul.f32 %v1061, %v1140
        %v1198 = vmul.f32 %v1061, %v1141
        %v1199 = vadd.f32 %v1193, %v1196
        %v1200 = vadd.f32 %v1194, %v1197
        %v1201 = vadd.f32 %v1195, %v1198
        %v1202 = vmul.f32 %v1068, %v1154
        %v1203 = vmul.f32 %v1068, %v1155
        %v1204 = vmul.f32 %v1068, %v1156
        %v1205 = vadd.f32 %v1199, %v1202
        %v1206 = vadd.f32 %v1200, %v1203
        %v1207 = vadd.f32 %v1201, %v1204
        %v1208 = vmul.f32 %v1075, %v1169
        %v1209 = vmul.f32 %v1075, %v1170
        %v1210 = vmul.f32 %v1075, %v1171
        %v1211 = vadd.f32 %v1205, %v1208
        %v1212 = vadd.f32 %v1206, %v1209
        %v1213 = vadd.f32 %v1207, %v1210
        %v1214 = vmul.f32 %v1082, %v1190
        %v1215 = vmul.f32 %v1082, %v1191
        %v1216 = vmul.f32 %v1082, %v1192
        %v1217 = vmul.f32 %v1086, %v1211
        %v1218 = vmul.f32 %v1086, %v1212
        %v1219 = vmul.f32 %v1086, %v1213
        %v1220 = vadd.f32 %v1214, %v1217
        %v1221 = vadd.f32 %v1215, %v1218
        %v1222 = vadd.f32 %v1216, %v1219
        %v1223 = vadd.f32 %v1220, %v1093
        %v1224 = vadd.f32 %v1221, %v1093
        %v1225 = vadd.f32 %v1222, %v1093
        %v1226 = vmul.f32 %v1097, %v1190
        %v1227 = vmul.f32 %v1097, %v1191
        %v1228 = vmul.f32 %v1097, %v1192
        %v1229 = vmul.f32 %v1101, %v1211
        %v1230 = vmul.f32 %v1101, %v1212
        %v1231 = vmul.f32 %v1101, %v1213
        %v1232 = vadd.f32 %v1226, %v1229
        %v1233 = vadd.f32 %v1227, %v1230
        %v1234 = vadd.f32 %v1228, %v1231
        %v1235 = vadd.f32 %v1232, %v1108
        %v1236 = vadd.f32 %v1233, %v1108
        %v1237 = vadd.f32 %v1234, %v1108
        %1238 = vrot.lane.b32.xlu0 %v930, 127
        %v1239 = vpop.permute.xlu0 %1238
        %1240 = vrot.lane.b32.xlu0 %v932, 127
        %v1241 = vpop.permute.xlu0 %1240
        %1242 = vrot.lane.b32.xlu0 %v931, 127
        %v1243 = vpop.permute.xlu0 %1242
        %v1247 = vsub.f32 %v652, %v1239
        %v1248 = vsub.f32 %v653, %v1241
        %v1249 = vsub.f32 %v654, %v1243
        %vm1250 = vcmp.gt.f32.partialorder %v1247, 0.0
        %vm1251 = vcmp.gt.f32.partialorder %v1248, 0.0
        %vm1252 = vcmp.gt.f32.partialorder %v1249, 0.0
        %v1253 = vmul.f32 %v1247, 0.2
        %v1254 = vmul.f32 %v1248, 0.2
        %v1255 = vmul.f32 %v1249, 0.2
        %v1256 = vsel %vm1250, %v1247, %v1253
        %v1257 = vsel %vm1251, %v1248, %v1254
        %v1258 = vsel %vm1252, %v1249, %v1255
        %1259 = vrot.lane.b32.xlu0 %v956, 127
        %v1260 = vpop.permute.xlu0 %1259
        %1261 = vrot.lane.b32.xlu0 %v958, 127
        %v1262 = vpop.permute.xlu0 %1261
        %1263 = vrot.lane.b32.xlu0 %v957, 127
        %v1264 = vpop.permute.xlu0 %1263
        %v1268 = vsub.f32 %v681, %v1260
        %v1269 = vsub.f32 %v682, %v1262
        %v1270 = vsub.f32 %v683, %v1264
        %vm1271 = vcmp.gt.f32.partialorder %v1268, 0.0
        %vm1272 = vcmp.gt.f32.partialorder %v1269, 0.0
        %vm1273 = vcmp.gt.f32.partialorder %v1270, 0.0
        %v1274 = vmul.f32 %v1268, 0.2
        %v1275 = vmul.f32 %v1269, 0.2
        %v1276 = vmul.f32 %v1270, 0.2
        %v1277 = vsel %vm1271, %v1268, %v1274
        %v1278 = vsel %vm1272, %v1269, %v1275
        %v1279 = vsel %vm1273, %v1270, %v1276
        %1280 = vrot.lane.b32.xlu0 %v982, 127
        %v1281 = vpop.permute.xlu0 %1280
        %1282 = vrot.lane.b32.xlu0 %v984, 127
        %v1283 = vpop.permute.xlu0 %1282
        %1284 = vrot.lane.b32.xlu0 %v983, 127
        %v1285 = vpop.permute.xlu0 %1284
        %v1289 = vsub.f32 %v911, %v1281
        %v1290 = vsub.f32 %v912, %v1283
        %v1291 = vsub.f32 %v913, %v1285
        %vm1292 = vcmp.gt.f32.partialorder %v1289, 0.0
        %vm1293 = vcmp.gt.f32.partialorder %v1290, 0.0
        %vm1294 = vcmp.gt.f32.partialorder %v1291, 0.0
        %v1295 = vmul.f32 %v1289, 0.2
        %v1296 = vmul.f32 %v1290, 0.2
        %v1297 = vmul.f32 %v1291, 0.2
        %v1298 = vsel %vm1292, %v1289, %v1295
        %v1299 = vsel %vm1293, %v1290, %v1296
        %v1300 = vsel %vm1294, %v1291, %v1297
        %1301 = vrot.lane.b32.xlu0 %v1008, 127
        %v1302 = vpop.permute.xlu0 %1301
        %1303 = vrot.lane.b32.xlu0 %v1010, 127
        %v1304 = vpop.permute.xlu0 %1303
        %1305 = vrot.lane.b32.xlu0 %v1009, 127
        %v1306 = vpop.permute.xlu0 %1305
        %v1310 = vsub.f32 %v924, %v1302
        %v1311 = vsub.f32 %v925, %v1304
        %v1312 = vsub.f32 %v926, %v1306
        %vm1313 = vcmp.gt.f32.partialorder %v1310, 0.0
        %vm1314 = vcmp.gt.f32.partialorder %v1311, 0.0
        %vm1315 = vcmp.gt.f32.partialorder %v1312, 0.0
        %v1316 = vmul.f32 %v1310, 0.2
        %v1317 = vmul.f32 %v1311, 0.2
        %v1318 = vmul.f32 %v1312, 0.2
        %v1319 = vsel %vm1313, %v1310, %v1316
        %v1320 = vsel %vm1314, %v1311, %v1317
        %v1321 = vsel %vm1315, %v1312, %v1318
        %v1322 = vmul.f32 %v1032, %v1256
        %v1323 = vmul.f32 %v1032, %v1257
        %v1324 = vmul.f32 %v1032, %v1258
        %v1325 = vmul.f32 %v1036, %v1277
        %v1326 = vmul.f32 %v1036, %v1278
        %v1327 = vmul.f32 %v1036, %v1279
        %v1328 = vadd.f32 %v1322, %v1325
        %v1329 = vadd.f32 %v1323, %v1326
        %v1330 = vadd.f32 %v1324, %v1327
        %v1331 = vmul.f32 %v1043, %v1298
        %v1332 = vmul.f32 %v1043, %v1299
        %v1333 = vmul.f32 %v1043, %v1300
        %v1334 = vadd.f32 %v1328, %v1331
        %v1335 = vadd.f32 %v1329, %v1332
        %v1336 = vadd.f32 %v1330, %v1333
        %v1337 = vmul.f32 %v1050, %v1319
        %v1338 = vmul.f32 %v1050, %v1320
        %v1339 = vmul.f32 %v1050, %v1321
        %v1340 = vadd.f32 %v1334, %v1337
        %v1341 = vadd.f32 %v1335, %v1338
        %v1342 = vadd.f32 %v1336, %v1339
        %v1343 = vmul.f32 %v1057, %v1256
        %v1344 = vmul.f32 %v1057, %v1257
        %v1345 = vmul.f32 %v1057, %v1258
        %v1346 = vmul.f32 %v1061, %v1277
        %v1347 = vmul.f32 %v1061, %v1278
        %v1348 = vmul.f32 %v1061, %v1279
        %v1349 = vadd.f32 %v1343, %v1346
        %v1350 = vadd.f32 %v1344, %v1347
        %v1351 = vadd.f32 %v1345, %v1348
        %v1352 = vmul.f32 %v1068, %v1298
        %v1353 = vmul.f32 %v1068, %v1299
        %v1354 = vmul.f32 %v1068, %v1300
        %v1355 = vadd.f32 %v1349, %v1352
        %v1356 = vadd.f32 %v1350, %v1353
        %v1357 = vadd.f32 %v1351, %v1354
        %v1358 = vmul.f32 %v1075, %v1319
        %v1359 = vmul.f32 %v1075, %v1320
        %v1360 = vmul.f32 %v1075, %v1321
        %v1361 = vadd.f32 %v1355, %v1358
        %v1362 = vadd.f32 %v1356, %v1359
        %v1363 = vadd.f32 %v1357, %v1360
        %v1364 = vmul.f32 %v1082, %v1340
        %v1365 = vmul.f32 %v1082, %v1341
        %v1366 = vmul.f32 %v1082, %v1342
        %v1367 = vmul.f32 %v1086, %v1361
        %v1368 = vmul.f32 %v1086, %v1362
        %v1369 = vmul.f32 %v1086, %v1363
        %v1370 = vadd.f32 %v1364, %v1367
        %v1371 = vadd.f32 %v1365, %v1368
        %v1372 = vadd.f32 %v1366, %v1369
        %v1373 = vadd.f32 %v1370, %v1093
        %v1374 = vadd.f32 %v1371, %v1093
        %v1375 = vadd.f32 %v1372, %v1093
        %v1376 = vmul.f32 %v1097, %v1340
        %v1377 = vmul.f32 %v1097, %v1341
        %v1378 = vmul.f32 %v1097, %v1342
        %v1379 = vmul.f32 %v1101, %v1361
        %v1380 = vmul.f32 %v1101, %v1362
        %v1381 = vmul.f32 %v1101, %v1363
        %v1382 = vadd.f32 %v1376, %v1379
        %v1383 = vadd.f32 %v1377, %v1380
        %v1384 = vadd.f32 %v1378, %v1381
        %v1385 = vadd.f32 %v1382, %v1108
        %v1386 = vadd.f32 %v1383, %v1108
        %v1387 = vadd.f32 %v1384, %v1108
        %1389 = vrot.lane.b32.xlu0 %v710, 1
        %v1390 = vpop.permute.xlu0 %1389
        %1391 = vrot.lane.b32.xlu0 %v711, 1
        %v1392 = vpop.permute.xlu0 %1391
        %1393 = vrot.lane.b32.xlu0 %v712, 1
        %v1394 = vpop.permute.xlu0 %1393
        %v1398 = vsub.f32 %v652, %v1390
        %v1399 = vsub.f32 %v653, %v1392
        %v1400 = vsub.f32 %v654, %v1394
        %vm1401 = vcmp.gt.f32.partialorder %v1398, 0.0
        %vm1402 = vcmp.gt.f32.partialorder %v1399, 0.0
        %vm1403 = vcmp.gt.f32.partialorder %v1400, 0.0
        %v1404 = vmul.f32 %v1398, 0.2
        %v1405 = vmul.f32 %v1399, 0.2
        %v1406 = vmul.f32 %v1400, 0.2
        %v1407 = vsel %vm1401, %v1398, %v1404
        %v1408 = vsel %vm1402, %v1399, %v1405
        %v1409 = vsel %vm1403, %v1400, %v1406
        %1411 = vrot.lane.b32.xlu0 %v739, 1
        %v1412 = vpop.permute.xlu0 %1411
        %1413 = vrot.lane.b32.xlu0 %v740, 1
        %v1414 = vpop.permute.xlu0 %1413
        %1415 = vrot.lane.b32.xlu0 %v741, 1
        %v1416 = vpop.permute.xlu0 %1415
        %v1420 = vsub.f32 %v681, %v1412
        %v1421 = vsub.f32 %v682, %v1414
        %v1422 = vsub.f32 %v683, %v1416
        %vm1423 = vcmp.gt.f32.partialorder %v1420, 0.0
        %vm1424 = vcmp.gt.f32.partialorder %v1421, 0.0
        %vm1425 = vcmp.gt.f32.partialorder %v1422, 0.0
        %v1426 = vmul.f32 %v1420, 0.2
        %v1427 = vmul.f32 %v1421, 0.2
        %v1428 = vmul.f32 %v1422, 0.2
        %v1429 = vsel %vm1423, %v1420, %v1426
        %v1430 = vsel %vm1424, %v1421, %v1427
        %v1431 = vsel %vm1425, %v1422, %v1428
        %1433 = vrot.lane.b32.xlu0 %v911, 1
        %v1434 = vpop.permute.xlu0 %1433
        %1435 = vrot.lane.b32.xlu0 %v912, 1
        %v1436 = vpop.permute.xlu0 %1435
        %1437 = vrot.lane.b32.xlu0 %v913, 1
        %v1438 = vpop.permute.xlu0 %1437
        %v1442 = vsub.f32 %v911, %v1434
        %v1443 = vsub.f32 %v912, %v1436
        %v1444 = vsub.f32 %v913, %v1438
        %vm1445 = vcmp.gt.f32.partialorder %v1442, 0.0
        %vm1446 = vcmp.gt.f32.partialorder %v1443, 0.0
        %vm1447 = vcmp.gt.f32.partialorder %v1444, 0.0
        %v1448 = vmul.f32 %v1442, 0.2
        %v1449 = vmul.f32 %v1443, 0.2
        %v1450 = vmul.f32 %v1444, 0.2
        %v1451 = vsel %vm1445, %v1442, %v1448
        %v1452 = vsel %vm1446, %v1443, %v1449
        %v1453 = vsel %vm1447, %v1444, %v1450
        %1455 = vrot.lane.b32.xlu0 %v924, 1
        %v1456 = vpop.permute.xlu0 %1455
        %1457 = vrot.lane.b32.xlu0 %v925, 1
        %v1458 = vpop.permute.xlu0 %1457
        %1459 = vrot.lane.b32.xlu0 %v926, 1
        %v1460 = vpop.permute.xlu0 %1459
        %v1464 = vsub.f32 %v924, %v1456
        %v1465 = vsub.f32 %v925, %v1458
        %v1466 = vsub.f32 %v926, %v1460
        %vm1467 = vcmp.gt.f32.partialorder %v1464, 0.0
        %vm1468 = vcmp.gt.f32.partialorder %v1465, 0.0
        %vm1469 = vcmp.gt.f32.partialorder %v1466, 0.0
        %v1470 = vmul.f32 %v1464, 0.2
        %v1471 = vmul.f32 %v1465, 0.2
        %v1472 = vmul.f32 %v1466, 0.2
        %v1473 = vsel %vm1467, %v1464, %v1470
        %v1474 = vsel %vm1468, %v1465, %v1471
        %v1475 = vsel %vm1469, %v1466, %v1472
        %v1476 = vmul.f32 %v1032, %v1407
        %v1477 = vmul.f32 %v1032, %v1408
        %v1478 = vmul.f32 %v1032, %v1409
        %v1479 = vmul.f32 %v1036, %v1429
        %v1480 = vmul.f32 %v1036, %v1430
        %v1481 = vmul.f32 %v1036, %v1431
        %v1482 = vadd.f32 %v1476, %v1479
        %v1483 = vadd.f32 %v1477, %v1480
        %v1484 = vadd.f32 %v1478, %v1481
        %v1485 = vmul.f32 %v1043, %v1451
        %v1486 = vmul.f32 %v1043, %v1452
        %v1487 = vmul.f32 %v1043, %v1453
        %v1488 = vadd.f32 %v1482, %v1485
        %v1489 = vadd.f32 %v1483, %v1486
        %v1490 = vadd.f32 %v1484, %v1487
        %v1491 = vmul.f32 %v1050, %v1473
        %v1492 = vmul.f32 %v1050, %v1474
        %v1493 = vmul.f32 %v1050, %v1475
        %v1494 = vadd.f32 %v1488, %v1491
        %v1495 = vadd.f32 %v1489, %v1492
        %v1496 = vadd.f32 %v1490, %v1493
        %v1497 = vmul.f32 %v1057, %v1407
        %v1498 = vmul.f32 %v1057, %v1408
        %v1499 = vmul.f32 %v1057, %v1409
        %v1500 = vmul.f32 %v1061, %v1429
        %v1501 = vmul.f32 %v1061, %v1430
        %v1502 = vmul.f32 %v1061, %v1431
        %v1503 = vadd.f32 %v1497, %v1500
        %v1504 = vadd.f32 %v1498, %v1501
        %v1505 = vadd.f32 %v1499, %v1502
        %v1506 = vmul.f32 %v1068, %v1451
        %v1507 = vmul.f32 %v1068, %v1452
        %v1508 = vmul.f32 %v1068, %v1453
        %v1509 = vadd.f32 %v1503, %v1506
        %v1510 = vadd.f32 %v1504, %v1507
        %v1511 = vadd.f32 %v1505, %v1508
        %v1512 = vmul.f32 %v1075, %v1473
        %v1513 = vmul.f32 %v1075, %v1474
        %v1514 = vmul.f32 %v1075, %v1475
        %v1515 = vadd.f32 %v1509, %v1512
        %v1516 = vadd.f32 %v1510, %v1513
        %v1517 = vadd.f32 %v1511, %v1514
        %v1518 = vmul.f32 %v1082, %v1494
        %v1519 = vmul.f32 %v1082, %v1495
        %v1520 = vmul.f32 %v1082, %v1496
        %v1521 = vmul.f32 %v1086, %v1515
        %v1522 = vmul.f32 %v1086, %v1516
        %v1523 = vmul.f32 %v1086, %v1517
        %v1524 = vadd.f32 %v1518, %v1521
        %v1525 = vadd.f32 %v1519, %v1522
        %v1526 = vadd.f32 %v1520, %v1523
        %v1527 = vadd.f32 %v1524, %v1093
        %v1528 = vadd.f32 %v1525, %v1093
        %v1529 = vadd.f32 %v1526, %v1093
        %v1530 = vmul.f32 %v1097, %v1494
        %v1531 = vmul.f32 %v1097, %v1495
        %v1532 = vmul.f32 %v1097, %v1496
        %v1533 = vmul.f32 %v1101, %v1515
        %v1534 = vmul.f32 %v1101, %v1516
        %v1535 = vmul.f32 %v1101, %v1517
        %v1536 = vadd.f32 %v1530, %v1533
        %v1537 = vadd.f32 %v1531, %v1534
        %v1538 = vadd.f32 %v1532, %v1535
        %v1539 = vadd.f32 %v1536, %v1108
        %v1540 = vadd.f32 %v1537, %v1108
        %v1541 = vadd.f32 %v1538, %v1108
        %v1542 = vsub.f32 %v652, %v710
        %v1543 = vsub.f32 %v653, %v711
        %v1544 = vsub.f32 %v654, %v712
        %vm1545 = vcmp.gt.f32.partialorder %v1542, 0.0
        %vm1546 = vcmp.gt.f32.partialorder %v1543, 0.0
        %vm1547 = vcmp.gt.f32.partialorder %v1544, 0.0
        %v1548 = vmul.f32 %v1542, 0.2
        %v1549 = vmul.f32 %v1543, 0.2
        %v1550 = vmul.f32 %v1544, 0.2
        %v1551 = vsel %vm1545, %v1542, %v1548
        %v1552 = vsel %vm1546, %v1543, %v1549
        %v1553 = vsel %vm1547, %v1544, %v1550
        %v1554 = vsub.f32 %v681, %v739
        %v1555 = vsub.f32 %v682, %v740
        %v1556 = vsub.f32 %v683, %v741
        %vm1557 = vcmp.gt.f32.partialorder %v1554, 0.0
        %vm1558 = vcmp.gt.f32.partialorder %v1555, 0.0
        %vm1559 = vcmp.gt.f32.partialorder %v1556, 0.0
        %v1560 = vmul.f32 %v1554, 0.2
        %v1561 = vmul.f32 %v1555, 0.2
        %v1562 = vmul.f32 %v1556, 0.2
        %v1563 = vsel %vm1557, %v1554, %v1560
        %v1564 = vsel %vm1558, %v1555, %v1561
        %v1565 = vsel %vm1559, %v1556, %v1562
        %v1566 = vsub.f32 %v911, %v911
        %v1567 = vsub.f32 %v912, %v912
        %v1568 = vsub.f32 %v913, %v913
        %vm1569 = vcmp.gt.f32.partialorder %v1566, 0.0
        %vm1570 = vcmp.gt.f32.partialorder %v1567, 0.0
        %vm1571 = vcmp.gt.f32.partialorder %v1568, 0.0
        %v1572 = vmul.f32 %v1566, 0.2
        %v1573 = vmul.f32 %v1567, 0.2
        %v1574 = vmul.f32 %v1568, 0.2
        %v1575 = vsel %vm1569, %v1566, %v1572
        %v1576 = vsel %vm1570, %v1567, %v1573
        %v1577 = vsel %vm1571, %v1568, %v1574
        %v1578 = vsub.f32 %v924, %v924
        %v1579 = vsub.f32 %v925, %v925
        %v1580 = vsub.f32 %v926, %v926
        %vm1581 = vcmp.gt.f32.partialorder %v1578, 0.0
        %vm1582 = vcmp.gt.f32.partialorder %v1579, 0.0
        %vm1583 = vcmp.gt.f32.partialorder %v1580, 0.0
        %v1584 = vmul.f32 %v1578, 0.2
        %v1585 = vmul.f32 %v1579, 0.2
        %v1586 = vmul.f32 %v1580, 0.2
        %v1587 = vsel %vm1581, %v1578, %v1584
        %v1588 = vsel %vm1582, %v1579, %v1585
        %v1589 = vsel %vm1583, %v1580, %v1586
        %v1590 = vmul.f32 %v1032, %v1551
        %v1591 = vmul.f32 %v1032, %v1552
        %v1592 = vmul.f32 %v1032, %v1553
        %v1593 = vmul.f32 %v1036, %v1563
        %v1594 = vmul.f32 %v1036, %v1564
        %v1595 = vmul.f32 %v1036, %v1565
        %v1596 = vadd.f32 %v1590, %v1593
        %v1597 = vadd.f32 %v1591, %v1594
        %v1598 = vadd.f32 %v1592, %v1595
        %v1599 = vmul.f32 %v1043, %v1575
        %v1600 = vmul.f32 %v1043, %v1576
        %v1601 = vmul.f32 %v1043, %v1577
        %v1602 = vadd.f32 %v1596, %v1599
        %v1603 = vadd.f32 %v1597, %v1600
        %v1604 = vadd.f32 %v1598, %v1601
        %v1605 = vmul.f32 %v1050, %v1587
        %v1606 = vmul.f32 %v1050, %v1588
        %v1607 = vmul.f32 %v1050, %v1589
        %v1608 = vadd.f32 %v1602, %v1605
        %v1609 = vadd.f32 %v1603, %v1606
        %v1610 = vadd.f32 %v1604, %v1607
        %v1611 = vmul.f32 %v1057, %v1551
        %v1612 = vmul.f32 %v1057, %v1552
        %v1613 = vmul.f32 %v1057, %v1553
        %v1614 = vmul.f32 %v1061, %v1563
        %v1615 = vmul.f32 %v1061, %v1564
        %v1616 = vmul.f32 %v1061, %v1565
        %v1617 = vadd.f32 %v1611, %v1614
        %v1618 = vadd.f32 %v1612, %v1615
        %v1619 = vadd.f32 %v1613, %v1616
        %v1620 = vmul.f32 %v1068, %v1575
        %v1621 = vmul.f32 %v1068, %v1576
        %v1622 = vmul.f32 %v1068, %v1577
        %v1623 = vadd.f32 %v1617, %v1620
        %v1624 = vadd.f32 %v1618, %v1621
        %v1625 = vadd.f32 %v1619, %v1622
        %v1626 = vmul.f32 %v1075, %v1587
        %v1627 = vmul.f32 %v1075, %v1588
        %v1628 = vmul.f32 %v1075, %v1589
        %v1629 = vadd.f32 %v1623, %v1626
        %v1630 = vadd.f32 %v1624, %v1627
        %v1631 = vadd.f32 %v1625, %v1628
        %v1632 = vmul.f32 %v1082, %v1608
        %v1633 = vmul.f32 %v1082, %v1609
        %v1634 = vmul.f32 %v1082, %v1610
        %v1635 = vmul.f32 %v1086, %v1629
        %v1636 = vmul.f32 %v1086, %v1630
        %v1637 = vmul.f32 %v1086, %v1631
        %v1638 = vadd.f32 %v1632, %v1635
        %v1639 = vadd.f32 %v1633, %v1636
        %v1640 = vadd.f32 %v1634, %v1637
        %v1641 = vadd.f32 %v1638, %v1093
        %v1642 = vadd.f32 %v1639, %v1093
        %v1643 = vadd.f32 %v1640, %v1093
        %v1644 = vmul.f32 %v1097, %v1608
        %v1645 = vmul.f32 %v1097, %v1609
        %v1646 = vmul.f32 %v1097, %v1610
        %v1647 = vmul.f32 %v1101, %v1629
        %v1648 = vmul.f32 %v1101, %v1630
        %v1649 = vmul.f32 %v1101, %v1631
        %v1650 = vadd.f32 %v1644, %v1647
        %v1651 = vadd.f32 %v1645, %v1648
        %v1652 = vadd.f32 %v1646, %v1649
        %v1653 = vadd.f32 %v1650, %v1108
        %v1654 = vadd.f32 %v1651, %v1108
        %v1655 = vadd.f32 %v1652, %v1108
        %1656 = vrot.lane.b32.xlu0 %v710, 127
        %v1657 = vpop.permute.xlu0 %1656
        %1658 = vrot.lane.b32.xlu0 %v711, 127
        %v1659 = vpop.permute.xlu0 %1658
        %1660 = vrot.lane.b32.xlu0 %v712, 127
        %v1661 = vpop.permute.xlu0 %1660
        %v1665 = vsub.f32 %v652, %v1657
        %v1666 = vsub.f32 %v653, %v1659
        %v1667 = vsub.f32 %v654, %v1661
        %vm1668 = vcmp.gt.f32.partialorder %v1665, 0.0
        %vm1669 = vcmp.gt.f32.partialorder %v1666, 0.0
        %vm1670 = vcmp.gt.f32.partialorder %v1667, 0.0
        %v1671 = vmul.f32 %v1665, 0.2
        %v1672 = vmul.f32 %v1666, 0.2
        %v1673 = vmul.f32 %v1667, 0.2
        %v1674 = vsel %vm1668, %v1665, %v1671
        %v1675 = vsel %vm1669, %v1666, %v1672
        %v1676 = vsel %vm1670, %v1667, %v1673
        %1677 = vrot.lane.b32.xlu0 %v739, 127
        %v1678 = vpop.permute.xlu0 %1677
        %1679 = vrot.lane.b32.xlu0 %v740, 127
        %v1680 = vpop.permute.xlu0 %1679
        %1681 = vrot.lane.b32.xlu0 %v741, 127
        %v1682 = vpop.permute.xlu0 %1681
        %v1686 = vsub.f32 %v681, %v1678
        %v1687 = vsub.f32 %v682, %v1680
        %v1688 = vsub.f32 %v683, %v1682
        %vm1689 = vcmp.gt.f32.partialorder %v1686, 0.0
        %vm1690 = vcmp.gt.f32.partialorder %v1687, 0.0
        %vm1691 = vcmp.gt.f32.partialorder %v1688, 0.0
        %v1692 = vmul.f32 %v1686, 0.2
        %v1693 = vmul.f32 %v1687, 0.2
        %v1694 = vmul.f32 %v1688, 0.2
        %v1695 = vsel %vm1689, %v1686, %v1692
        %v1696 = vsel %vm1690, %v1687, %v1693
        %v1697 = vsel %vm1691, %v1688, %v1694
        %1698 = vrot.lane.b32.xlu0 %v911, 127
        %v1699 = vpop.permute.xlu0 %1698
        %1700 = vrot.lane.b32.xlu0 %v912, 127
        %v1701 = vpop.permute.xlu0 %1700
        %1702 = vrot.lane.b32.xlu0 %v913, 127
        %v1703 = vpop.permute.xlu0 %1702
        %v1707 = vsub.f32 %v911, %v1699
        %v1708 = vsub.f32 %v912, %v1701
        %v1709 = vsub.f32 %v913, %v1703
        %vm1710 = vcmp.gt.f32.partialorder %v1707, 0.0
        %vm1711 = vcmp.gt.f32.partialorder %v1708, 0.0
        %vm1712 = vcmp.gt.f32.partialorder %v1709, 0.0
        %v1713 = vmul.f32 %v1707, 0.2
        %v1714 = vmul.f32 %v1708, 0.2
        %v1715 = vmul.f32 %v1709, 0.2
        %v1716 = vsel %vm1710, %v1707, %v1713
        %v1717 = vsel %vm1711, %v1708, %v1714
        %v1718 = vsel %vm1712, %v1709, %v1715
        %1719 = vrot.lane.b32.xlu0 %v924, 127
        %v1720 = vpop.permute.xlu0 %1719
        %1721 = vrot.lane.b32.xlu0 %v925, 127
        %v1722 = vpop.permute.xlu0 %1721
        %1723 = vrot.lane.b32.xlu0 %v926, 127
        %v1724 = vpop.permute.xlu0 %1723
        %v1728 = vsub.f32 %v924, %v1720
        %v1729 = vsub.f32 %v925, %v1722
        %v1730 = vsub.f32 %v926, %v1724
        %vm1731 = vcmp.gt.f32.partialorder %v1728, 0.0
        %vm1732 = vcmp.gt.f32.partialorder %v1729, 0.0
        %vm1733 = vcmp.gt.f32.partialorder %v1730, 0.0
        %v1734 = vmul.f32 %v1728, 0.2
        %v1735 = vmul.f32 %v1729, 0.2
        %v1736 = vmul.f32 %v1730, 0.2
        %v1737 = vsel %vm1731, %v1728, %v1734
        %v1738 = vsel %vm1732, %v1729, %v1735
        %v1739 = vsel %vm1733, %v1730, %v1736
        %v1740 = vmul.f32 %v1032, %v1674
        %v1741 = vmul.f32 %v1032, %v1675
        %v1742 = vmul.f32 %v1032, %v1676
        %v1743 = vmul.f32 %v1036, %v1695
        %v1744 = vmul.f32 %v1036, %v1696
        %v1745 = vmul.f32 %v1036, %v1697
        %v1746 = vadd.f32 %v1740, %v1743
        %v1747 = vadd.f32 %v1741, %v1744
        %v1748 = vadd.f32 %v1742, %v1745
        %v1749 = vmul.f32 %v1043, %v1716
        %v1750 = vmul.f32 %v1043, %v1717
        %v1751 = vmul.f32 %v1043, %v1718
        %v1752 = vadd.f32 %v1746, %v1749
        %v1753 = vadd.f32 %v1747, %v1750
        %v1754 = vadd.f32 %v1748, %v1751
        %v1755 = vmul.f32 %v1050, %v1737
        %v1756 = vmul.f32 %v1050, %v1738
        %v1757 = vmul.f32 %v1050, %v1739
        %v1758 = vadd.f32 %v1752, %v1755
        %v1759 = vadd.f32 %v1753, %v1756
        %v1760 = vadd.f32 %v1754, %v1757
        %v1761 = vmul.f32 %v1057, %v1674
        %v1762 = vmul.f32 %v1057, %v1675
        %v1763 = vmul.f32 %v1057, %v1676
        %v1764 = vmul.f32 %v1061, %v1695
        %v1765 = vmul.f32 %v1061, %v1696
        %v1766 = vmul.f32 %v1061, %v1697
        %v1767 = vadd.f32 %v1761, %v1764
        %v1768 = vadd.f32 %v1762, %v1765
        %v1769 = vadd.f32 %v1763, %v1766
        %v1770 = vmul.f32 %v1068, %v1716
        %v1771 = vmul.f32 %v1068, %v1717
        %v1772 = vmul.f32 %v1068, %v1718
        %v1773 = vadd.f32 %v1767, %v1770
        %v1774 = vadd.f32 %v1768, %v1771
        %v1775 = vadd.f32 %v1769, %v1772
        %v1776 = vmul.f32 %v1075, %v1737
        %v1777 = vmul.f32 %v1075, %v1738
        %v1778 = vmul.f32 %v1075, %v1739
        %v1779 = vadd.f32 %v1773, %v1776
        %v1780 = vadd.f32 %v1774, %v1777
        %v1781 = vadd.f32 %v1775, %v1778
        %v1782 = vmul.f32 %v1082, %v1758
        %v1783 = vmul.f32 %v1082, %v1759
        %v1784 = vmul.f32 %v1082, %v1760
        %v1785 = vmul.f32 %v1086, %v1779
        %v1786 = vmul.f32 %v1086, %v1780
        %v1787 = vmul.f32 %v1086, %v1781
        %v1788 = vadd.f32 %v1782, %v1785
        %v1789 = vadd.f32 %v1783, %v1786
        %v1790 = vadd.f32 %v1784, %v1787
        %v1791 = vadd.f32 %v1788, %v1093
        %v1792 = vadd.f32 %v1789, %v1093
        %v1793 = vadd.f32 %v1790, %v1093
        %v1794 = vmul.f32 %v1097, %v1758
        %v1795 = vmul.f32 %v1097, %v1759
        %v1796 = vmul.f32 %v1097, %v1760
        %v1797 = vmul.f32 %v1101, %v1779
        %v1798 = vmul.f32 %v1101, %v1780
        %v1799 = vmul.f32 %v1101, %v1781
        %v1800 = vadd.f32 %v1794, %v1797
        %v1801 = vadd.f32 %v1795, %v1798
        %v1802 = vadd.f32 %v1796, %v1799
        %v1803 = vadd.f32 %v1800, %v1108
        %v1804 = vadd.f32 %v1801, %v1108
        %v1805 = vadd.f32 %v1802, %v1108
        %vm1806 = vcmask 1046528
        %v1807 = vrot.slane %v710, 1
        %v1808 = vrot.slane %v711, 1
        %v1809 = vsel %vm1806, %v1807, %v1808
        %v1810 = vrot.slane %v712, 1
        %v1811 = vsel %vm1806, %v1808, %v1810
        %1812 = vrot.lane.b32.xlu0 %v1809, 1
        %v1813 = vpop.permute.xlu0 %1812
        %1814 = vrot.lane.b32.xlu0 %v1811, 1
        %v1815 = vpop.permute.xlu0 %1814
        %1816 = vrot.lane.b32.xlu0 %v1810, 1
        %v1817 = vpop.permute.xlu0 %1816
        %v1821 = vsub.f32 %v652, %v1813
        %v1822 = vsub.f32 %v653, %v1815
        %v1823 = vsub.f32 %v654, %v1817
        %vm1824 = vcmp.gt.f32.partialorder %v1821, 0.0
        %vm1825 = vcmp.gt.f32.partialorder %v1822, 0.0
        %vm1826 = vcmp.gt.f32.partialorder %v1823, 0.0
        %v1827 = vmul.f32 %v1821, 0.2
        %v1828 = vmul.f32 %v1822, 0.2
        %v1829 = vmul.f32 %v1823, 0.2
        %v1830 = vsel %vm1824, %v1821, %v1827
        %v1831 = vsel %vm1825, %v1822, %v1828
        %v1832 = vsel %vm1826, %v1823, %v1829
        %v1833 = vrot.slane %v739, 1
        %v1834 = vrot.slane %v740, 1
        %v1835 = vsel %vm1806, %v1833, %v1834
        %v1836 = vrot.slane %v741, 1
        %v1837 = vsel %vm1806, %v1834, %v1836
        %1838 = vrot.lane.b32.xlu0 %v1835, 1
        %v1839 = vpop.permute.xlu0 %1838
        %1840 = vrot.lane.b32.xlu0 %v1837, 1
        %v1841 = vpop.permute.xlu0 %1840
        %1842 = vrot.lane.b32.xlu0 %v1836, 1
        %v1843 = vpop.permute.xlu0 %1842
        %v1847 = vsub.f32 %v681, %v1839
        %v1848 = vsub.f32 %v682, %v1841
        %v1849 = vsub.f32 %v683, %v1843
        %vm1850 = vcmp.gt.f32.partialorder %v1847, 0.0
        %vm1851 = vcmp.gt.f32.partialorder %v1848, 0.0
        %vm1852 = vcmp.gt.f32.partialorder %v1849, 0.0
        %v1853 = vmul.f32 %v1847, 0.2
        %v1854 = vmul.f32 %v1848, 0.2
        %v1855 = vmul.f32 %v1849, 0.2
        %v1856 = vsel %vm1850, %v1847, %v1853
        %v1857 = vsel %vm1851, %v1848, %v1854
        %v1858 = vsel %vm1852, %v1849, %v1855
        %v1859 = vrot.slane %v911, 1
        %v1860 = vrot.slane %v912, 1
        %v1861 = vsel %vm1806, %v1859, %v1860
        %v1862 = vrot.slane %v913, 1
        %v1863 = vsel %vm1806, %v1860, %v1862
        %1864 = vrot.lane.b32.xlu0 %v1861, 1
        %v1865 = vpop.permute.xlu0 %1864
        %1866 = vrot.lane.b32.xlu0 %v1863, 1
        %v1867 = vpop.permute.xlu0 %1866
        %1868 = vrot.lane.b32.xlu0 %v1862, 1
        %v1869 = vpop.permute.xlu0 %1868
        %v1873 = vsub.f32 %v911, %v1865
        %v1874 = vsub.f32 %v912, %v1867
        %v1875 = vsub.f32 %v913, %v1869
        %vm1876 = vcmp.gt.f32.partialorder %v1873, 0.0
        %vm1877 = vcmp.gt.f32.partialorder %v1874, 0.0
        %vm1878 = vcmp.gt.f32.partialorder %v1875, 0.0
        %v1879 = vmul.f32 %v1873, 0.2
        %v1880 = vmul.f32 %v1874, 0.2
        %v1881 = vmul.f32 %v1875, 0.2
        %v1882 = vsel %vm1876, %v1873, %v1879
        %v1883 = vsel %vm1877, %v1874, %v1880
        %v1884 = vsel %vm1878, %v1875, %v1881
        %v1885 = vrot.slane %v924, 1
        %v1886 = vrot.slane %v925, 1
        %v1887 = vsel %vm1806, %v1885, %v1886
        %v1888 = vrot.slane %v926, 1
        %v1889 = vsel %vm1806, %v1886, %v1888
        %1890 = vrot.lane.b32.xlu0 %v1887, 1
        %v1891 = vpop.permute.xlu0 %1890
        %1892 = vrot.lane.b32.xlu0 %v1889, 1
        %v1893 = vpop.permute.xlu0 %1892
        %1894 = vrot.lane.b32.xlu0 %v1888, 1
        %v1895 = vpop.permute.xlu0 %1894
        %v1899 = vsub.f32 %v924, %v1891
        %v1900 = vsub.f32 %v925, %v1893
        %v1901 = vsub.f32 %v926, %v1895
        %vm1902 = vcmp.gt.f32.partialorder %v1899, 0.0
        %vm1903 = vcmp.gt.f32.partialorder %v1900, 0.0
        %vm1904 = vcmp.gt.f32.partialorder %v1901, 0.0
        %v1905 = vmul.f32 %v1899, 0.2
        %v1906 = vmul.f32 %v1900, 0.2
        %v1907 = vmul.f32 %v1901, 0.2
        %v1908 = vsel %vm1902, %v1899, %v1905
        %v1909 = vsel %vm1903, %v1900, %v1906
        %v1910 = vsel %vm1904, %v1901, %v1907
        %v1911 = vmul.f32 %v1032, %v1830
        %v1912 = vmul.f32 %v1032, %v1831
        %v1913 = vmul.f32 %v1032, %v1832
        %v1914 = vmul.f32 %v1036, %v1856
        %v1915 = vmul.f32 %v1036, %v1857
        %v1916 = vmul.f32 %v1036, %v1858
        %v1917 = vadd.f32 %v1911, %v1914
        %v1918 = vadd.f32 %v1912, %v1915
        %v1919 = vadd.f32 %v1913, %v1916
        %v1920 = vmul.f32 %v1043, %v1882
        %v1921 = vmul.f32 %v1043, %v1883
        %v1922 = vmul.f32 %v1043, %v1884
        %v1923 = vadd.f32 %v1917, %v1920
        %v1924 = vadd.f32 %v1918, %v1921
        %v1925 = vadd.f32 %v1919, %v1922
        %v1926 = vmul.f32 %v1050, %v1908
        %v1927 = vmul.f32 %v1050, %v1909
        %v1928 = vmul.f32 %v1050, %v1910
        %v1929 = vadd.f32 %v1923, %v1926
        %v1930 = vadd.f32 %v1924, %v1927
        %v1931 = vadd.f32 %v1925, %v1928
        %v1932 = vmul.f32 %v1057, %v1830
        %v1933 = vmul.f32 %v1057, %v1831
        %v1934 = vmul.f32 %v1057, %v1832
        %v1935 = vmul.f32 %v1061, %v1856
        %v1936 = vmul.f32 %v1061, %v1857
        %v1937 = vmul.f32 %v1061, %v1858
        %v1938 = vadd.f32 %v1932, %v1935
        %v1939 = vadd.f32 %v1933, %v1936
        %v1940 = vadd.f32 %v1934, %v1937
        %v1941 = vmul.f32 %v1068, %v1882
        %v1942 = vmul.f32 %v1068, %v1883
        %v1943 = vmul.f32 %v1068, %v1884
        %v1944 = vadd.f32 %v1938, %v1941
        %v1945 = vadd.f32 %v1939, %v1942
        %v1946 = vadd.f32 %v1940, %v1943
        %v1947 = vmul.f32 %v1075, %v1908
        %v1948 = vmul.f32 %v1075, %v1909
        %v1949 = vmul.f32 %v1075, %v1910
        %v1950 = vadd.f32 %v1944, %v1947
        %v1951 = vadd.f32 %v1945, %v1948
        %v1952 = vadd.f32 %v1946, %v1949
        %v1953 = vmul.f32 %v1082, %v1929
        %v1954 = vmul.f32 %v1082, %v1930
        %v1955 = vmul.f32 %v1082, %v1931
        %v1956 = vmul.f32 %v1086, %v1950
        %v1957 = vmul.f32 %v1086, %v1951
        %v1958 = vmul.f32 %v1086, %v1952
        %v1959 = vadd.f32 %v1953, %v1956
        %v1960 = vadd.f32 %v1954, %v1957
        %v1961 = vadd.f32 %v1955, %v1958
        %v1962 = vadd.f32 %v1959, %v1093
        %v1963 = vadd.f32 %v1960, %v1093
        %v1964 = vadd.f32 %v1961, %v1093
        %v1965 = vmul.f32 %v1097, %v1929
        %v1966 = vmul.f32 %v1097, %v1930
        %v1967 = vmul.f32 %v1097, %v1931
        %v1968 = vmul.f32 %v1101, %v1950
        %v1969 = vmul.f32 %v1101, %v1951
        %v1970 = vmul.f32 %v1101, %v1952
        %v1971 = vadd.f32 %v1965, %v1968
        %v1972 = vadd.f32 %v1966, %v1969
        %v1973 = vadd.f32 %v1967, %v1970
        %v1974 = vadd.f32 %v1971, %v1108
        %v1975 = vadd.f32 %v1972, %v1108
        %v1976 = vadd.f32 %v1973, %v1108
        %v1980 = vsub.f32 %v652, %v1809
        %v1981 = vsub.f32 %v653, %v1811
        %v1982 = vsub.f32 %v654, %v1810
        %vm1983 = vcmp.gt.f32.partialorder %v1980, 0.0
        %vm1984 = vcmp.gt.f32.partialorder %v1981, 0.0
        %vm1985 = vcmp.gt.f32.partialorder %v1982, 0.0
        %v1986 = vmul.f32 %v1980, 0.2
        %v1987 = vmul.f32 %v1981, 0.2
        %v1988 = vmul.f32 %v1982, 0.2
        %v1989 = vsel %vm1983, %v1980, %v1986
        %v1990 = vsel %vm1984, %v1981, %v1987
        %v1991 = vsel %vm1985, %v1982, %v1988
        %v1995 = vsub.f32 %v681, %v1835
        %v1996 = vsub.f32 %v682, %v1837
        %v1997 = vsub.f32 %v683, %v1836
        %vm1998 = vcmp.gt.f32.partialorder %v1995, 0.0
        %vm1999 = vcmp.gt.f32.partialorder %v1996, 0.0
        %vm2000 = vcmp.gt.f32.partialorder %v1997, 0.0
        %v2001 = vmul.f32 %v1995, 0.2
        %v2002 = vmul.f32 %v1996, 0.2
        %v2003 = vmul.f32 %v1997, 0.2
        %v2004 = vsel %vm1998, %v1995, %v2001
        %v2005 = vsel %vm1999, %v1996, %v2002
        %v2006 = vsel %vm2000, %v1997, %v2003
        %v2010 = vsub.f32 %v911, %v1861
        %v2011 = vsub.f32 %v912, %v1863
        %v2012 = vsub.f32 %v913, %v1862
        %vm2013 = vcmp.gt.f32.partialorder %v2010, 0.0
        %vm2014 = vcmp.gt.f32.partialorder %v2011, 0.0
        %vm2015 = vcmp.gt.f32.partialorder %v2012, 0.0
        %v2016 = vmul.f32 %v2010, 0.2
        %v2017 = vmul.f32 %v2011, 0.2
        %v2018 = vmul.f32 %v2012, 0.2
        %v2019 = vsel %vm2013, %v2010, %v2016
        %v2020 = vsel %vm2014, %v2011, %v2017
        %v2021 = vsel %vm2015, %v2012, %v2018
        %v2025 = vsub.f32 %v924, %v1887
        %v2026 = vsub.f32 %v925, %v1889
        %v2027 = vsub.f32 %v926, %v1888
        %vm2028 = vcmp.gt.f32.partialorder %v2025, 0.0
        %vm2029 = vcmp.gt.f32.partialorder %v2026, 0.0
        %vm2030 = vcmp.gt.f32.partialorder %v2027, 0.0
        %v2031 = vmul.f32 %v2025, 0.2
        %v2032 = vmul.f32 %v2026, 0.2
        %v2033 = vmul.f32 %v2027, 0.2
        %v2034 = vsel %vm2028, %v2025, %v2031
        %v2035 = vsel %vm2029, %v2026, %v2032
        %v2036 = vsel %vm2030, %v2027, %v2033
        %v2037 = vmul.f32 %v1032, %v1989
        %v2038 = vmul.f32 %v1032, %v1990
        %v2039 = vmul.f32 %v1032, %v1991
        %v2040 = vmul.f32 %v1036, %v2004
        %v2041 = vmul.f32 %v1036, %v2005
        %v2042 = vmul.f32 %v1036, %v2006
        %v2043 = vadd.f32 %v2037, %v2040
        %v2044 = vadd.f32 %v2038, %v2041
        %v2045 = vadd.f32 %v2039, %v2042
        %v2046 = vmul.f32 %v1043, %v2019
        %v2047 = vmul.f32 %v1043, %v2020
        %v2048 = vmul.f32 %v1043, %v2021
        %v2049 = vadd.f32 %v2043, %v2046
        %v2050 = vadd.f32 %v2044, %v2047
        %v2051 = vadd.f32 %v2045, %v2048
        %v2052 = vmul.f32 %v1050, %v2034
        %v2053 = vmul.f32 %v1050, %v2035
        %v2054 = vmul.f32 %v1050, %v2036
        %v2055 = vadd.f32 %v2049, %v2052
        %v2056 = vadd.f32 %v2050, %v2053
        %v2057 = vadd.f32 %v2051, %v2054
        %v2058 = vmul.f32 %v1057, %v1989
        %v2059 = vmul.f32 %v1057, %v1990
        %v2060 = vmul.f32 %v1057, %v1991
        %v2061 = vmul.f32 %v1061, %v2004
        %v2062 = vmul.f32 %v1061, %v2005
        %v2063 = vmul.f32 %v1061, %v2006
        %v2064 = vadd.f32 %v2058, %v2061
        %v2065 = vadd.f32 %v2059, %v2062
        %v2066 = vadd.f32 %v2060, %v2063
        %v2067 = vmul.f32 %v1068, %v2019
        %v2068 = vmul.f32 %v1068, %v2020
        %v2069 = vmul.f32 %v1068, %v2021
        %v2070 = vadd.f32 %v2064, %v2067
        %v2071 = vadd.f32 %v2065, %v2068
        %v2072 = vadd.f32 %v2066, %v2069
        %v2073 = vmul.f32 %v1075, %v2034
        %v2074 = vmul.f32 %v1075, %v2035
        %v2075 = vmul.f32 %v1075, %v2036
        %v2076 = vadd.f32 %v2070, %v2073
        %v2077 = vadd.f32 %v2071, %v2074
        %v2078 = vadd.f32 %v2072, %v2075
        %v2079 = vmul.f32 %v1082, %v2055
        %v2080 = vmul.f32 %v1082, %v2056
        %v2081 = vmul.f32 %v1082, %v2057
        %v2082 = vmul.f32 %v1086, %v2076
        %v2083 = vmul.f32 %v1086, %v2077
        %v2084 = vmul.f32 %v1086, %v2078
        %v2085 = vadd.f32 %v2079, %v2082
        %v2086 = vadd.f32 %v2080, %v2083
        %v2087 = vadd.f32 %v2081, %v2084
        %v2088 = vadd.f32 %v2085, %v1093
        %v2089 = vadd.f32 %v2086, %v1093
        %v2090 = vadd.f32 %v2087, %v1093
        %v2091 = vmul.f32 %v1097, %v2055
        %v2092 = vmul.f32 %v1097, %v2056
        %v2093 = vmul.f32 %v1097, %v2057
        %v2094 = vmul.f32 %v1101, %v2076
        %v2095 = vmul.f32 %v1101, %v2077
        %v2096 = vmul.f32 %v1101, %v2078
        %v2097 = vadd.f32 %v2091, %v2094
        %v2098 = vadd.f32 %v2092, %v2095
        %v2099 = vadd.f32 %v2093, %v2096
        %v2100 = vadd.f32 %v2097, %v1108
        %v2101 = vadd.f32 %v2098, %v1108
        %v2102 = vadd.f32 %v2099, %v1108
        %2103 = vrot.lane.b32.xlu0 %v1809, 127
        %v2104 = vpop.permute.xlu0 %2103
        %2105 = vrot.lane.b32.xlu0 %v1811, 127
        %v2106 = vpop.permute.xlu0 %2105
        %2107 = vrot.lane.b32.xlu0 %v1810, 127
        %v2108 = vpop.permute.xlu0 %2107
        %v2112 = vsub.f32 %v652, %v2104
        %v2113 = vsub.f32 %v653, %v2106
        %v2114 = vsub.f32 %v654, %v2108
        %vm2115 = vcmp.gt.f32.partialorder %v2112, 0.0
        %vm2116 = vcmp.gt.f32.partialorder %v2113, 0.0
        %vm2117 = vcmp.gt.f32.partialorder %v2114, 0.0
        %v2118 = vmul.f32 %v2112, 0.2
        %v2119 = vmul.f32 %v2113, 0.2
        %v2120 = vmul.f32 %v2114, 0.2
        %v2121 = vsel %vm2115, %v2112, %v2118
        %v2122 = vsel %vm2116, %v2113, %v2119
        %v2123 = vsel %vm2117, %v2114, %v2120
        %2124 = vrot.lane.b32.xlu0 %v1835, 127
        %v2125 = vpop.permute.xlu0 %2124
        %2126 = vrot.lane.b32.xlu0 %v1837, 127
        %v2127 = vpop.permute.xlu0 %2126
        %2128 = vrot.lane.b32.xlu0 %v1836, 127
        %v2129 = vpop.permute.xlu0 %2128
        %v2133 = vsub.f32 %v681, %v2125
        %v2134 = vsub.f32 %v682, %v2127
        %v2135 = vsub.f32 %v683, %v2129
        %vm2136 = vcmp.gt.f32.partialorder %v2133, 0.0
        %vm2137 = vcmp.gt.f32.partialorder %v2134, 0.0
        %vm2138 = vcmp.gt.f32.partialorder %v2135, 0.0
        %v2139 = vmul.f32 %v2133, 0.2
        %v2140 = vmul.f32 %v2134, 0.2
        %v2141 = vmul.f32 %v2135, 0.2
        %v2142 = vsel %vm2136, %v2133, %v2139
        %v2143 = vsel %vm2137, %v2134, %v2140
        %v2144 = vsel %vm2138, %v2135, %v2141
        %2145 = vrot.lane.b32.xlu0 %v1861, 127
        %v2146 = vpop.permute.xlu0 %2145
        %2147 = vrot.lane.b32.xlu0 %v1863, 127
        %v2148 = vpop.permute.xlu0 %2147
        %2149 = vrot.lane.b32.xlu0 %v1862, 127
        %v2150 = vpop.permute.xlu0 %2149
        %v2154 = vsub.f32 %v911, %v2146
        %v2155 = vsub.f32 %v912, %v2148
        %v2156 = vsub.f32 %v913, %v2150
        %vm2157 = vcmp.gt.f32.partialorder %v2154, 0.0
        %vm2158 = vcmp.gt.f32.partialorder %v2155, 0.0
        %vm2159 = vcmp.gt.f32.partialorder %v2156, 0.0
        %v2160 = vmul.f32 %v2154, 0.2
        %v2161 = vmul.f32 %v2155, 0.2
        %v2162 = vmul.f32 %v2156, 0.2
        %v2163 = vsel %vm2157, %v2154, %v2160
        %v2164 = vsel %vm2158, %v2155, %v2161
        %v2165 = vsel %vm2159, %v2156, %v2162
        %2166 = vrot.lane.b32.xlu0 %v1887, 127
        %v2167 = vpop.permute.xlu0 %2166
        %2168 = vrot.lane.b32.xlu0 %v1889, 127
        %v2169 = vpop.permute.xlu0 %2168
        %2170 = vrot.lane.b32.xlu0 %v1888, 127
        %v2171 = vpop.permute.xlu0 %2170
        %v2175 = vsub.f32 %v924, %v2167
        %v2176 = vsub.f32 %v925, %v2169
        %v2177 = vsub.f32 %v926, %v2171
        %vm2178 = vcmp.gt.f32.partialorder %v2175, 0.0
        %vm2179 = vcmp.gt.f32.partialorder %v2176, 0.0
        %vm2180 = vcmp.gt.f32.partialorder %v2177, 0.0
        %v2181 = vmul.f32 %v2175, 0.2
        %v2182 = vmul.f32 %v2176, 0.2
        %v2183 = vmul.f32 %v2177, 0.2
        %v2184 = vsel %vm2178, %v2175, %v2181
        %v2185 = vsel %vm2179, %v2176, %v2182
        %v2186 = vsel %vm2180, %v2177, %v2183
        %v2187 = vmul.f32 %v1032, %v2121
        %v2188 = vmul.f32 %v1032, %v2122
        %v2189 = vmul.f32 %v1032, %v2123
        %v2190 = vmul.f32 %v1036, %v2142
        %v2191 = vmul.f32 %v1036, %v2143
        %v2192 = vmul.f32 %v1036, %v2144
        %v2193 = vadd.f32 %v2187, %v2190
        %v2194 = vadd.f32 %v2188, %v2191
        %v2195 = vadd.f32 %v2189, %v2192
        %v2196 = vmul.f32 %v1043, %v2163
        %v2197 = vmul.f32 %v1043, %v2164
        %v2198 = vmul.f32 %v1043, %v2165
        %v2199 = vadd.f32 %v2193, %v2196
        %v2200 = vadd.f32 %v2194, %v2197
        %v2201 = vadd.f32 %v2195, %v2198
        %v2202 = vmul.f32 %v1050, %v2184
        %v2203 = vmul.f32 %v1050, %v2185
        %v2204 = vmul.f32 %v1050, %v2186
        %v2205 = vadd.f32 %v2199, %v2202
        %v2206 = vadd.f32 %v2200, %v2203
        %v2207 = vadd.f32 %v2201, %v2204
        %v2208 = vmul.f32 %v1057, %v2121
        %v2209 = vmul.f32 %v1057, %v2122
        %v2210 = vmul.f32 %v1057, %v2123
        %v2211 = vmul.f32 %v1061, %v2142
        %v2212 = vmul.f32 %v1061, %v2143
        %v2213 = vmul.f32 %v1061, %v2144
        %v2214 = vadd.f32 %v2208, %v2211
        %v2215 = vadd.f32 %v2209, %v2212
        %v2216 = vadd.f32 %v2210, %v2213
        %v2217 = vmul.f32 %v1068, %v2163
        %v2218 = vmul.f32 %v1068, %v2164
        %v2219 = vmul.f32 %v1068, %v2165
        %v2220 = vadd.f32 %v2214, %v2217
        %v2221 = vadd.f32 %v2215, %v2218
        %v2222 = vadd.f32 %v2216, %v2219
        %v2223 = vmul.f32 %v1075, %v2184
        %v2224 = vmul.f32 %v1075, %v2185
        %v2225 = vmul.f32 %v1075, %v2186
        %v2226 = vadd.f32 %v2220, %v2223
        %v2227 = vadd.f32 %v2221, %v2224
        %v2228 = vadd.f32 %v2222, %v2225
        %v2229 = vmul.f32 %v1082, %v2205
        %v2230 = vmul.f32 %v1082, %v2206
        %v2231 = vmul.f32 %v1082, %v2207
        %v2232 = vmul.f32 %v1086, %v2226
        %v2233 = vmul.f32 %v1086, %v2227
        %v2234 = vmul.f32 %v1086, %v2228
        %v2235 = vadd.f32 %v2229, %v2232
        %v2236 = vadd.f32 %v2230, %v2233
        %v2237 = vadd.f32 %v2231, %v2234
        %v2238 = vadd.f32 %v2235, %v1093
        %v2239 = vadd.f32 %v2236, %v1093
        %v2240 = vadd.f32 %v2237, %v1093
        %v2241 = vmul.f32 %v1097, %v2205
        %v2242 = vmul.f32 %v1097, %v2206
        %v2243 = vmul.f32 %v1097, %v2207
        %v2244 = vmul.f32 %v1101, %v2226
        %v2245 = vmul.f32 %v1101, %v2227
        %v2246 = vmul.f32 %v1101, %v2228
        %v2247 = vadd.f32 %v2241, %v2244
        %v2248 = vadd.f32 %v2242, %v2245
        %v2249 = vadd.f32 %v2243, %v2246
        %v2250 = vadd.f32 %v2247, %v1108
        %v2251 = vadd.f32 %v2248, %v1108
        %v2252 = vadd.f32 %v2249, %v1108
        %v2253 = vmax.f32 %v1094, %v1223
        %v2254 = vmax.f32 %v1095, %v1224
        %v2255 = vmax.f32 %v1096, %v1225
        %v2256 = vmax.f32 %v2253, %v1373
        %v2257 = vmax.f32 %v2254, %v1374
        %v2258 = vmax.f32 %v2255, %v1375
        %v2259 = vmax.f32 %v2256, %v1527
        %v2260 = vmax.f32 %v2257, %v1528
        %v2261 = vmax.f32 %v2258, %v1529
        %v2262 = vmax.f32 %v2259, %v1641
        %v2263 = vmax.f32 %v2260, %v1642
        %v2264 = vmax.f32 %v2261, %v1643
        %v2265 = vmax.f32 %v2262, %v1791
        %v2266 = vmax.f32 %v2263, %v1792
        %v2267 = vmax.f32 %v2264, %v1793
        %v2268 = vmax.f32 %v2265, %v1962
        %v2269 = vmax.f32 %v2266, %v1963
        %v2270 = vmax.f32 %v2267, %v1964
        %v2271 = vmax.f32 %v2268, %v2088
        %v2272 = vmax.f32 %v2269, %v2089
        %v2273 = vmax.f32 %v2270, %v2090
        %v2274 = vmax.f32 %v2271, %v2238
        %v2275 = vmax.f32 %v2272, %v2239
        %v2276 = vmax.f32 %v2273, %v2240
        %v2277 = vsub.f32 %v1094, %v2274
        %v2278 = vsub.f32 %v1095, %v2275
        %v2279 = vsub.f32 %v1096, %v2276
        %v2280 = vmul.f32 %v2277, 1.442695
        %v2281 = vpow.pop %v2280
        %v2282 = vmul.f32 %v2278, 1.442695
        %v2283 = vpow.pop %v2282
        %v2284 = vmul.f32 %v2279, 1.442695
        %v2285 = vpow.pop %v2284
        %v2286 = vsub.f32 %v1223, %v2274
        %v2287 = vsub.f32 %v1224, %v2275
        %v2288 = vsub.f32 %v1225, %v2276
        %v2289 = vmul.f32 %v2286, 1.442695
        %v2290 = vpow.pop %v2289
        %v2291 = vmul.f32 %v2287, 1.442695
        %v2292 = vpow.pop %v2291
        %v2293 = vmul.f32 %v2288, 1.442695
        %v2294 = vpow.pop %v2293
        %v2295 = vsub.f32 %v1373, %v2274
        %v2296 = vsub.f32 %v1374, %v2275
        %v2297 = vsub.f32 %v1375, %v2276
        %v2298 = vmul.f32 %v2295, 1.442695
        %v2299 = vpow.pop %v2298
        %v2300 = vmul.f32 %v2296, 1.442695
        %v2301 = vpow.pop %v2300
        %v2302 = vmul.f32 %v2297, 1.442695
        %v2303 = vpow.pop %v2302
        %v2304 = vsub.f32 %v1527, %v2274
        %v2305 = vsub.f32 %v1528, %v2275
        %v2306 = vsub.f32 %v1529, %v2276
        %v2307 = vmul.f32 %v2304, 1.442695
        %v2308 = vpow.pop %v2307
        %v2309 = vmul.f32 %v2305, 1.442695
        %v2310 = vpow.pop %v2309
        %v2311 = vmul.f32 %v2306, 1.442695
        %v2312 = vpow.pop %v2311
        %v2313 = vsub.f32 %v1641, %v2274
        %v2314 = vsub.f32 %v1642, %v2275
        %v2315 = vsub.f32 %v1643, %v2276
        %v2316 = vmul.f32 %v2313, 1.442695
        %v2317 = vpow.pop %v2316
        %v2318 = vmul.f32 %v2314, 1.442695
        %v2319 = vpow.pop %v2318
        %v2320 = vmul.f32 %v2315, 1.442695
        %v2321 = vpow.pop %v2320
        %v2322 = vsub.f32 %v1791, %v2274
        %v2323 = vsub.f32 %v1792, %v2275
        %v2324 = vsub.f32 %v1793, %v2276
        %v2325 = vmul.f32 %v2322, 1.442695
        %v2326 = vpow.pop %v2325
        %v2327 = vmul.f32 %v2323, 1.442695
        %v2328 = vpow.pop %v2327
        %v2329 = vmul.f32 %v2324, 1.442695
        %v2330 = vpow.pop %v2329
        %v2331 = vsub.f32 %v1962, %v2274
        %v2332 = vsub.f32 %v1963, %v2275
        %v2333 = vsub.f32 %v1964, %v2276
        %v2334 = vmul.f32 %v2331, 1.442695
        %v2335 = vpow.pop %v2334
        %v2336 = vmul.f32 %v2332, 1.442695
        %v2337 = vpow.pop %v2336
        %v2338 = vmul.f32 %v2333, 1.442695
        %v2339 = vpow.pop %v2338
        %v2340 = vsub.f32 %v2088, %v2274
        %v2341 = vsub.f32 %v2089, %v2275
        %v2342 = vsub.f32 %v2090, %v2276
        %v2343 = vmul.f32 %v2340, 1.442695
        %v2344 = vpow.pop %v2343
        %v2345 = vmul.f32 %v2341, 1.442695
        %v2346 = vpow.pop %v2345
        %v2347 = vmul.f32 %v2342, 1.442695
        %v2348 = vpow.pop %v2347
        %v2349 = vsub.f32 %v2238, %v2274
        %v2350 = vsub.f32 %v2239, %v2275
        %v2351 = vsub.f32 %v2240, %v2276
        %v2352 = vmul.f32 %v2349, 1.442695
        %v2353 = vpow.pop %v2352
        %v2354 = vmul.f32 %v2350, 1.442695
        %v2355 = vpow.pop %v2354
        %v2356 = vmul.f32 %v2351, 1.442695
        %v2357 = vpow.pop %v2356
        %v2358 = vadd.f32 %v2281, %v2290
        %v2359 = vadd.f32 %v2283, %v2292
        %v2360 = vadd.f32 %v2285, %v2294
        %v2361 = vadd.f32 %v2358, %v2299
        %v2362 = vadd.f32 %v2359, %v2301
        %v2363 = vadd.f32 %v2360, %v2303
        %v2364 = vadd.f32 %v2361, %v2308
        %v2365 = vadd.f32 %v2362, %v2310
        %v2366 = vadd.f32 %v2363, %v2312
        %v2367 = vadd.f32 %v2364, %v2317
        %v2368 = vadd.f32 %v2365, %v2319
        %v2369 = vadd.f32 %v2366, %v2321
        %v2370 = vadd.f32 %v2367, %v2326
        %v2371 = vadd.f32 %v2368, %v2328
        %v2372 = vadd.f32 %v2369, %v2330
        %v2373 = vadd.f32 %v2370, %v2335
        %v2374 = vadd.f32 %v2371, %v2337
        %v2375 = vadd.f32 %v2372, %v2339
        %v2376 = vadd.f32 %v2373, %v2344
        %v2377 = vadd.f32 %v2374, %v2346
        %v2378 = vadd.f32 %v2375, %v2348
        %v2379 = vadd.f32 %v2376, %v2353
        %v2380 = vadd.f32 %v2377, %v2355
        %v2381 = vadd.f32 %v2378, %v2357
        %v2382 = vrcp.pop %v2379
        %v2383 = vmul.f32 1.0, %v2382
        %v2384 = vrcp.pop %v2380
        %v2385 = vmul.f32 1.0, %v2384
        %v2386 = vrcp.pop %v2381
        %v2387 = vmul.f32 1.0, %v2386
        %v2388 = vmul.f32 %v2281, %v2383
        %v2389 = vmul.f32 %v2283, %v2385
        %v2390 = vmul.f32 %v2285, %v2387
        %v2391 = vmul.f32 %v2290, %v2383
        %v2392 = vmul.f32 %v2292, %v2385
        %v2393 = vmul.f32 %v2294, %v2387
        %v2394 = vmul.f32 %v2299, %v2383
        %v2395 = vmul.f32 %v2301, %v2385
        %v2396 = vmul.f32 %v2303, %v2387
        %v2397 = vmul.f32 %v2308, %v2383
        %v2398 = vmul.f32 %v2310, %v2385
        %v2399 = vmul.f32 %v2312, %v2387
        %v2400 = vmul.f32 %v2317, %v2383
        %v2401 = vmul.f32 %v2319, %v2385
        %v2402 = vmul.f32 %v2321, %v2387
        %v2403 = vmul.f32 %v2326, %v2383
        %v2404 = vmul.f32 %v2328, %v2385
        %v2405 = vmul.f32 %v2330, %v2387
        %v2406 = vmul.f32 %v2335, %v2383
        %v2407 = vmul.f32 %v2337, %v2385
        %v2408 = vmul.f32 %v2339, %v2387
        %v2409 = vmul.f32 %v2344, %v2383
        %v2410 = vmul.f32 %v2346, %v2385
        %v2411 = vmul.f32 %v2348, %v2387
        %v2412 = vmul.f32 %v2353, %v2383
        %v2413 = vmul.f32 %v2355, %v2385
        %v2414 = vmul.f32 %v2357, %v2387
        %v2417 = vrot.slane %v768, 7
        %v2418 = vrot.slane %v769, 7
        %v2419 = vsel %vm929, %v2417, %v2418
        %2420 = vrot.lane.b32.xlu0 %v2417, 1
        %v2421 = vpop.permute.xlu0 %2420
        %2422 = vrot.lane.b32.xlu0 %v2419, 1
        %v2423 = vpop.permute.xlu0 %2422
        %2424 = vrot.lane.b32.xlu0 %v2418, 1
        %v2425 = vpop.permute.xlu0 %2424
        %v2429 = vmul.f32 %v2388, %v2421
        %v2430 = vmul.f32 %v2389, %v2423
        %v2431 = vmul.f32 %v2390, %v2425
        %v2435 = vmul.f32 %v2391, %v2417
        %v2436 = vmul.f32 %v2392, %v2419
        %v2437 = vmul.f32 %v2393, %v2418
        %v2438 = vadd.f32 %v2429, %v2435
        %v2439 = vadd.f32 %v2430, %v2436
        %v2440 = vadd.f32 %v2431, %v2437
        %2441 = vrot.lane.b32.xlu0 %v2417, 127
        %v2442 = vpop.permute.xlu0 %2441
        %2443 = vrot.lane.b32.xlu0 %v2419, 127
        %v2444 = vpop.permute.xlu0 %2443
        %2445 = vrot.lane.b32.xlu0 %v2418, 127
        %v2446 = vpop.permute.xlu0 %2445
        %v2450 = vmul.f32 %v2394, %v2442
        %v2451 = vmul.f32 %v2395, %v2444
        %v2452 = vmul.f32 %v2396, %v2446
        %v2453 = vadd.f32 %v2438, %v2450
        %v2454 = vadd.f32 %v2439, %v2451
        %v2455 = vadd.f32 %v2440, %v2452
        %2457 = vrot.lane.b32.xlu0 %v768, 1
        %v2458 = vpop.permute.xlu0 %2457
        %2459 = vrot.lane.b32.xlu0 %v769, 1
        %v2460 = vpop.permute.xlu0 %2459
        %2461 = vrot.lane.b32.xlu0 %v770, 1
        %v2462 = vpop.permute.xlu0 %2461
        %v2466 = vmul.f32 %v2397, %v2458
        %v2467 = vmul.f32 %v2398, %v2460
        %v2468 = vmul.f32 %v2399, %v2462
        %v2469 = vadd.f32 %v2453, %v2466
        %v2470 = vadd.f32 %v2454, %v2467
        %v2471 = vadd.f32 %v2455, %v2468
        %v2472 = vmul.f32 %v2400, %v768
        %v2473 = vmul.f32 %v2401, %v769
        %v2474 = vmul.f32 %v2402, %v770
        %v2475 = vadd.f32 %v2469, %v2472
        %v2476 = vadd.f32 %v2470, %v2473
        %v2477 = vadd.f32 %v2471, %v2474
        %2478 = vrot.lane.b32.xlu0 %v768, 127
        %v2479 = vpop.permute.xlu0 %2478
        %2480 = vrot.lane.b32.xlu0 %v769, 127
        %v2481 = vpop.permute.xlu0 %2480
        %2482 = vrot.lane.b32.xlu0 %v770, 127
        %v2483 = vpop.permute.xlu0 %2482
        %v2487 = vmul.f32 %v2403, %v2479
        %v2488 = vmul.f32 %v2404, %v2481
        %v2489 = vmul.f32 %v2405, %v2483
        %v2490 = vadd.f32 %v2475, %v2487
        %v2491 = vadd.f32 %v2476, %v2488
        %v2492 = vadd.f32 %v2477, %v2489
        %v2493 = vrot.slane %v768, 1
        %v2494 = vrot.slane %v769, 1
        %v2495 = vsel %vm1806, %v2493, %v2494
        %v2496 = vrot.slane %v770, 1
        %v2497 = vsel %vm1806, %v2494, %v2496
        %2498 = vrot.lane.b32.xlu0 %v2495, 1
        %v2499 = vpop.permute.xlu0 %2498
        %2500 = vrot.lane.b32.xlu0 %v2497, 1
        %v2501 = vpop.permute.xlu0 %2500
        %2502 = vrot.lane.b32.xlu0 %v2496, 1
        %v2503 = vpop.permute.xlu0 %2502
        %v2507 = vmul.f32 %v2406, %v2499
        %v2508 = vmul.f32 %v2407, %v2501
        %v2509 = vmul.f32 %v2408, %v2503
        %v2510 = vadd.f32 %v2490, %v2507
        %v2511 = vadd.f32 %v2491, %v2508
        %v2512 = vadd.f32 %v2492, %v2509
        %v2516 = vmul.f32 %v2409, %v2495
        %v2517 = vmul.f32 %v2410, %v2497
        %v2518 = vmul.f32 %v2411, %v2496
        %v2519 = vadd.f32 %v2510, %v2516
        %v2520 = vadd.f32 %v2511, %v2517
        %v2521 = vadd.f32 %v2512, %v2518
        %2522 = vrot.lane.b32.xlu0 %v2495, 127
        %v2523 = vpop.permute.xlu0 %2522
        %2524 = vrot.lane.b32.xlu0 %v2497, 127
        %v2525 = vpop.permute.xlu0 %2524
        %2526 = vrot.lane.b32.xlu0 %v2496, 127
        %v2527 = vpop.permute.xlu0 %2526
        %v2531 = vmul.f32 %v2412, %v2523
        %v2532 = vmul.f32 %v2413, %v2525
        %v2533 = vmul.f32 %v2414, %v2527
        %v2534 = vadd.f32 %v2519, %v2531
        %v2535 = vadd.f32 %v2520, %v2532
        %v2536 = vadd.f32 %v2521, %v2533
        %2540 = vrot.lane.b32.xlu0 %v2534, 127
        %v2541 = vpop.permute.xlu0 %2540
        %2542 = vrot.lane.b32.xlu0 %v2535, 127
        %v2543 = vpop.permute.xlu0 %2542
        %2544 = vrot.lane.b32.xlu0 %v2536, 127
        %v2545 = vpop.permute.xlu0 %2544
        %vm2549 = vcmask 130049
        %2550 = vst.msk [vmem:[%s545 - $0x1] sm:$0xfe] %vm2549, %v2541
        %vm2551 = vcmask 130048
        %2552 = vst.msk [vmem:[%s545 + $0x7] sm:$0xff] %vm2551, %v2543
        %vm2553 = vcmask 122880
        %2554 = vst.msk [vmem:[%s545 + $0xf] sm:$0x1] %vm2553, %v2545
        %v2557 = vrot.slane %v826, 7
        %v2558 = vrot.slane %v827, 7
        %v2559 = vsel %vm929, %v2557, %v2558
        %2560 = vrot.lane.b32.xlu0 %v2557, 1
        %v2561 = vpop.permute.xlu0 %2560
        %2562 = vrot.lane.b32.xlu0 %v2559, 1
        %v2563 = vpop.permute.xlu0 %2562
        %2564 = vrot.lane.b32.xlu0 %v2558, 1
        %v2565 = vpop.permute.xlu0 %2564
        %v2569 = vmul.f32 %v2388, %v2561
        %v2570 = vmul.f32 %v2389, %v2563
        %v2571 = vmul.f32 %v2390, %v2565
        %v2575 = vmul.f32 %v2391, %v2557
        %v2576 = vmul.f32 %v2392, %v2559
        %v2577 = vmul.f32 %v2393, %v2558
        %v2578 = vadd.f32 %v2569, %v2575
        %v2579 = vadd.f32 %v2570, %v2576
        %v2580 = vadd.f32 %v2571, %v2577
        %2581 = vrot.lane.b32.xlu0 %v2557, 127
        %v2582 = vpop.permute.xlu0 %2581
        %2583 = vrot.lane.b32.xlu0 %v2559, 127
        %v2584 = vpop.permute.xlu0 %2583
        %2585 = vrot.lane.b32.xlu0 %v2558, 127
        %v2586 = vpop.permute.xlu0 %2585
        %v2590 = vmul.f32 %v2394, %v2582
        %v2591 = vmul.f32 %v2395, %v2584
        %v2592 = vmul.f32 %v2396, %v2586
        %v2593 = vadd.f32 %v2578, %v2590
        %v2594 = vadd.f32 %v2579, %v2591
        %v2595 = vadd.f32 %v2580, %v2592
        %2597 = vrot.lane.b32.xlu0 %v826, 1
        %v2598 = vpop.permute.xlu0 %2597
        %2599 = vrot.lane.b32.xlu0 %v827, 1
        %v2600 = vpop.permute.xlu0 %2599
        %2601 = vrot.lane.b32.xlu0 %v828, 1
        %v2602 = vpop.permute.xlu0 %2601
        %v2606 = vmul.f32 %v2397, %v2598
        %v2607 = vmul.f32 %v2398, %v2600
        %v2608 = vmul.f32 %v2399, %v2602
        %v2609 = vadd.f32 %v2593, %v2606
        %v2610 = vadd.f32 %v2594, %v2607
        %v2611 = vadd.f32 %v2595, %v2608
        %v2612 = vmul.f32 %v2400, %v826
        %v2613 = vmul.f32 %v2401, %v827
        %v2614 = vmul.f32 %v2402, %v828
        %v2615 = vadd.f32 %v2609, %v2612
        %v2616 = vadd.f32 %v2610, %v2613
        %v2617 = vadd.f32 %v2611, %v2614
        %2618 = vrot.lane.b32.xlu0 %v826, 127
        %v2619 = vpop.permute.xlu0 %2618
        %2620 = vrot.lane.b32.xlu0 %v827, 127
        %v2621 = vpop.permute.xlu0 %2620
        %2622 = vrot.lane.b32.xlu0 %v828, 127
        %v2623 = vpop.permute.xlu0 %2622
        %v2627 = vmul.f32 %v2403, %v2619
        %v2628 = vmul.f32 %v2404, %v2621
        %v2629 = vmul.f32 %v2405, %v2623
        %v2630 = vadd.f32 %v2615, %v2627
        %v2631 = vadd.f32 %v2616, %v2628
        %v2632 = vadd.f32 %v2617, %v2629
        %v2633 = vrot.slane %v826, 1
        %v2634 = vrot.slane %v827, 1
        %v2635 = vsel %vm1806, %v2633, %v2634
        %v2636 = vrot.slane %v828, 1
        %v2637 = vsel %vm1806, %v2634, %v2636
        %2638 = vrot.lane.b32.xlu0 %v2635, 1
        %v2639 = vpop.permute.xlu0 %2638
        %2640 = vrot.lane.b32.xlu0 %v2637, 1
        %v2641 = vpop.permute.xlu0 %2640
        %2642 = vrot.lane.b32.xlu0 %v2636, 1
        %v2643 = vpop.permute.xlu0 %2642
        %v2647 = vmul.f32 %v2406, %v2639
        %v2648 = vmul.f32 %v2407, %v2641
        %v2649 = vmul.f32 %v2408, %v2643
        %v2650 = vadd.f32 %v2630, %v2647
        %v2651 = vadd.f32 %v2631, %v2648
        %v2652 = vadd.f32 %v2632, %v2649
        %v2656 = vmul.f32 %v2409, %v2635
        %v2657 = vmul.f32 %v2410, %v2637
        %v2658 = vmul.f32 %v2411, %v2636
        %v2659 = vadd.f32 %v2650, %v2656
        %v2660 = vadd.f32 %v2651, %v2657
        %v2661 = vadd.f32 %v2652, %v2658
        %2662 = vrot.lane.b32.xlu0 %v2635, 127
        %v2663 = vpop.permute.xlu0 %2662
        %2664 = vrot.lane.b32.xlu0 %v2637, 127
        %v2665 = vpop.permute.xlu0 %2664
        %2666 = vrot.lane.b32.xlu0 %v2636, 127
        %v2667 = vpop.permute.xlu0 %2666
        %v2671 = vmul.f32 %v2412, %v2663
        %v2672 = vmul.f32 %v2413, %v2665
        %v2673 = vmul.f32 %v2414, %v2667
        %v2674 = vadd.f32 %v2659, %v2671
        %v2675 = vadd.f32 %v2660, %v2672
        %v2676 = vadd.f32 %v2661, %v2673
        %2680 = vrot.lane.b32.xlu0 %v2674, 127
        %v2681 = vpop.permute.xlu0 %2680
        %2682 = vrot.lane.b32.xlu0 %v2675, 127
        %v2683 = vpop.permute.xlu0 %2682
        %2684 = vrot.lane.b32.xlu0 %v2676, 127
        %v2685 = vpop.permute.xlu0 %2684
        %s2689 = scalar_lea.vmem %s545, 32 [#allocation20]
        %2690 = vst.msk [vmem:[%s2689 - $0x1] sm:$0xfe] %vm2549, %v2681
        %2691 = vst.msk [vmem:[%s2689 + $0x7] sm:$0xff] %vm2551, %v2683
        %2692 = vst.msk [vmem:[%s2689 + $0xf] sm:$0x1] %vm2553, %v2685
        %v2693 = vmax.f32 %v1109, %v1235
        %v2694 = vmax.f32 %v1110, %v1236
        %v2695 = vmax.f32 %v1111, %v1237
        %v2696 = vmax.f32 %v2693, %v1385
        %v2697 = vmax.f32 %v2694, %v1386
        %v2698 = vmax.f32 %v2695, %v1387
        %v2699 = vmax.f32 %v2696, %v1539
        %v2700 = vmax.f32 %v2697, %v1540
        %v2701 = vmax.f32 %v2698, %v1541
        %v2702 = vmax.f32 %v2699, %v1653
        %v2703 = vmax.f32 %v2700, %v1654
        %v2704 = vmax.f32 %v2701, %v1655
        %v2705 = vmax.f32 %v2702, %v1803
        %v2706 = vmax.f32 %v2703, %v1804
        %v2707 = vmax.f32 %v2704, %v1805
        %v2708 = vmax.f32 %v2705, %v1974
        %v2709 = vmax.f32 %v2706, %v1975
        %v2710 = vmax.f32 %v2707, %v1976
        %v2711 = vmax.f32 %v2708, %v2100
        %v2712 = vmax.f32 %v2709, %v2101
        %v2713 = vmax.f32 %v2710, %v2102
        %v2714 = vmax.f32 %v2711, %v2250
        %v2715 = vmax.f32 %v2712, %v2251
        %v2716 = vmax.f32 %v2713, %v2252
        %v2717 = vsub.f32 %v1109, %v2714
        %v2718 = vsub.f32 %v1110, %v2715
        %v2719 = vsub.f32 %v1111, %v2716
        %v2720 = vmul.f32 %v2717, 1.442695
        %v2721 = vpow.pop %v2720
        %v2722 = vmul.f32 %v2718, 1.442695
        %v2723 = vpow.pop %v2722
        %v2724 = vmul.f32 %v2719, 1.442695
        %v2725 = vpow.pop %v2724
        %v2726 = vsub.f32 %v1235, %v2714
        %v2727 = vsub.f32 %v1236, %v2715
        %v2728 = vsub.f32 %v1237, %v2716
        %v2729 = vmul.f32 %v2726, 1.442695
        %v2730 = vpow.pop %v2729
        %v2731 = vmul.f32 %v2727, 1.442695
        %v2732 = vpow.pop %v2731
        %v2733 = vmul.f32 %v2728, 1.442695
        %v2734 = vpow.pop %v2733
        %v2735 = vsub.f32 %v1385, %v2714
        %v2736 = vsub.f32 %v1386, %v2715
        %v2737 = vsub.f32 %v1387, %v2716
        %v2738 = vmul.f32 %v2735, 1.442695
        %v2739 = vpow.pop %v2738
        %v2740 = vmul.f32 %v2736, 1.442695
        %v2741 = vpow.pop %v2740
        %v2742 = vmul.f32 %v2737, 1.442695
        %v2743 = vpow.pop %v2742
        %v2744 = vsub.f32 %v1539, %v2714
        %v2745 = vsub.f32 %v1540, %v2715
        %v2746 = vsub.f32 %v1541, %v2716
        %v2747 = vmul.f32 %v2744, 1.442695
        %v2748 = vpow.pop %v2747
        %v2749 = vmul.f32 %v2745, 1.442695
        %v2750 = vpow.pop %v2749
        %v2751 = vmul.f32 %v2746, 1.442695
        %v2752 = vpow.pop %v2751
        %v2753 = vsub.f32 %v1653, %v2714
        %v2754 = vsub.f32 %v1654, %v2715
        %v2755 = vsub.f32 %v1655, %v2716
        %v2756 = vmul.f32 %v2753, 1.442695
        %v2757 = vpow.pop %v2756
        %v2758 = vmul.f32 %v2754, 1.442695
        %v2759 = vpow.pop %v2758
        %v2760 = vmul.f32 %v2755, 1.442695
        %v2761 = vpow.pop %v2760
        %v2762 = vsub.f32 %v1803, %v2714
        %v2763 = vsub.f32 %v1804, %v2715
        %v2764 = vsub.f32 %v1805, %v2716
        %v2765 = vmul.f32 %v2762, 1.442695
        %v2766 = vpow.pop %v2765
        %v2767 = vmul.f32 %v2763, 1.442695
        %v2768 = vpow.pop %v2767
        %v2769 = vmul.f32 %v2764, 1.442695
        %v2770 = vpow.pop %v2769
        %v2771 = vsub.f32 %v1974, %v2714
        %v2772 = vsub.f32 %v1975, %v2715
        %v2773 = vsub.f32 %v1976, %v2716
        %v2774 = vmul.f32 %v2771, 1.442695
        %v2775 = vpow.pop %v2774
        %v2776 = vmul.f32 %v2772, 1.442695
        %v2777 = vpow.pop %v2776
        %v2778 = vmul.f32 %v2773, 1.442695
        %v2779 = vpow.pop %v2778
        %v2780 = vsub.f32 %v2100, %v2714
        %v2781 = vsub.f32 %v2101, %v2715
        %v2782 = vsub.f32 %v2102, %v2716
        %v2783 = vmul.f32 %v2780, 1.442695
        %v2784 = vpow.pop %v2783
        %v2785 = vmul.f32 %v2781, 1.442695
        %v2786 = vpow.pop %v2785
        %v2787 = vmul.f32 %v2782, 1.442695
        %v2788 = vpow.pop %v2787
        %v2789 = vsub.f32 %v2250, %v2714
        %v2790 = vsub.f32 %v2251, %v2715
        %v2791 = vsub.f32 %v2252, %v2716
        %v2792 = vmul.f32 %v2789, 1.442695
        %v2793 = vpow.pop %v2792
        %v2794 = vmul.f32 %v2790, 1.442695
        %v2795 = vpow.pop %v2794
        %v2796 = vmul.f32 %v2791, 1.442695
        %v2797 = vpow.pop %v2796
        %v2798 = vadd.f32 %v2721, %v2730
        %v2799 = vadd.f32 %v2723, %v2732
        %v2800 = vadd.f32 %v2725, %v2734
        %v2801 = vadd.f32 %v2798, %v2739
        %v2802 = vadd.f32 %v2799, %v2741
        %v2803 = vadd.f32 %v2800, %v2743
        %v2804 = vadd.f32 %v2801, %v2748
        %v2805 = vadd.f32 %v2802, %v2750
        %v2806 = vadd.f32 %v2803, %v2752
        %v2807 = vadd.f32 %v2804, %v2757
        %v2808 = vadd.f32 %v2805, %v2759
        %v2809 = vadd.f32 %v2806, %v2761
        %v2810 = vadd.f32 %v2807, %v2766
        %v2811 = vadd.f32 %v2808, %v2768
        %v2812 = vadd.f32 %v2809, %v2770
        %v2813 = vadd.f32 %v2810, %v2775
        %v2814 = vadd.f32 %v2811, %v2777
        %v2815 = vadd.f32 %v2812, %v2779
        %v2816 = vadd.f32 %v2813, %v2784
        %v2817 = vadd.f32 %v2814, %v2786
        %v2818 = vadd.f32 %v2815, %v2788
        %v2819 = vadd.f32 %v2816, %v2793
        %v2820 = vadd.f32 %v2817, %v2795
        %v2821 = vadd.f32 %v2818, %v2797
        %v2822 = vrcp.pop %v2819
        %v2823 = vmul.f32 1.0, %v2822
        %v2824 = vrcp.pop %v2820
        %v2825 = vmul.f32 1.0, %v2824
        %v2826 = vrcp.pop %v2821
        %v2827 = vmul.f32 1.0, %v2826
        %v2828 = vmul.f32 %v2721, %v2823
        %v2829 = vmul.f32 %v2723, %v2825
        %v2830 = vmul.f32 %v2725, %v2827
        %v2831 = vmul.f32 %v2730, %v2823
        %v2832 = vmul.f32 %v2732, %v2825
        %v2833 = vmul.f32 %v2734, %v2827
        %v2834 = vmul.f32 %v2739, %v2823
        %v2835 = vmul.f32 %v2741, %v2825
        %v2836 = vmul.f32 %v2743, %v2827
        %v2837 = vmul.f32 %v2748, %v2823
        %v2838 = vmul.f32 %v2750, %v2825
        %v2839 = vmul.f32 %v2752, %v2827
        %v2840 = vmul.f32 %v2757, %v2823
        %v2841 = vmul.f32 %v2759, %v2825
        %v2842 = vmul.f32 %v2761, %v2827
        %v2843 = vmul.f32 %v2766, %v2823
        %v2844 = vmul.f32 %v2768, %v2825
        %v2845 = vmul.f32 %v2770, %v2827
        %v2846 = vmul.f32 %v2775, %v2823
        %v2847 = vmul.f32 %v2777, %v2825
        %v2848 = vmul.f32 %v2779, %v2827
        %v2849 = vmul.f32 %v2784, %v2823
        %v2850 = vmul.f32 %v2786, %v2825
        %v2851 = vmul.f32 %v2788, %v2827
        %v2852 = vmul.f32 %v2793, %v2823
        %v2853 = vmul.f32 %v2795, %v2825
        %v2854 = vmul.f32 %v2797, %v2827
        %v2857 = vrot.slane %v797, 7
        %v2858 = vrot.slane %v798, 7
        %v2859 = vsel %vm929, %v2857, %v2858
        %2860 = vrot.lane.b32.xlu0 %v2857, 1
        %v2861 = vpop.permute.xlu0 %2860
        %2862 = vrot.lane.b32.xlu0 %v2859, 1
        %v2863 = vpop.permute.xlu0 %2862
        %2864 = vrot.lane.b32.xlu0 %v2858, 1
        %v2865 = vpop.permute.xlu0 %2864
        %v2869 = vmul.f32 %v2828, %v2861
        %v2870 = vmul.f32 %v2829, %v2863
        %v2871 = vmul.f32 %v2830, %v2865
        %v2875 = vmul.f32 %v2831, %v2857
        %v2876 = vmul.f32 %v2832, %v2859
        %v2877 = vmul.f32 %v2833, %v2858
        %v2878 = vadd.f32 %v2869, %v2875
        %v2879 = vadd.f32 %v2870, %v2876
        %v2880 = vadd.f32 %v2871, %v2877
        %2881 = vrot.lane.b32.xlu0 %v2857, 127
        %v2882 = vpop.permute.xlu0 %2881
        %2883 = vrot.lane.b32.xlu0 %v2859, 127
        %v2884 = vpop.permute.xlu0 %2883
        %2885 = vrot.lane.b32.xlu0 %v2858, 127
        %v2886 = vpop.permute.xlu0 %2885
        %v2890 = vmul.f32 %v2834, %v2882
        %v2891 = vmul.f32 %v2835, %v2884
        %v2892 = vmul.f32 %v2836, %v2886
        %v2893 = vadd.f32 %v2878, %v2890
        %v2894 = vadd.f32 %v2879, %v2891
        %v2895 = vadd.f32 %v2880, %v2892
        %2897 = vrot.lane.b32.xlu0 %v797, 1
        %v2898 = vpop.permute.xlu0 %2897
        %2899 = vrot.lane.b32.xlu0 %v798, 1
        %v2900 = vpop.permute.xlu0 %2899
        %2901 = vrot.lane.b32.xlu0 %v799, 1
        %v2902 = vpop.permute.xlu0 %2901
        %v2906 = vmul.f32 %v2837, %v2898
        %v2907 = vmul.f32 %v2838, %v2900
        %v2908 = vmul.f32 %v2839, %v2902
        %v2909 = vadd.f32 %v2893, %v2906
        %v2910 = vadd.f32 %v2894, %v2907
        %v2911 = vadd.f32 %v2895, %v2908
        %v2912 = vmul.f32 %v2840, %v797
        %v2913 = vmul.f32 %v2841, %v798
        %v2914 = vmul.f32 %v2842, %v799
        %v2915 = vadd.f32 %v2909, %v2912
        %v2916 = vadd.f32 %v2910, %v2913
        %v2917 = vadd.f32 %v2911, %v2914
        %2918 = vrot.lane.b32.xlu0 %v797, 127
        %v2919 = vpop.permute.xlu0 %2918
        %2920 = vrot.lane.b32.xlu0 %v798, 127
        %v2921 = vpop.permute.xlu0 %2920
        %2922 = vrot.lane.b32.xlu0 %v799, 127
        %v2923 = vpop.permute.xlu0 %2922
        %v2927 = vmul.f32 %v2843, %v2919
        %v2928 = vmul.f32 %v2844, %v2921
        %v2929 = vmul.f32 %v2845, %v2923
        %v2930 = vadd.f32 %v2915, %v2927
        %v2931 = vadd.f32 %v2916, %v2928
        %v2932 = vadd.f32 %v2917, %v2929
        %v2933 = vrot.slane %v797, 1
        %v2934 = vrot.slane %v798, 1
        %v2935 = vsel %vm1806, %v2933, %v2934
        %v2936 = vrot.slane %v799, 1
        %v2937 = vsel %vm1806, %v2934, %v2936
        %2938 = vrot.lane.b32.xlu0 %v2935, 1
        %v2939 = vpop.permute.xlu0 %2938
        %2940 = vrot.lane.b32.xlu0 %v2937, 1
        %v2941 = vpop.permute.xlu0 %2940
        %2942 = vrot.lane.b32.xlu0 %v2936, 1
        %v2943 = vpop.permute.xlu0 %2942
        %v2947 = vmul.f32 %v2846, %v2939
        %v2948 = vmul.f32 %v2847, %v2941
        %v2949 = vmul.f32 %v2848, %v2943
        %v2950 = vadd.f32 %v2930, %v2947
        %v2951 = vadd.f32 %v2931, %v2948
        %v2952 = vadd.f32 %v2932, %v2949
        %v2956 = vmul.f32 %v2849, %v2935
        %v2957 = vmul.f32 %v2850, %v2937
        %v2958 = vmul.f32 %v2851, %v2936
        %v2959 = vadd.f32 %v2950, %v2956
        %v2960 = vadd.f32 %v2951, %v2957
        %v2961 = vadd.f32 %v2952, %v2958
        %2962 = vrot.lane.b32.xlu0 %v2935, 127
        %v2963 = vpop.permute.xlu0 %2962
        %2964 = vrot.lane.b32.xlu0 %v2937, 127
        %v2965 = vpop.permute.xlu0 %2964
        %2966 = vrot.lane.b32.xlu0 %v2936, 127
        %v2967 = vpop.permute.xlu0 %2966
        %v2971 = vmul.f32 %v2852, %v2963
        %v2972 = vmul.f32 %v2853, %v2965
        %v2973 = vmul.f32 %v2854, %v2967
        %v2974 = vadd.f32 %v2959, %v2971
        %v2975 = vadd.f32 %v2960, %v2972
        %v2976 = vadd.f32 %v2961, %v2973
        %2980 = vrot.lane.b32.xlu0 %v2974, 127
        %v2981 = vpop.permute.xlu0 %2980
        %2982 = vrot.lane.b32.xlu0 %v2975, 127
        %v2983 = vpop.permute.xlu0 %2982
        %2984 = vrot.lane.b32.xlu0 %v2976, 127
        %v2985 = vpop.permute.xlu0 %2984
        %s2989 = scalar_lea.vmem %s545, 16 [#allocation20]
        %2990 = vst.msk [vmem:[%s2989 - $0x1] sm:$0xfe] %vm2549, %v2981
        %2991 = vst.msk [vmem:[%s2989 + $0x7] sm:$0xff] %vm2551, %v2983
        %2992 = vst.msk [vmem:[%s2989 + $0xf] sm:$0x1] %vm2553, %v2985
        %v2995 = vrot.slane %v855, 7
        %v2996 = vrot.slane %v856, 7
        %v2997 = vsel %vm929, %v2995, %v2996
        %2998 = vrot.lane.b32.xlu0 %v2995, 1
        %v2999 = vpop.permute.xlu0 %2998
        %3000 = vrot.lane.b32.xlu0 %v2997, 1
        %v3001 = vpop.permute.xlu0 %3000
        %3002 = vrot.lane.b32.xlu0 %v2996, 1
        %v3003 = vpop.permute.xlu0 %3002
        %v3007 = vmul.f32 %v2828, %v2999
        %v3008 = vmul.f32 %v2829, %v3001
        %v3009 = vmul.f32 %v2830, %v3003
        %v3013 = vmul.f32 %v2831, %v2995
        %v3014 = vmul.f32 %v2832, %v2997
        %v3015 = vmul.f32 %v2833, %v2996
        %v3016 = vadd.f32 %v3007, %v3013
        %v3017 = vadd.f32 %v3008, %v3014
        %v3018 = vadd.f32 %v3009, %v3015
        %3019 = vrot.lane.b32.xlu0 %v2995, 127
        %v3020 = vpop.permute.xlu0 %3019
        %3021 = vrot.lane.b32.xlu0 %v2997, 127
        %v3022 = vpop.permute.xlu0 %3021
        %3023 = vrot.lane.b32.xlu0 %v2996, 127
        %v3024 = vpop.permute.xlu0 %3023
        %v3028 = vmul.f32 %v2834, %v3020
        %v3029 = vmul.f32 %v2835, %v3022
        %v3030 = vmul.f32 %v2836, %v3024
        %v3031 = vadd.f32 %v3016, %v3028
        %v3032 = vadd.f32 %v3017, %v3029
        %v3033 = vadd.f32 %v3018, %v3030
        %3035 = vrot.lane.b32.xlu0 %v855, 1
        %v3036 = vpop.permute.xlu0 %3035
        %3037 = vrot.lane.b32.xlu0 %v856, 1
        %v3038 = vpop.permute.xlu0 %3037
        %3039 = vrot.lane.b32.xlu0 %v857, 1
        %v3040 = vpop.permute.xlu0 %3039
        %v3044 = vmul.f32 %v2837, %v3036
        %v3045 = vmul.f32 %v2838, %v3038
        %v3046 = vmul.f32 %v2839, %v3040
        %v3047 = vadd.f32 %v3031, %v3044
        %v3048 = vadd.f32 %v3032, %v3045
        %v3049 = vadd.f32 %v3033, %v3046
        %v3050 = vmul.f32 %v2840, %v855
        %v3051 = vmul.f32 %v2841, %v856
        %v3052 = vmul.f32 %v2842, %v857
        %v3053 = vadd.f32 %v3047, %v3050
        %v3054 = vadd.f32 %v3048, %v3051
        %v3055 = vadd.f32 %v3049, %v3052
        %3056 = vrot.lane.b32.xlu0 %v855, 127
        %v3057 = vpop.permute.xlu0 %3056
        %3058 = vrot.lane.b32.xlu0 %v856, 127
        %v3059 = vpop.permute.xlu0 %3058
        %3060 = vrot.lane.b32.xlu0 %v857, 127
        %v3061 = vpop.permute.xlu0 %3060
        %v3065 = vmul.f32 %v2843, %v3057
        %v3066 = vmul.f32 %v2844, %v3059
        %v3067 = vmul.f32 %v2845, %v3061
        %v3068 = vadd.f32 %v3053, %v3065
        %v3069 = vadd.f32 %v3054, %v3066
        %v3070 = vadd.f32 %v3055, %v3067
        %v3071 = vrot.slane %v855, 1
        %v3072 = vrot.slane %v856, 1
        %v3073 = vsel %vm1806, %v3071, %v3072
        %v3074 = vrot.slane %v857, 1
        %v3075 = vsel %vm1806, %v3072, %v3074
        %3076 = vrot.lane.b32.xlu0 %v3073, 1
        %v3077 = vpop.permute.xlu0 %3076
        %3078 = vrot.lane.b32.xlu0 %v3075, 1
        %v3079 = vpop.permute.xlu0 %3078
        %3080 = vrot.lane.b32.xlu0 %v3074, 1
        %v3081 = vpop.permute.xlu0 %3080
        %v3085 = vmul.f32 %v2846, %v3077
        %v3086 = vmul.f32 %v2847, %v3079
        %v3087 = vmul.f32 %v2848, %v3081
        %v3088 = vadd.f32 %v3068, %v3085
        %v3089 = vadd.f32 %v3069, %v3086
        %v3090 = vadd.f32 %v3070, %v3087
        %v3094 = vmul.f32 %v2849, %v3073
        %v3095 = vmul.f32 %v2850, %v3075
        %v3096 = vmul.f32 %v2851, %v3074
        %v3097 = vadd.f32 %v3088, %v3094
        %v3098 = vadd.f32 %v3089, %v3095
        %v3099 = vadd.f32 %v3090, %v3096
        %3100 = vrot.lane.b32.xlu0 %v3073, 127
        %v3101 = vpop.permute.xlu0 %3100
        %3102 = vrot.lane.b32.xlu0 %v3075, 127
        %v3103 = vpop.permute.xlu0 %3102
        %3104 = vrot.lane.b32.xlu0 %v3074, 127
        %v3105 = vpop.permute.xlu0 %3104
        %v3109 = vmul.f32 %v2852, %v3101
        %v3110 = vmul.f32 %v2853, %v3103
        %v3111 = vmul.f32 %v2854, %v3105
        %v3112 = vadd.f32 %v3097, %v3109
        %v3113 = vadd.f32 %v3098, %v3110
        %v3114 = vadd.f32 %v3099, %v3111
        %3118 = vrot.lane.b32.xlu0 %v3112, 127
        %v3119 = vpop.permute.xlu0 %3118
        %3120 = vrot.lane.b32.xlu0 %v3113, 127
        %v3121 = vpop.permute.xlu0 %3120
        %3122 = vrot.lane.b32.xlu0 %v3114, 127
        %v3123 = vpop.permute.xlu0 %3122
        %s3127 = scalar_lea.vmem %s545, 48 [#allocation20]
        %3128 = vst.msk [vmem:[%s3127 - $0x1] sm:$0xfe] %vm2549, %v3119
        %3129 = vst.msk [vmem:[%s3127 + $0x7] sm:$0xff] %vm2551, %v3121
        %3130 = vst.msk [vmem:[%s3127 + $0xf] sm:$0x1] %vm2553, %v3123
        %s3131 = sand.u32 %s297, 1
        %s3132 = scalar_lea.sflag [#allocation3], %s3131
        %s3133 = sand.u32 %s297, 1
        %s3134 = smul.addr %s3133, 64
        %s3135 = scalar_lea.vmem [#allocation20], %s3134
        // Predicated region
        $region113: #{_lambda_.1} parent=67 // pred_check
          %p3136 = pneg %p307
        $region114: #{_lambda_.1} parent=67 // pred_check_branch
          %3138 = sbr.rel (%p3136) target = $region116
        $region115: #{_lambda_.1} parent=67 // pred_region
          %s3140 = ssub.s32 1024, 1024
          %3141 = vsyncadd %s3132, %s3140
          %s3142 = smul.addr %s32, 8
          %s3143 = smul.addr %s3142, 128
          %s3144 = scalar_lea.hbm %s12, %s3143
          %s3145 = sshll.u32 %s3135, 4
          %s3146 = int_to_ptr.vmem [resolvable:$true] %s3145
          %3151 = dma.vmem_to_hbm [thread:$0]  %s3146, 1024, %s3144, %s3132, 128, 128, 8
        $region116: #{_lambda_.1} parent=67 // pred_fallthru
          _
      $region68: #{_lambda_.1} parent=5 // pred_fallthru
        _
      %p3152 = scmp.le.s32.totalorder 2, %s27
      // Predicated region
      $region117: #{_lambda_.1} parent=5 // pred_check
        %p3153 = pneg %p3152
      $region118: #{_lambda_.1} parent=5 // pred_check_branch
        %3155 = sbr.rel (%p3153) target = $region120
      $region119: #{_lambda_.1} parent=5 // pred_region
        %s3156 = ssub.s32 %s27, 2
        // Predicated region
        $region121: #{_lambda_.1} parent=119 // pred_check
          %p3157 = pneg %p313
        $region122: #{_lambda_.1} parent=119 // pred_check_branch
          %3159 = sbr.rel (%p3157) target = $region124
        $region123: #{_lambda_.1} parent=119 // pred_region
          %s3160 = sand.u32 %s298, 1
          %s3161 = scalar_lea.sflag [#allocation3], %s3160
          %s3162 = sand.u32 %s298, 1
          %s3163 = smul.addr %s3162, 64
          %s3164 = scalar_lea.vmem [#allocation20], %s3163
          %3165 = dma.done %s3161, 1024
        $region124: #{_lambda_.1} parent=119 // pred_fallthru
          _
      $region120: #{_lambda_.1} parent=5 // pred_fallthru
        _
    $region6: #{_lambda_.1} parent=1 // loop_footer
      %s31 = sadd.s32 1, %s27
    $region7: #{_lambda_.1} parent=1 // loop_footer_branch
      %26 = sbr.rel target = $region3
    $region8: #{_lambda_.1} parent=1 // loop_exit
      _
    %3166 = vsyncpa [#allocation3], 1
    %s3167 = scalar_lea.sflag [#allocation3], 1
    %3168 = vsyncpa %s3167, 1
    %3169 = vsyncpa [#allocation4], 1
    %s3170 = scalar_lea.sflag [#allocation4], 1
    %3171 = vsyncpa %s3170, 1
    %3172 = vsyncpa [#allocation6], 1
    %3173 = vsyncpa [#allocation9], 1
    %3174 = vsyncpa [#allocation12], 1
    %3175 = vsyncpa [#allocation15], 1
    %3176 = vsyncpa [#allocation18], 1

</llo_original>
